<compile_context>
chip_gen: v7x
topology: tpu7x:2x2x1
jax: 0.10.0
libtpu: 0.0.40
codegen_flags: <defaults>
</compile_context>

<pallas_src>
import functools

import jax
import jax.numpy as jnp
from jax.experimental import pallas as pl
from jax.experimental.pallas import tpu as pltpu

_SQRT_2_OVER_PI = 0.7978845608028654


def _layernorm(t, g, b):
    mu = jnp.mean(t, axis=-1, keepdims=True)
    var = jnp.mean(jnp.square(t - mu), axis=-1, keepdims=True)
    return (t - mu) * jax.lax.rsqrt(var + 1e-5) * g + b


def _gelu_tanh(t):
    # TODO(synk): torch nn.GELU() default is the exact erf GELU; the tanh
    # approximation is used here (erf has no clean Mosaic lowering); |err| < ~1e-3.
    return 0.5 * t * (1.0 + jnp.tanh(_SQRT_2_OVER_PI * (t + 0.044715 * t * t * t)))


def transformer_layer_kernel(x_ref, wq_ref, wk_ref, wv_ref, wo_ref, bo_ref,
                             g1_ref, be1_ref, w1_ref, b1_ref, w2_ref, b2_ref,
                             g2_ref, be2_ref, o_ref, x_sc):
    """One grid step == one (Attention + FeedForward) layer.

    x_ref:  (B, N, D)         resident input (loaded once)
    wq/wk/wv_ref: (1, H, D, d) per-head projection weights (scale folded in wq)
    wo_ref: (1, H, d, D)      per-head output projection
    bo/g1/be1/b2/g2/be2_ref: (1, 1, D);  w1_ref: (1, D, M);  b1_ref: (1, 1, M)
    x_sc:   (B, N, D) f32     activation carry across layers
    """
    B, N, D = x_ref.shape
    heads, d = wq_ref.shape[1], wq_ref.shape[3]
    HB = heads * B

    @pl.when(pl.program_id(0) == 0)
    def _():
        x_sc[...] = x_ref[...].astype(jnp.float32)

    x = x_sc[...]                                            # (B, N, D) f32

    # ---------------- Attention ----------------
    xn = _layernorm(x, g1_ref[0], be1_ref[0])                # (B, N, D)

    # heads on a leading batch dim: z = h * B + b  (only leading-dim
    # broadcasts / reshapes, no lane slicing, no concatenate).
    xz = jnp.broadcast_to(xn[None], (heads, B, N, D)).reshape(HB, N, D)

    def head_proj(w_ref):
        w = w_ref[0]                                          # (H, D, d)
        wz = jnp.broadcast_to(w[:, None], (heads, B, D, d)).reshape(HB, D, d)
        return jnp.einsum('znd,zde->zne', xz, wz,
                          preferred_element_type=jnp.float32)  # (HB, N, d)

    q = head_proj(wq_ref)      # scale already folded into W_q in the wrapper
    k = head_proj(wk_ref)
    v = head_proj(wv_ref)

    dots = jnp.einsum('zid,zjd->zij', q, k,
                      preferred_element_type=jnp.float32)     # (HB, N, N)
    dots = dots - jnp.max(dots, axis=-1, keepdims=True)
    e = jnp.exp(dots)
    attn = e * pl.reciprocal(jnp.sum(e, axis=-1, keepdims=True), approx=True)
    ctx = jnp.einsum('zij,zjd->zid', attn, v,
                     preferred_element_type=jnp.float32)      # (HB, N, d)

    wo = wo_ref[0]                                            # (H, d, D)
    woz = jnp.broadcast_to(wo[:, None], (heads, B, d, D)).reshape(HB, d, D)
    proj = jnp.einsum('znd,zdk->znk', ctx, woz,
                      preferred_element_type=jnp.float32)     # (HB, N, D)
    attn_out = jnp.sum(proj.reshape(heads, B, N, D), axis=0) + bo_ref[0]
    x = x + attn_out                                          # residual

    # ---------------- FeedForward ----------------
    xn2 = _layernorm(x, g2_ref[0], be2_ref[0])                # (B, N, D)
    w1b = jnp.broadcast_to(w1_ref[0][None], (B,) + w1_ref.shape[1:])
    h = jnp.einsum('bnd,bdm->bnm', xn2, w1b,
                   preferred_element_type=jnp.float32) + b1_ref[0]
    h = _gelu_tanh(h)
    w2b = jnp.broadcast_to(w2_ref[0][None], (B,) + w2_ref.shape[1:])
    h = jnp.einsum('bnm,bmd->bnd', h, w2b,
                   preferred_element_type=jnp.float32) + b2_ref[0]
    x = x + h                                                 # residual

    x_sc[...] = x
    o_ref[...] = x.astype(o_ref.dtype)


def transformer_pallas(x, w_qkv, w_out, b_out, g1, be1, w1, b1, w2, b2, g2, be2,
                       *, heads, dim_head):
    """x: (B, N, D).  Per-layer weights stacked along a leading `depth` axis,
    (in, out) layout (i.e. y = x @ W, equivalent to torch's x @ W.T)."""
    B, N, D = x.shape
    depth = w_qkv.shape[0]
    inner = heads * dim_head
    mlp = w1.shape[-1]
    scale = float(D) ** (-0.5)            # module uses dim ** -0.5

    # ---- wrapper-side (trace-time) weight re-layout: head-major slabs ----
    def split_heads(w):                   # (depth, D, inner) -> (depth, H, D, d)
        return w.reshape(depth, D, heads, dim_head).transpose(0, 2, 1, 3)

    wq = split_heads(w_qkv[:, :, 0 * inner:1 * inner] * scale)   # fold scale
    wk = split_heads(w_qkv[:, :, 1 * inner:2 * inner])
    wv = split_heads(w_qkv[:, :, 2 * inner:3 * inner])
    wo = w_out.reshape(depth, heads, dim_head, D)                # (depth, H, d, D)

    bo = b_out.reshape(depth, 1, D)
    g1r, be1r = g1.reshape(depth, 1, D), be1.reshape(depth, 1, D)
    g2r, be2r = g2.reshape(depth, 1, D), be2.reshape(depth, 1, D)
    b1r, b2r = b1.reshape(depth, 1, mlp), b2.reshape(depth, 1, D)

    grid_spec = pltpu.PrefetchScalarGridSpec(
        num_scalar_prefetch=0,
        grid=(depth,),
        in_specs=[
            pl.BlockSpec((B, N, D), lambda l: (0, 0, 0)),                       # x (resident)
            pl.BlockSpec((1, heads, D, dim_head), lambda l: (l, 0, 0, 0)),      # wq
            pl.BlockSpec((1, heads, D, dim_head), lambda l: (l, 0, 0, 0)),      # wk
            pl.BlockSpec((1, heads, D, dim_head), lambda l: (l, 0, 0, 0)),      # wv
            pl.BlockSpec((1, heads, dim_head, D), lambda l: (l, 0, 0, 0)),      # wo
            pl.BlockSpec((1, 1, D), lambda l: (l, 0, 0)),                       # b_out
            pl.BlockSpec((1, 1, D), lambda l: (l, 0, 0)),                       # gamma1
            pl.BlockSpec((1, 1, D), lambda l: (l, 0, 0)),                       # beta1
            pl.BlockSpec((1, D, mlp), lambda l: (l, 0, 0)),                     # w1
            pl.BlockSpec((1, 1, mlp), lambda l: (l, 0, 0)),                     # b1
            pl.BlockSpec((1, mlp, D), lambda l: (l, 0, 0)),                     # w2
            pl.BlockSpec((1, 1, D), lambda l: (l, 0, 0)),                       # b2
            pl.BlockSpec((1, 1, D), lambda l: (l, 0, 0)),                       # gamma2
            pl.BlockSpec((1, 1, D), lambda l: (l, 0, 0)),                       # beta2
        ],
        out_specs=pl.BlockSpec((B, N, D), lambda l: (0, 0, 0)),
        scratch_shapes=[pltpu.VMEM((B, N, D), jnp.float32)],
    )

    return pl.pallas_call(
        transformer_layer_kernel,
        out_shape=jax.ShapeDtypeStruct((B, N, D), x.dtype),
        grid_spec=grid_spec,
        compiler_params=pltpu.CompilerParams(
            dimension_semantics=("arbitrary",)),   # layers are sequential
    )(x, wq, wk, wv, wo, bo, g1r, be1r, w1, b1r, w2, b2r, g2r, be2r)


def transformer_ref(x, w_qkv, w_out, b_out, g1, be1, w1, b1, w2, b2, g2, be2,
                    *, heads, dim_head):
    """Pure-JAX reference mirroring the PyTorch Transformer forward (mask=None,
    dropout=0), using the same tanh-GELU as the kernel."""
    B, N, D = x.shape
    depth = w_qkv.shape[0]
    inner = heads * dim_head
    scale = float(D) ** (-0.5)

    def ln(t, g, b):
        mu = t.mean(-1, keepdims=True)
        var = ((t - mu) ** 2).mean(-1, keepdims=True)
        return (t - mu) / jnp.sqrt(var + 1e-5) * g + b

    for l in range(depth):
        xn = ln(x, g1[l], be1[l])
        qkv = xn @ w_qkv[l]
        q, k, v = jnp.split(qkv, 3, axis=-1)

        def to_heads(t):
            return t.reshape(B, N, heads, dim_head).transpose(0, 2, 1, 3)

        q, k, v = map(to_heads, (q, k, v))
        dots = jnp.einsum('bhid,bhjd->bhij', q, k) * scale
        attn = jax.nn.softmax(dots, axis=-1)
        o = jnp.einsum('bhij,bhjd->bhid', attn, v)
        o = o.transpose(0, 2, 1, 3).reshape(B, N, inner)
        x = x + (o @ w_out[l] + b_out[l])

        xn2 = ln(x, g2[l], be2[l])
        h = _gelu_tanh(xn2 @ w1[l] + b1[l])
        x = x + (h @ w2[l] + b2[l])
    return x


if __name__ == "__main__":
    # Small shapes consistent with the module: dim=32, depth=2, heads=4,
    # dim_head=8, mlp_dim=64, dropout=0; batch=2, seq=8.
    B, N, D = 2, 8, 32
    DEPTH, HEADS, DIM_HEAD, MLP = 2, 4, 8, 64
    INNER = HEADS * DIM_HEAD

    key = jax.random.PRNGKey(0)
    ks = jax.random.split(key, 12)
    x = jax.random.normal(ks[0], (B, N, D), jnp.float32)
    w_qkv = jax.random.normal(ks[1], (DEPTH, D, 3 * INNER), jnp.float32) * 0.05
    w_out = jax.random.normal(ks[2], (DEPTH, INNER, D), jnp.float32) * 0.05
    b_out = jax.random.normal(ks[3], (DEPTH, D), jnp.float32) * 0.01
    g1 = 1.0 + 0.1 * jax.random.normal(ks[4], (DEPTH, D), jnp.float32)
    be1 = 0.1 * jax.random.normal(ks[5], (DEPTH, D), jnp.float32)
    w1 = jax.random.normal(ks[6], (DEPTH, D, MLP), jnp.float32) * 0.05
    b1 = jax.random.normal(ks[7], (DEPTH, MLP), jnp.float32) * 0.01
    w2 = jax.random.normal(ks[8], (DEPTH, MLP, D), jnp.float32) * 0.05
    b2 = jax.random.normal(ks[9], (DEPTH, D), jnp.float32) * 0.01
    g2 = 1.0 + 0.1 * jax.random.normal(ks[10], (DEPTH, D), jnp.float32)
    be2 = 0.1 * jax.random.normal(ks[11], (DEPTH, D), jnp.float32)

    out = transformer_pallas(x, w_qkv, w_out, b_out, g1, be1, w1, b1, w2, b2,
                             g2, be2, heads=HEADS, dim_head=DIM_HEAD)
    out = jax.block_until_ready(out)

    ref = transformer_ref(x, w_qkv, w_out, b_out, g1, be1, w1, b1, w2, b2,
                          g2, be2, heads=HEADS, dim_head=DIM_HEAD)
    max_err = jnp.max(jnp.abs(out - ref))
    assert jnp.allclose(out, ref, atol=2e-3, rtol=2e-3), (
        f"mismatch vs reference: max abs err {max_err}")

    print("KERNEL_OK")
</pallas_src>

<mosaic_0001>
module attributes {stable_mosaic.version = 11 : i64} {
  func.func @transformer_layer_kernel(%arg0: i32, %arg1: memref<2x8x32xf32, #tpu.memory_space<vmem>>, %arg2: memref<1x4x32x8xf32, #tpu.memory_space<vmem>>, %arg3: memref<1x4x32x8xf32, #tpu.memory_space<vmem>>, %arg4: memref<1x4x32x8xf32, #tpu.memory_space<vmem>>, %arg5: memref<1x4x8x32xf32, #tpu.memory_space<vmem>>, %arg6: memref<1x1x32xf32, #tpu.memory_space<vmem>>, %arg7: memref<1x1x32xf32, #tpu.memory_space<vmem>>, %arg8: memref<1x1x32xf32, #tpu.memory_space<vmem>>, %arg9: memref<1x32x64xf32, #tpu.memory_space<vmem>>, %arg10: memref<1x1x64xf32, #tpu.memory_space<vmem>>, %arg11: memref<1x64x32xf32, #tpu.memory_space<vmem>>, %arg12: memref<1x1x32xf32, #tpu.memory_space<vmem>>, %arg13: memref<1x1x32xf32, #tpu.memory_space<vmem>>, %arg14: memref<1x1x32xf32, #tpu.memory_space<vmem>>, %arg15: memref<2x8x32xf32, #tpu.memory_space<vmem>>, %arg16: memref<2x8x32xf32, #tpu.memory_space<vmem>>) attributes {dimension_semantics = [#tpu.dimension_semantics<arbitrary>], iteration_bounds = array<i64: 2>, scalar_prefetch = 0 : i64, scratch_operands = 1 : i64, tpu.core_type = #tpu.core_type<tc>, window_params = [{pipeline_mode = #tpu.pipeline_mode<synchronous>, transform_indices = @transform_0, window_bounds = array<i64: 2, 8, 32>}, {transform_indices = @transform_1, window_bounds = array<i64: 1, 4, 32, 8>}, {transform_indices = @transform_2, window_bounds = array<i64: 1, 4, 32, 8>}, {transform_indices = @transform_3, window_bounds = array<i64: 1, 4, 32, 8>}, {transform_indices = @transform_4, window_bounds = array<i64: 1, 4, 8, 32>}, {transform_indices = @transform_5, window_bounds = array<i64: 1, 1, 32>}, {transform_indices = @transform_6, window_bounds = array<i64: 1, 1, 32>}, {transform_indices = @transform_7, window_bounds = array<i64: 1, 1, 32>}, {transform_indices = @transform_8, window_bounds = array<i64: 1, 32, 64>}, {transform_indices = @transform_9, window_bounds = array<i64: 1, 1, 64>}, {transform_indices = @transform_10, window_bounds = array<i64: 1, 64, 32>}, {transform_indices = @transform_11, window_bounds = array<i64: 1, 1, 32>}, {transform_indices = @transform_12, window_bounds = array<i64: 1, 1, 32>}, {transform_indices = @transform_13, window_bounds = array<i64: 1, 1, 32>}, {pipeline_mode = #tpu.pipeline_mode<synchronous>, transform_indices = @transform_14, window_bounds = array<i64: 2, 8, 32>}]} {
    %c0_i32 = arith.constant 0 : i32
    %0 = arith.cmpi eq, %arg0, %c0_i32 : i32
    %1 = arith.extui %0 : i1 to i32
    %c0_i32_0 = arith.constant 0 : i32
    %2 = arith.cmpi ne, %1, %c0_i32_0 : i32
    scf.if %2 {
      %c0_76 = arith.constant 0 : index
      %c0_77 = arith.constant 0 : index
      %c0_78 = arith.constant 0 : index
      %150 = vector.load %arg1[%c0_76, %c0_77, %c0_78] : memref<2x8x32xf32, #tpu.memory_space<vmem>>, vector<2x8x32xf32>
      %c0_79 = arith.constant 0 : index
      %c0_80 = arith.constant 0 : index
      %c0_81 = arith.constant 0 : index
      %151 = vector.load %arg16[%c0_79, %c0_80, %c0_81] : memref<2x8x32xf32, #tpu.memory_space<vmem>>, vector<2x8x32xf32>
      tpu.vector_store %arg16[%c0_79, %c0_80, %c0_81], %150 {strides = array<i32>} : memref<2x8x32xf32, #tpu.memory_space<vmem>>, vector<2x8x32xf32>,
    } else {
    }
    %c0 = arith.constant 0 : index
    %c0_1 = arith.constant 0 : index
    %c0_2 = arith.constant 0 : index
    %3 = vector.load %arg16[%c0, %c0_1, %c0_2] : memref<2x8x32xf32, #tpu.memory_space<vmem>>, vector<2x8x32xf32>
    %c0_3 = arith.constant 0 : index
    %c0_4 = arith.constant 0 : index
    %c0_5 = arith.constant 0 : index
    %4 = vector.load %arg7[%c0_3, %c0_4, %c0_5] : memref<1x1x32xf32, #tpu.memory_space<vmem>>, vector<1x1x32xf32>
    %5 = vector.shape_cast %4 : vector<1x1x32xf32> to vector<1x32xf32>
    %c0_6 = arith.constant 0 : index
    %c0_7 = arith.constant 0 : index
    %c0_8 = arith.constant 0 : index
    %6 = vector.load %arg8[%c0_6, %c0_7, %c0_8] : memref<1x1x32xf32, #tpu.memory_space<vmem>>, vector<1x1x32xf32>
    %7 = vector.shape_cast %6 : vector<1x1x32xf32> to vector<1x32xf32>
    %cst = arith.constant dense<0.000000e+00> : vector<2x8xf32>
    %8 = vector.multi_reduction <add>, %3, %cst [2] : vector<2x8x32xf32> to vector<2x8xf32>
    %9 = vector.shape_cast %8 : vector<2x8xf32> to vector<2x8x1xf32>
    %cst_9 = arith.constant 3.200000e+01 : f32
    %10 = vector.broadcast %cst_9 : f32 to vector<2x8x1xf32>
    %11 = arith.divf %9, %10 : vector<2x8x1xf32>
    %12 = vector.broadcast %11 : vector<2x8x1xf32> to vector<2x8x32xf32>
    %13 = arith.subf %3, %12 : vector<2x8x32xf32>
    %14 = arith.mulf %13, %13 : vector<2x8x32xf32>
    %cst_10 = arith.constant dense<0.000000e+00> : vector<2x8xf32>
    %15 = vector.multi_reduction <add>, %14, %cst_10 [2] : vector<2x8x32xf32> to vector<2x8xf32>
    %16 = vector.shape_cast %15 : vector<2x8xf32> to vector<2x8x1xf32>
    %cst_11 = arith.constant 3.200000e+01 : f32
    %17 = vector.broadcast %cst_11 : f32 to vector<2x8x1xf32>
    %18 = arith.divf %16, %17 : vector<2x8x1xf32>
    %19 = vector.broadcast %11 : vector<2x8x1xf32> to vector<2x8x32xf32>
    %20 = arith.subf %3, %19 : vector<2x8x32xf32>
    %cst_12 = arith.constant 9.99999974E-6 : f32
    %21 = vector.broadcast %cst_12 : f32 to vector<2x8x1xf32>
    %22 = arith.addf %18, %21 : vector<2x8x1xf32>
    %23 = math.rsqrt %22 : vector<2x8x1xf32>
    %24 = vector.broadcast %23 : vector<2x8x1xf32> to vector<2x8x32xf32>
    %25 = arith.mulf %20, %24 : vector<2x8x32xf32>
    %26 = vector.shape_cast %5 : vector<1x32xf32> to vector<1x1x32xf32>
    %27 = vector.broadcast %26 : vector<1x1x32xf32> to vector<2x8x32xf32>
    %28 = arith.mulf %25, %27 : vector<2x8x32xf32>
    %29 = vector.shape_cast %7 : vector<1x32xf32> to vector<1x1x32xf32>
    %30 = vector.broadcast %29 : vector<1x1x32xf32> to vector<2x8x32xf32>
    %31 = arith.addf %28, %30 : vector<2x8x32xf32>
    %32 = vector.shape_cast %31 : vector<2x8x32xf32> to vector<1x2x8x32xf32>
    %33 = vector.shape_cast %32 : vector<1x2x8x32xf32> to vector<1x2x8x32xf32>
    %34 = vector.broadcast %33 : vector<1x2x8x32xf32> to vector<4x2x8x32xf32>
    %35 = vector.shape_cast %34 : vector<4x2x8x32xf32> to vector<8x8x32xf32>
    %c0_13 = arith.constant 0 : index
    %c0_14 = arith.constant 0 : index
    %c0_15 = arith.constant 0 : index
    %c0_16 = arith.constant 0 : index
    %36 = vector.load %arg2[%c0_13, %c0_14, %c0_15, %c0_16] : memref<1x4x32x8xf32, #tpu.memory_space<vmem>>, vector<1x4x32x8xf32>
    %37 = vector.shape_cast %36 : vector<1x4x32x8xf32> to vector<4x32x8xf32>
    %38 = vector.shape_cast %37 : vector<4x32x8xf32> to vector<4x1x32x8xf32>
    %39 = vector.shape_cast %38 : vector<4x1x32x8xf32> to vector<4x1x32x8xf32>
    %40 = vector.broadcast %39 : vector<4x1x32x8xf32> to vector<4x2x32x8xf32>
    %41 = vector.shape_cast %40 : vector<4x2x32x8xf32> to vector<8x32x8xf32>
    "tpu.trace_start"() <{level = 10 : i32, message = "znd,zde->zne"}> : () -> ()
    %cst_17 = arith.constant dense<0.000000e+00> : vector<8x8x8xf32>
    %42 = tpu.matmul %35, %41, %cst_17 {dimension_numbers = #tpu.dot_dimension_numbers<[2], [1], [1], [2], [0, 0, 0, 1, 1, 2], [0], [0]>} : vector<8x8x32xf32>, vector<8x32x8xf32>, vector<8x8x8xf32> -> vector<8x8x8xf32>
    "tpu.trace_stop"() : () -> ()
    %c0_18 = arith.constant 0 : index
    %c0_19 = arith.constant 0 : index
    %c0_20 = arith.constant 0 : index
    %c0_21 = arith.constant 0 : index
    %43 = vector.load %arg3[%c0_18, %c0_19, %c0_20, %c0_21] : memref<1x4x32x8xf32, #tpu.memory_space<vmem>>, vector<1x4x32x8xf32>
    %44 = vector.shape_cast %43 : vector<1x4x32x8xf32> to vector<4x32x8xf32>
    %45 = vector.shape_cast %44 : vector<4x32x8xf32> to vector<4x1x32x8xf32>
    %46 = vector.shape_cast %45 : vector<4x1x32x8xf32> to vector<4x1x32x8xf32>
    %47 = vector.broadcast %46 : vector<4x1x32x8xf32> to vector<4x2x32x8xf32>
    %48 = vector.shape_cast %47 : vector<4x2x32x8xf32> to vector<8x32x8xf32>
    "tpu.trace_start"() <{level = 10 : i32, message = "znd,zde->zne"}> : () -> ()
    %cst_22 = arith.constant dense<0.000000e+00> : vector<8x8x8xf32>
    %49 = tpu.matmul %35, %48, %cst_22 {dimension_numbers = #tpu.dot_dimension_numbers<[2], [1], [1], [2], [0, 0, 0, 1, 1, 2], [0], [0]>} : vector<8x8x32xf32>, vector<8x32x8xf32>, vector<8x8x8xf32> -> vector<8x8x8xf32>
    "tpu.trace_stop"() : () -> ()
    %c0_23 = arith.constant 0 : index
    %c0_24 = arith.constant 0 : index
    %c0_25 = arith.constant 0 : index
    %c0_26 = arith.constant 0 : index
    %50 = vector.load %arg4[%c0_23, %c0_24, %c0_25, %c0_26] : memref<1x4x32x8xf32, #tpu.memory_space<vmem>>, vector<1x4x32x8xf32>
    %51 = vector.shape_cast %50 : vector<1x4x32x8xf32> to vector<4x32x8xf32>
    %52 = vector.shape_cast %51 : vector<4x32x8xf32> to vector<4x1x32x8xf32>
    %53 = vector.shape_cast %52 : vector<4x1x32x8xf32> to vector<4x1x32x8xf32>
    %54 = vector.broadcast %53 : vector<4x1x32x8xf32> to vector<4x2x32x8xf32>
    %55 = vector.shape_cast %54 : vector<4x2x32x8xf32> to vector<8x32x8xf32>
    "tpu.trace_start"() <{level = 10 : i32, message = "znd,zde->zne"}> : () -> ()
    %cst_27 = arith.constant dense<0.000000e+00> : vector<8x8x8xf32>
    %56 = tpu.matmul %35, %55, %cst_27 {dimension_numbers = #tpu.dot_dimension_numbers<[2], [1], [1], [2], [0, 0, 0, 1, 1, 2], [0], [0]>} : vector<8x8x32xf32>, vector<8x32x8xf32>, vector<8x8x8xf32> -> vector<8x8x8xf32>
    "tpu.trace_stop"() : () -> ()
    "tpu.trace_start"() <{level = 10 : i32, message = "zid,zjd->zij"}> : () -> ()
    %cst_28 = arith.constant dense<0.000000e+00> : vector<8x8x8xf32>
    %57 = tpu.matmul %42, %49, %cst_28 {dimension_numbers = #tpu.dot_dimension_numbers<[2], [2], [1], [1], [0, 0, 0, 1, 1, 1], [0], [0]>} : vector<8x8x8xf32>, vector<8x8x8xf32>, vector<8x8x8xf32> -> vector<8x8x8xf32>
    "tpu.trace_stop"() : () -> ()
    %cst_29 = arith.constant dense<0xFF800000> : vector<8x8xf32>
    %58 = vector.multi_reduction <maximumf>, %57, %cst_29 [2] : vector<8x8x8xf32> to vector<8x8xf32>
    %59 = vector.shape_cast %58 : vector<8x8xf32> to vector<8x8x1xf32>
    %60 = vector.broadcast %59 : vector<8x8x1xf32> to vector<8x8x8xf32>
    %61 = arith.subf %57, %60 : vector<8x8x8xf32>
    %62 = math.exp %61 : vector<8x8x8xf32>
    %cst_30 = arith.constant dense<0.000000e+00> : vector<8x8xf32>
    %63 = vector.multi_reduction <add>, %62, %cst_30 [2] : vector<8x8x8xf32> to vector<8x8xf32>
    %64 = vector.shape_cast %63 : vector<8x8xf32> to vector<8x8x1xf32>
    %65 = tpu.reciprocal %64 {approx = true} : vector<8x8x1xf32> -> vector<8x8x1xf32>
    %66 = vector.broadcast %65 : vector<8x8x1xf32> to vector<8x8x8xf32>
    %67 = arith.mulf %62, %66 : vector<8x8x8xf32>
    "tpu.trace_start"() <{level = 10 : i32, message = "zij,zjd->zid"}> : () -> ()
    %cst_31 = arith.constant dense<0.000000e+00> : vector<8x8x8xf32>
    %68 = tpu.matmul %67, %56, %cst_31 {dimension_numbers = #tpu.dot_dimension_numbers<[2], [1], [1], [2], [0, 0, 0, 1, 1, 2], [0], [0]>} : vector<8x8x8xf32>, vector<8x8x8xf32>, vector<8x8x8xf32> -> vector<8x8x8xf32>
    "tpu.trace_stop"() : () -> ()
    %c0_32 = arith.constant 0 : index
    %c0_33 = arith.constant 0 : index
    %c0_34 = arith.constant 0 : index
    %c0_35 = arith.constant 0 : index
    %69 = vector.load %arg5[%c0_32, %c0_33, %c0_34, %c0_35] : memref<1x4x8x32xf32, #tpu.memory_space<vmem>>, vector<1x4x8x32xf32>
    %70 = vector.shape_cast %69 : vector<1x4x8x32xf32> to vector<4x8x32xf32>
    %71 = vector.shape_cast %70 : vector<4x8x32xf32> to vector<4x1x8x32xf32>
    %72 = vector.shape_cast %71 : vector<4x1x8x32xf32> to vector<4x1x8x32xf32>
    %73 = vector.broadcast %72 : vector<4x1x8x32xf32> to vector<4x2x8x32xf32>
    %74 = vector.shape_cast %73 : vector<4x2x8x32xf32> to vector<8x8x32xf32>
    "tpu.trace_start"() <{level = 10 : i32, message = "znd,zdk->znk"}> : () -> ()
    %cst_36 = arith.constant dense<0.000000e+00> : vector<8x8x32xf32>
    %75 = tpu.matmul %68, %74, %cst_36 {dimension_numbers = #tpu.dot_dimension_numbers<[2], [1], [1], [2], [0, 0, 0, 1, 1, 2], [0], [0]>} : vector<8x8x8xf32>, vector<8x8x32xf32>, vector<8x8x32xf32> -> vector<8x8x32xf32>
    "tpu.trace_stop"() : () -> ()
    %76 = vector.shape_cast %75 : vector<8x8x32xf32> to vector<4x2x8x32xf32>
    %cst_37 = arith.constant dense<0.000000e+00> : vector<2x8x32xf32>
    %77 = vector.multi_reduction <add>, %76, %cst_37 [0] : vector<4x2x8x32xf32> to vector<2x8x32xf32>
    %c0_38 = arith.constant 0 : index
    %c0_39 = arith.constant 0 : index
    %c0_40 = arith.constant 0 : index
    %78 = vector.load %arg6[%c0_38, %c0_39, %c0_40] : memref<1x1x32xf32, #tpu.memory_space<vmem>>, vector<1x1x32xf32>
    %79 = vector.shape_cast %78 : vector<1x1x32xf32> to vector<1x32xf32>
    %80 = vector.shape_cast %79 : vector<1x32xf32> to vector<1x1x32xf32>
    %81 = vector.broadcast %80 : vector<1x1x32xf32> to vector<2x8x32xf32>
    %82 = arith.addf %77, %81 : vector<2x8x32xf32>
    %83 = arith.addf %3, %82 : vector<2x8x32xf32>
    %c0_41 = arith.constant 0 : index
    %c0_42 = arith.constant 0 : index
    %c0_43 = arith.constant 0 : index
    %84 = vector.load %arg13[%c0_41, %c0_42, %c0_43] : memref<1x1x32xf32, #tpu.memory_space<vmem>>, vector<1x1x32xf32>
    %85 = vector.shape_cast %84 : vector<1x1x32xf32> to vector<1x32xf32>
    %c0_44 = arith.constant 0 : index
    %c0_45 = arith.constant 0 : index
    %c0_46 = arith.constant 0 : index
    %86 = vector.load %arg14[%c0_44, %c0_45, %c0_46] : memref<1x1x32xf32, #tpu.memory_space<vmem>>, vector<1x1x32xf32>
    %87 = vector.shape_cast %86 : vector<1x1x32xf32> to vector<1x32xf32>
    %cst_47 = arith.constant dense<0.000000e+00> : vector<2x8xf32>
    %88 = vector.multi_reduction <add>, %83, %cst_47 [2] : vector<2x8x32xf32> to vector<2x8xf32>
    %89 = vector.shape_cast %88 : vector<2x8xf32> to vector<2x8x1xf32>
    %cst_48 = arith.constant 3.200000e+01 : f32
    %90 = vector.broadcast %cst_48 : f32 to vector<2x8x1xf32>
    %91 = arith.divf %89, %90 : vector<2x8x1xf32>
    %92 = vector.broadcast %91 : vector<2x8x1xf32> to vector<2x8x32xf32>
    %93 = arith.subf %83, %92 : vector<2x8x32xf32>
    %94 = arith.mulf %93, %93 : vector<2x8x32xf32>
    %cst_49 = arith.constant dense<0.000000e+00> : vector<2x8xf32>
    %95 = vector.multi_reduction <add>, %94, %cst_49 [2] : vector<2x8x32xf32> to vector<2x8xf32>
    %96 = vector.shape_cast %95 : vector<2x8xf32> to vector<2x8x1xf32>
    %cst_50 = arith.constant 3.200000e+01 : f32
    %97 = vector.broadcast %cst_50 : f32 to vector<2x8x1xf32>
    %98 = arith.divf %96, %97 : vector<2x8x1xf32>
    %99 = vector.broadcast %91 : vector<2x8x1xf32> to vector<2x8x32xf32>
    %100 = arith.subf %83, %99 : vector<2x8x32xf32>
    %cst_51 = arith.constant 9.99999974E-6 : f32
    %101 = vector.broadcast %cst_51 : f32 to vector<2x8x1xf32>
    %102 = arith.addf %98, %101 : vector<2x8x1xf32>
    %103 = math.rsqrt %102 : vector<2x8x1xf32>
    %104 = vector.broadcast %103 : vector<2x8x1xf32> to vector<2x8x32xf32>
    %105 = arith.mulf %100, %104 : vector<2x8x32xf32>
    %106 = vector.shape_cast %85 : vector<1x32xf32> to vector<1x1x32xf32>
    %107 = vector.broadcast %106 : vector<1x1x32xf32> to vector<2x8x32xf32>
    %108 = arith.mulf %105, %107 : vector<2x8x32xf32>
    %109 = vector.shape_cast %87 : vector<1x32xf32> to vector<1x1x32xf32>
    %110 = vector.broadcast %109 : vector<1x1x32xf32> to vector<2x8x32xf32>
    %111 = arith.addf %108, %110 : vector<2x8x32xf32>
    %c0_52 = arith.constant 0 : index
    %c0_53 = arith.constant 0 : index
    %c0_54 = arith.constant 0 : index
    %112 = vector.load %arg9[%c0_52, %c0_53, %c0_54] : memref<1x32x64xf32, #tpu.memory_space<vmem>>, vector<1x32x64xf32>
    %113 = vector.shape_cast %112 : vector<1x32x64xf32> to vector<32x64xf32>
    %114 = vector.shape_cast %113 : vector<32x64xf32> to vector<1x32x64xf32>
    %115 = vector.shape_cast %114 : vector<1x32x64xf32> to vector<1x32x64xf32>
    %116 = vector.broadcast %115 : vector<1x32x64xf32> to vector<2x32x64xf32>
    "tpu.trace_start"() <{level = 10 : i32, message = "bnd,bdm->bnm"}> : () -> ()
    %cst_55 = arith.constant dense<0.000000e+00> : vector<2x8x64xf32>
    %117 = tpu.matmul %111, %116, %cst_55 {dimension_numbers = #tpu.dot_dimension_numbers<[2], [1], [1], [2], [0, 0, 0, 1, 1, 2], [0], [0]>} : vector<2x8x32xf32>, vector<2x32x64xf32>, vector<2x8x64xf32> -> vector<2x8x64xf32>
    "tpu.trace_stop"() : () -> ()
    %c0_56 = arith.constant 0 : index
    %c0_57 = arith.constant 0 : index
    %c0_58 = arith.constant 0 : index
    %118 = vector.load %arg10[%c0_56, %c0_57, %c0_58] : memref<1x1x64xf32, #tpu.memory_space<vmem>>, vector<1x1x64xf32>
    %119 = vector.shape_cast %118 : vector<1x1x64xf32> to vector<1x64xf32>
    %120 = vector.shape_cast %119 : vector<1x64xf32> to vector<1x1x64xf32>
    %121 = vector.broadcast %120 : vector<1x1x64xf32> to vector<2x8x64xf32>
    %122 = arith.addf %117, %121 : vector<2x8x64xf32>
    %cst_59 = arith.constant 5.000000e-01 : f32
    %123 = vector.broadcast %cst_59 : f32 to vector<2x8x64xf32>
    %124 = arith.mulf %123, %122 : vector<2x8x64xf32>
    %cst_60 = arith.constant 4.471500e-02 : f32
    %125 = vector.broadcast %cst_60 : f32 to vector<2x8x64xf32>
    %126 = arith.mulf %125, %122 : vector<2x8x64xf32>
    %127 = arith.mulf %126, %122 : vector<2x8x64xf32>
    %128 = arith.mulf %127, %122 : vector<2x8x64xf32>
    %129 = arith.addf %122, %128 : vector<2x8x64xf32>
    %cst_61 = arith.constant 0.797884583 : f32
    %130 = vector.broadcast %cst_61 : f32 to vector<2x8x64xf32>
    %131 = arith.mulf %130, %129 : vector<2x8x64xf32>
    %132 = math.tanh %131 : vector<2x8x64xf32>
    %cst_62 = arith.constant 1.000000e+00 : f32
    %133 = vector.broadcast %cst_62 : f32 to vector<2x8x64xf32>
    %134 = arith.addf %133, %132 : vector<2x8x64xf32>
    %135 = arith.mulf %124, %134 : vector<2x8x64xf32>
    %c0_63 = arith.constant 0 : index
    %c0_64 = arith.constant 0 : index
    %c0_65 = arith.constant 0 : index
    %136 = vector.load %arg11[%c0_63, %c0_64, %c0_65] : memref<1x64x32xf32, #tpu.memory_space<vmem>>, vector<1x64x32xf32>
    %137 = vector.shape_cast %136 : vector<1x64x32xf32> to vector<64x32xf32>
    %138 = vector.shape_cast %137 : vector<64x32xf32> to vector<1x64x32xf32>
    %139 = vector.shape_cast %138 : vector<1x64x32xf32> to vector<1x64x32xf32>
    %140 = vector.broadcast %139 : vector<1x64x32xf32> to vector<2x64x32xf32>
    "tpu.trace_start"() <{level = 10 : i32, message = "bnm,bmd->bnd"}> : () -> ()
    %cst_66 = arith.constant dense<0.000000e+00> : vector<2x8x32xf32>
    %141 = tpu.matmul %135, %140, %cst_66 {dimension_numbers = #tpu.dot_dimension_numbers<[2], [1], [1], [2], [0, 0, 0, 1, 1, 2], [0], [0]>} : vector<2x8x64xf32>, vector<2x64x32xf32>, vector<2x8x32xf32> -> vector<2x8x32xf32>
    "tpu.trace_stop"() : () -> ()
    %c0_67 = arith.constant 0 : index
    %c0_68 = arith.constant 0 : index
    %c0_69 = arith.constant 0 : index
    %142 = vector.load %arg12[%c0_67, %c0_68, %c0_69] : memref<1x1x32xf32, #tpu.memory_space<vmem>>, vector<1x1x32xf32>
    %143 = vector.shape_cast %142 : vector<1x1x32xf32> to vector<1x32xf32>
    %144 = vector.shape_cast %143 : vector<1x32xf32> to vector<1x1x32xf32>
    %145 = vector.broadcast %144 : vector<1x1x32xf32> to vector<2x8x32xf32>
    %146 = arith.addf %141, %145 : vector<2x8x32xf32>
    %147 = arith.addf %83, %146 : vector<2x8x32xf32>
    %c0_70 = arith.constant 0 : index
    %c0_71 = arith.constant 0 : index
    %c0_72 = arith.constant 0 : index
    %148 = vector.load %arg16[%c0_70, %c0_71, %c0_72] : memref<2x8x32xf32, #tpu.memory_space<vmem>>, vector<2x8x32xf32>
    tpu.vector_store %arg16[%c0_70, %c0_71, %c0_72], %147 {strides = array<i32>} : memref<2x8x32xf32, #tpu.memory_space<vmem>>, vector<2x8x32xf32>,
    %c0_73 = arith.constant 0 : index
    %c0_74 = arith.constant 0 : index
    %c0_75 = arith.constant 0 : index
    %149 = vector.load %arg15[%c0_73, %c0_74, %c0_75] : memref<2x8x32xf32, #tpu.memory_space<vmem>>, vector<2x8x32xf32>
    tpu.vector_store %arg15[%c0_73, %c0_74, %c0_75], %147 {strides = array<i32>} : memref<2x8x32xf32, #tpu.memory_space<vmem>>, vector<2x8x32xf32>,
    return
  }
  func.func @transform_0(%arg0: i32) -> (i32, i32, i32) {
    %c0_i32 = arith.constant 0 : i32
    %c0_i32_0 = arith.constant 0 : i32
    %c0_i32_1 = arith.constant 0 : i32
    %c0_i32_2 = arith.constant 0 : i32
    return %c0_i32, %c0_i32_0, %c0_i32_1 : i32, i32, i32
  }
  func.func @transform_1(%arg0: i32) -> (i32, i32, i32, i32) {
    %c0_i32 = arith.constant 0 : i32
    %c0_i32_0 = arith.constant 0 : i32
    %c0_i32_1 = arith.constant 0 : i32
    %c0_i32_2 = arith.constant 0 : i32
    return %arg0, %c0_i32, %c0_i32_0, %c0_i32_1 : i32, i32, i32, i32
  }
  func.func @transform_2(%arg0: i32) -> (i32, i32, i32, i32) {
    %c0_i32 = arith.constant 0 : i32
    %c0_i32_0 = arith.constant 0 : i32
    %c0_i32_1 = arith.constant 0 : i32
    %c0_i32_2 = arith.constant 0 : i32
    return %arg0, %c0_i32, %c0_i32_0, %c0_i32_1 : i32, i32, i32, i32
  }
  func.func @transform_3(%arg0: i32) -> (i32, i32, i32, i32) {
    %c0_i32 = arith.constant 0 : i32
    %c0_i32_0 = arith.constant 0 : i32
    %c0_i32_1 = arith.constant 0 : i32
    %c0_i32_2 = arith.constant 0 : i32
    return %arg0, %c0_i32, %c0_i32_0, %c0_i32_1 : i32, i32, i32, i32
  }
  func.func @transform_4(%arg0: i32) -> (i32, i32, i32, i32) {
    %c0_i32 = arith.constant 0 : i32
    %c0_i32_0 = arith.constant 0 : i32
    %c0_i32_1 = arith.constant 0 : i32
    %c0_i32_2 = arith.constant 0 : i32
    return %arg0, %c0_i32, %c0_i32_0, %c0_i32_1 : i32, i32, i32, i32
  }
  func.func @transform_5(%arg0: i32) -> (i32, i32, i32) {
    %c0_i32 = arith.constant 0 : i32
    %c0_i32_0 = arith.constant 0 : i32
    %c0_i32_1 = arith.constant 0 : i32
    return %arg0, %c0_i32, %c0_i32_0 : i32, i32, i32
  }
  func.func @transform_6(%arg0: i32) -> (i32, i32, i32) {
    %c0_i32 = arith.constant 0 : i32
    %c0_i32_0 = arith.constant 0 : i32
    %c0_i32_1 = arith.constant 0 : i32
    return %arg0, %c0_i32, %c0_i32_0 : i32, i32, i32
  }
  func.func @transform_7(%arg0: i32) -> (i32, i32, i32) {
    %c0_i32 = arith.constant 0 : i32
    %c0_i32_0 = arith.constant 0 : i32
    %c0_i32_1 = arith.constant 0 : i32
    return %arg0, %c0_i32, %c0_i32_0 : i32, i32, i32
  }
  func.func @transform_8(%arg0: i32) -> (i32, i32, i32) {
    %c0_i32 = arith.constant 0 : i32
    %c0_i32_0 = arith.constant 0 : i32
    %c0_i32_1 = arith.constant 0 : i32
    return %arg0, %c0_i32, %c0_i32_0 : i32, i32, i32
  }
  func.func @transform_9(%arg0: i32) -> (i32, i32, i32) {
    %c0_i32 = arith.constant 0 : i32
    %c0_i32_0 = arith.constant 0 : i32
    %c0_i32_1 = arith.constant 0 : i32
    return %arg0, %c0_i32, %c0_i32_0 : i32, i32, i32
  }
  func.func @transform_10(%arg0: i32) -> (i32, i32, i32) {
    %c0_i32 = arith.constant 0 : i32
    %c0_i32_0 = arith.constant 0 : i32
    %c0_i32_1 = arith.constant 0 : i32
    return %arg0, %c0_i32, %c0_i32_0 : i32, i32, i32
  }
  func.func @transform_11(%arg0: i32) -> (i32, i32, i32) {
    %c0_i32 = arith.constant 0 : i32
    %c0_i32_0 = arith.constant 0 : i32
    %c0_i32_1 = arith.constant 0 : i32
    return %arg0, %c0_i32, %c0_i32_0 : i32, i32, i32
  }
  func.func @transform_12(%arg0: i32) -> (i32, i32, i32) {
    %c0_i32 = arith.constant 0 : i32
    %c0_i32_0 = arith.constant 0 : i32
    %c0_i32_1 = arith.constant 0 : i32
    return %arg0, %c0_i32, %c0_i32_0 : i32, i32, i32
  }
  func.func @transform_13(%arg0: i32) -> (i32, i32, i32) {
    %c0_i32 = arith.constant 0 : i32
    %c0_i32_0 = arith.constant 0 : i32
    %c0_i32_1 = arith.constant 0 : i32
    return %arg0, %c0_i32, %c0_i32_0 : i32, i32, i32
  }
  func.func @transform_14(%arg0: i32) -> (i32, i32, i32) {
    %c0_i32 = arith.constant 0 : i32
    %c0_i32_0 = arith.constant 0 : i32
    %c0_i32_1 = arith.constant 0 : i32
    %c0_i32_2 = arith.constant 0 : i32
    return %c0_i32, %c0_i32_0, %c0_i32_1 : i32, i32, i32
  }
}

</mosaic_0001>

<llo_original>
// kernel: tpu_custom_call.1
$region0: #{tpu_custom_call.1}
  #allocation0 [shape = 'u32[]', space=smem, size = 0x4, offset = 0x4, fixed_abs, tag = 'smem constant byte address 0x4 - core index']
  #allocation1 [shape = 'u32[144,128]{1,0:T(1,128)}', space=vmem, size = 0x12000, scoped, tag = 'internal scratch']
  #allocation2 [shape = 'f32[2,8,32]{2,1,0:T(8,128)}', space=vmem, size = 0x2000, scoped, tag = 'scratch operand']
  %s0 = inlined_call_operand.vmem [shape: f32[2,8,32], index: 0, kind: input, shape index: {}]
  %s1 = inlined_call_operand.vmem [shape: f32[2,4,32,8], index: 1, kind: input, shape index: {}]
  %s2 = inlined_call_operand.vmem [shape: f32[2,4,32,8], index: 2, kind: input, shape index: {}]
  %s3 = inlined_call_operand.vmem [shape: f32[2,4,32,8], index: 3, kind: input, shape index: {}]
  %s4 = inlined_call_operand.vmem [shape: f32[2,4,8,32], index: 4, kind: input, shape index: {}]
  %s5 = inlined_call_operand.vmem [shape: f32[2,1,32], index: 5, kind: input, shape index: {}]
  %s6 = inlined_call_operand.vmem [shape: f32[2,1,32], index: 6, kind: input, shape index: {}]
  %s7 = inlined_call_operand.vmem [shape: f32[2,1,32], index: 7, kind: input, shape index: {}]
  %s8 = inlined_call_operand.vmem [shape: f32[2,32,64], index: 8, kind: input, shape index: {}]
  %s9 = inlined_call_operand.vmem [shape: f32[2,1,64], index: 9, kind: input, shape index: {}]
  %s10 = inlined_call_operand.vmem [shape: f32[2,64,32], index: 10, kind: input, shape index: {}]
  %s11 = inlined_call_operand.vmem [shape: f32[2,1,32], index: 11, kind: input, shape index: {}]
  %s12 = inlined_call_operand.vmem [shape: f32[2,1,32], index: 12, kind: input, shape index: {}]
  %s13 = inlined_call_operand.vmem [shape: f32[2,1,32], index: 13, kind: input, shape index: {}]
  %s14 = inlined_call_operand.hbm [shape: f32[2,8,32], index: 14, kind: output, shape index: {}]
  %s15 = sld [smem:[#allocation0]]
  $region93: #{tpu_custom_call.1} parent=0
    _
  %s17 = ssub.s32 1, %s15
  %s18 = scalar_select 0, %s17, %s15
  $region1: #{tpu_custom_call.1} parent=0
    #allocation3 [shape = 'u8[8192]{0}', space=vmem, size = 0x2000, scoped, tag = 'output window, operand 0, single buffered']
    #allocation4 [shape = 's32[2]{0}', space=sflag, size = 0x8, scoped, tag = 'scoped memory for tpu_custom_call.1']
    %19 = vsyncpa [#allocation4], 0
    loop: start=0, step=1, limit=4
    $region2: #{tpu_custom_call.1} parent=1 // loop_pre_header
      _
    $region3: #{tpu_custom_call.1} parent=1 // loop_header
      %s21 = sphi 0, %s25
      %p22 = scmp.ge.s32.totalorder %s21, 4
      %s29 = sphi 0, %s29
      %s31 = sphi 0, %s29
      %s32 = sphi 0, %s31
      %s46 = sphi 0, %s32
      %s52 = sphi 0, %s54
      %s55 = sphi 0, %s52
      %s56 = sphi 0, %s55
      %s72 = sphi 0, %s56
      %s78 = sphi 0, %s80
      %s81 = sphi 0, %s78
      %s82 = sphi 0, %s81
      %s98 = sphi 0, %s82
      %s104 = sphi 0, %s106
      %s107 = sphi 0, %s104
      %s108 = sphi 0, %s107
      %s124 = sphi 0, %s108
      %s130 = sphi 0, %s132
      %s133 = sphi 0, %s130
      %s134 = sphi 0, %s133
      %s150 = sphi 0, %s134
      %s156 = sphi 0, %s158
      %s159 = sphi 0, %s156
      %s160 = sphi 0, %s159
      %s176 = sphi 0, %s160
      %s182 = sphi 0, %s184
      %s185 = sphi 0, %s182
      %s186 = sphi 0, %s185
      %s202 = sphi 0, %s186
      %s208 = sphi 0, %s210
      %s211 = sphi 0, %s208
      %s212 = sphi 0, %s211
      %s228 = sphi 0, %s212
      %s234 = sphi 0, %s236
      %s237 = sphi 0, %s234
      %s238 = sphi 0, %s237
      %s254 = sphi 0, %s238
      %s260 = sphi 0, %s262
      %s263 = sphi 0, %s260
      %s264 = sphi 0, %s263
      %s280 = sphi 0, %s264
      %s286 = sphi 0, %s288
      %s289 = sphi 0, %s286
      %s290 = sphi 0, %s289
      %s306 = sphi 0, %s290
      %s312 = sphi 0, %s314
      %s315 = sphi 0, %s312
      %s316 = sphi 0, %s315
      %s332 = sphi 0, %s316
      %s338 = sphi 0, %s340
      %s341 = sphi 0, %s338
      %s342 = sphi 0, %s341
      %s358 = sphi 0, %s342
      %s364 = sphi 0, %s366
      %s367 = sphi 0, %s364
      %s368 = sphi 0, %s367
      %s384 = sphi 0, %s368
      %s388 = sphi 0, %s388
      %s390 = sphi 0, %s388
      %s391 = sphi 0, %s390
      %s405 = sphi 0, %s391
    $region4: #{tpu_custom_call.1} parent=1 // loop_header_branch
      %24 = sbr.rel (%p22) target = $region8
    $region5: #{tpu_custom_call.1} parent=1 // loop_body
      %s26 = ssub.s32 %s21, 1
      %s27 = ssub.s32 %s21, 2
      %s28 = sadd.s32 %s21, 1
      %s30 = sadd.s32 %s29, 1
      %p33 = scmp.eq.s32.totalorder %s21, 1
      %p34 = scmp.ne.s32.totalorder %s29, %s31
      %p35 = scmp.eq.s32.totalorder %s21, 0
      %p36 = por %p34, %p35
      %p37 = scmp.ne.s32.totalorder %s29, %s31
      %p38 = scmp.eq.s32.totalorder %s26, 1
      %p39 = por %p37, %p38
      %p40 = scmp.ne.s32.totalorder %s31, %s32
      %p41 = scmp.eq.s32.totalorder %s26, 0
      %p42 = por %p40, %p41
      %p43 = scmp.ne.s32.totalorder %s31, %s32
      %p44 = scmp.eq.s32.totalorder %s27, 1
      %p45 = por %p43, %p44
      %p47 = scmp.ne.s32.totalorder %s32, %s46
      %p48 = scmp.eq.s32.totalorder %s27, 0
      %p49 = por %p47, %p48
      %s50 = ssub.s32 %s21, %s28
      %p51 = scmp.eq.s32.totalorder %s50, 0
      %s53 = sadd.s32 %s52, 1
      %s54 = scalar_select %p51, %s52, %s53
      %p57 = pneg %p51
      %p58 = scmp.eq.s32.totalorder %s21, 1
      %p59 = por %p57, %p58
      %p60 = scmp.ne.s32.totalorder %s52, %s55
      %p61 = scmp.eq.s32.totalorder %s21, 0
      %p62 = por %p60, %p61
      %p63 = scmp.ne.s32.totalorder %s52, %s55
      %p64 = scmp.eq.s32.totalorder %s26, 1
      %p65 = por %p63, %p64
      %p66 = scmp.ne.s32.totalorder %s55, %s56
      %p67 = scmp.eq.s32.totalorder %s26, 0
      %p68 = por %p66, %p67
      %p69 = scmp.ne.s32.totalorder %s55, %s56
      %p70 = scmp.eq.s32.totalorder %s27, 1
      %p71 = por %p69, %p70
      %p73 = scmp.ne.s32.totalorder %s56, %s72
      %p74 = scmp.eq.s32.totalorder %s27, 0
      %p75 = por %p73, %p74
      %s76 = ssub.s32 %s21, %s28
      %p77 = scmp.eq.s32.totalorder %s76, 0
      %s79 = sadd.s32 %s78, 1
      %s80 = scalar_select %p77, %s78, %s79
      %p83 = pneg %p77
      %p84 = scmp.eq.s32.totalorder %s21, 1
      %p85 = por %p83, %p84
      %p86 = scmp.ne.s32.totalorder %s78, %s81
      %p87 = scmp.eq.s32.totalorder %s21, 0
      %p88 = por %p86, %p87
      %p89 = scmp.ne.s32.totalorder %s78, %s81
      %p90 = scmp.eq.s32.totalorder %s26, 1
      %p91 = por %p89, %p90
      %p92 = scmp.ne.s32.totalorder %s81, %s82
      %p93 = scmp.eq.s32.totalorder %s26, 0
      %p94 = por %p92, %p93
      %p95 = scmp.ne.s32.totalorder %s81, %s82
      %p96 = scmp.eq.s32.totalorder %s27, 1
      %p97 = por %p95, %p96
      %p99 = scmp.ne.s32.totalorder %s82, %s98
      %p100 = scmp.eq.s32.totalorder %s27, 0
      %p101 = por %p99, %p100
      %s102 = ssub.s32 %s21, %s28
      %p103 = scmp.eq.s32.totalorder %s102, 0
      %s105 = sadd.s32 %s104, 1
      %s106 = scalar_select %p103, %s104, %s105
      %p109 = pneg %p103
      %p110 = scmp.eq.s32.totalorder %s21, 1
      %p111 = por %p109, %p110
      %p112 = scmp.ne.s32.totalorder %s104, %s107
      %p113 = scmp.eq.s32.totalorder %s21, 0
      %p114 = por %p112, %p113
      %p115 = scmp.ne.s32.totalorder %s104, %s107
      %p116 = scmp.eq.s32.totalorder %s26, 1
      %p117 = por %p115, %p116
      %p118 = scmp.ne.s32.totalorder %s107, %s108
      %p119 = scmp.eq.s32.totalorder %s26, 0
      %p120 = por %p118, %p119
      %p121 = scmp.ne.s32.totalorder %s107, %s108
      %p122 = scmp.eq.s32.totalorder %s27, 1
      %p123 = por %p121, %p122
      %p125 = scmp.ne.s32.totalorder %s108, %s124
      %p126 = scmp.eq.s32.totalorder %s27, 0
      %p127 = por %p125, %p126
      %s128 = ssub.s32 %s21, %s28
      %p129 = scmp.eq.s32.totalorder %s128, 0
      %s131 = sadd.s32 %s130, 1
      %s132 = scalar_select %p129, %s130, %s131
      %p135 = pneg %p129
      %p136 = scmp.eq.s32.totalorder %s21, 1
      %p137 = por %p135, %p136
      %p138 = scmp.ne.s32.totalorder %s130, %s133
      %p139 = scmp.eq.s32.totalorder %s21, 0
      %p140 = por %p138, %p139
      %p141 = scmp.ne.s32.totalorder %s130, %s133
      %p142 = scmp.eq.s32.totalorder %s26, 1
      %p143 = por %p141, %p142
      %p144 = scmp.ne.s32.totalorder %s133, %s134
      %p145 = scmp.eq.s32.totalorder %s26, 0
      %p146 = por %p144, %p145
      %p147 = scmp.ne.s32.totalorder %s133, %s134
      %p148 = scmp.eq.s32.totalorder %s27, 1
      %p149 = por %p147, %p148
      %p151 = scmp.ne.s32.totalorder %s134, %s150
      %p152 = scmp.eq.s32.totalorder %s27, 0
      %p153 = por %p151, %p152
      %s154 = ssub.s32 %s21, %s28
      %p155 = scmp.eq.s32.totalorder %s154, 0
      %s157 = sadd.s32 %s156, 1
      %s158 = scalar_select %p155, %s156, %s157
      %p161 = pneg %p155
      %p162 = scmp.eq.s32.totalorder %s21, 1
      %p163 = por %p161, %p162
      %p164 = scmp.ne.s32.totalorder %s156, %s159
      %p165 = scmp.eq.s32.totalorder %s21, 0
      %p166 = por %p164, %p165
      %p167 = scmp.ne.s32.totalorder %s156, %s159
      %p168 = scmp.eq.s32.totalorder %s26, 1
      %p169 = por %p167, %p168
      %p170 = scmp.ne.s32.totalorder %s159, %s160
      %p171 = scmp.eq.s32.totalorder %s26, 0
      %p172 = por %p170, %p171
      %p173 = scmp.ne.s32.totalorder %s159, %s160
      %p174 = scmp.eq.s32.totalorder %s27, 1
      %p175 = por %p173, %p174
      %p177 = scmp.ne.s32.totalorder %s160, %s176
      %p178 = scmp.eq.s32.totalorder %s27, 0
      %p179 = por %p177, %p178
      %s180 = ssub.s32 %s21, %s28
      %p181 = scmp.eq.s32.totalorder %s180, 0
      %s183 = sadd.s32 %s182, 1
      %s184 = scalar_select %p181, %s182, %s183
      %p187 = pneg %p181
      %p188 = scmp.eq.s32.totalorder %s21, 1
      %p189 = por %p187, %p188
      %p190 = scmp.ne.s32.totalorder %s182, %s185
      %p191 = scmp.eq.s32.totalorder %s21, 0
      %p192 = por %p190, %p191
      %p193 = scmp.ne.s32.totalorder %s182, %s185
      %p194 = scmp.eq.s32.totalorder %s26, 1
      %p195 = por %p193, %p194
      %p196 = scmp.ne.s32.totalorder %s185, %s186
      %p197 = scmp.eq.s32.totalorder %s26, 0
      %p198 = por %p196, %p197
      %p199 = scmp.ne.s32.totalorder %s185, %s186
      %p200 = scmp.eq.s32.totalorder %s27, 1
      %p201 = por %p199, %p200
      %p203 = scmp.ne.s32.totalorder %s186, %s202
      %p204 = scmp.eq.s32.totalorder %s27, 0
      %p205 = por %p203, %p204
      %s206 = ssub.s32 %s21, %s28
      %p207 = scmp.eq.s32.totalorder %s206, 0
      %s209 = sadd.s32 %s208, 1
      %s210 = scalar_select %p207, %s208, %s209
      %p213 = pneg %p207
      %p214 = scmp.eq.s32.totalorder %s21, 1
      %p215 = por %p213, %p214
      %p216 = scmp.ne.s32.totalorder %s208, %s211
      %p217 = scmp.eq.s32.totalorder %s21, 0
      %p218 = por %p216, %p217
      %p219 = scmp.ne.s32.totalorder %s208, %s211
      %p220 = scmp.eq.s32.totalorder %s26, 1
      %p221 = por %p219, %p220
      %p222 = scmp.ne.s32.totalorder %s211, %s212
      %p223 = scmp.eq.s32.totalorder %s26, 0
      %p224 = por %p222, %p223
      %p225 = scmp.ne.s32.totalorder %s211, %s212
      %p226 = scmp.eq.s32.totalorder %s27, 1
      %p227 = por %p225, %p226
      %p229 = scmp.ne.s32.totalorder %s212, %s228
      %p230 = scmp.eq.s32.totalorder %s27, 0
      %p231 = por %p229, %p230
      %s232 = ssub.s32 %s21, %s28
      %p233 = scmp.eq.s32.totalorder %s232, 0
      %s235 = sadd.s32 %s234, 1
      %s236 = scalar_select %p233, %s234, %s235
      %p239 = pneg %p233
      %p240 = scmp.eq.s32.totalorder %s21, 1
      %p241 = por %p239, %p240
      %p242 = scmp.ne.s32.totalorder %s234, %s237
      %p243 = scmp.eq.s32.totalorder %s21, 0
      %p244 = por %p242, %p243
      %p245 = scmp.ne.s32.totalorder %s234, %s237
      %p246 = scmp.eq.s32.totalorder %s26, 1
      %p247 = por %p245, %p246
      %p248 = scmp.ne.s32.totalorder %s237, %s238
      %p249 = scmp.eq.s32.totalorder %s26, 0
      %p250 = por %p248, %p249
      %p251 = scmp.ne.s32.totalorder %s237, %s238
      %p252 = scmp.eq.s32.totalorder %s27, 1
      %p253 = por %p251, %p252
      %p255 = scmp.ne.s32.totalorder %s238, %s254
      %p256 = scmp.eq.s32.totalorder %s27, 0
      %p257 = por %p255, %p256
      %s258 = ssub.s32 %s21, %s28
      %p259 = scmp.eq.s32.totalorder %s258, 0
      %s261 = sadd.s32 %s260, 1
      %s262 = scalar_select %p259, %s260, %s261
      %p265 = pneg %p259
      %p266 = scmp.eq.s32.totalorder %s21, 1
      %p267 = por %p265, %p266
      %p268 = scmp.ne.s32.totalorder %s260, %s263
      %p269 = scmp.eq.s32.totalorder %s21, 0
      %p270 = por %p268, %p269
      %p271 = scmp.ne.s32.totalorder %s260, %s263
      %p272 = scmp.eq.s32.totalorder %s26, 1
      %p273 = por %p271, %p272
      %p274 = scmp.ne.s32.totalorder %s263, %s264
      %p275 = scmp.eq.s32.totalorder %s26, 0
      %p276 = por %p274, %p275
      %p277 = scmp.ne.s32.totalorder %s263, %s264
      %p278 = scmp.eq.s32.totalorder %s27, 1
      %p279 = por %p277, %p278
      %p281 = scmp.ne.s32.totalorder %s264, %s280
      %p282 = scmp.eq.s32.totalorder %s27, 0
      %p283 = por %p281, %p282
      %s284 = ssub.s32 %s21, %s28
      %p285 = scmp.eq.s32.totalorder %s284, 0
      %s287 = sadd.s32 %s286, 1
      %s288 = scalar_select %p285, %s286, %s287
      %p291 = pneg %p285
      %p292 = scmp.eq.s32.totalorder %s21, 1
      %p293 = por %p291, %p292
      %p294 = scmp.ne.s32.totalorder %s286, %s289
      %p295 = scmp.eq.s32.totalorder %s21, 0
      %p296 = por %p294, %p295
      %p297 = scmp.ne.s32.totalorder %s286, %s289
      %p298 = scmp.eq.s32.totalorder %s26, 1
      %p299 = por %p297, %p298
      %p300 = scmp.ne.s32.totalorder %s289, %s290
      %p301 = scmp.eq.s32.totalorder %s26, 0
      %p302 = por %p300, %p301
      %p303 = scmp.ne.s32.totalorder %s289, %s290
      %p304 = scmp.eq.s32.totalorder %s27, 1
      %p305 = por %p303, %p304
      %p307 = scmp.ne.s32.totalorder %s290, %s306
      %p308 = scmp.eq.s32.totalorder %s27, 0
      %p309 = por %p307, %p308
      %s310 = ssub.s32 %s21, %s28
      %p311 = scmp.eq.s32.totalorder %s310, 0
      %s313 = sadd.s32 %s312, 1
      %s314 = scalar_select %p311, %s312, %s313
      %p317 = pneg %p311
      %p318 = scmp.eq.s32.totalorder %s21, 1
      %p319 = por %p317, %p318
      %p320 = scmp.ne.s32.totalorder %s312, %s315
      %p321 = scmp.eq.s32.totalorder %s21, 0
      %p322 = por %p320, %p321
      %p323 = scmp.ne.s32.totalorder %s312, %s315
      %p324 = scmp.eq.s32.totalorder %s26, 1
      %p325 = por %p323, %p324
      %p326 = scmp.ne.s32.totalorder %s315, %s316
      %p327 = scmp.eq.s32.totalorder %s26, 0
      %p328 = por %p326, %p327
      %p329 = scmp.ne.s32.totalorder %s315, %s316
      %p330 = scmp.eq.s32.totalorder %s27, 1
      %p331 = por %p329, %p330
      %p333 = scmp.ne.s32.totalorder %s316, %s332
      %p334 = scmp.eq.s32.totalorder %s27, 0
      %p335 = por %p333, %p334
      %s336 = ssub.s32 %s21, %s28
      %p337 = scmp.eq.s32.totalorder %s336, 0
      %s339 = sadd.s32 %s338, 1
      %s340 = scalar_select %p337, %s338, %s339
      %p343 = pneg %p337
      %p344 = scmp.eq.s32.totalorder %s21, 1
      %p345 = por %p343, %p344
      %p346 = scmp.ne.s32.totalorder %s338, %s341
      %p347 = scmp.eq.s32.totalorder %s21, 0
      %p348 = por %p346, %p347
      %p349 = scmp.ne.s32.totalorder %s338, %s341
      %p350 = scmp.eq.s32.totalorder %s26, 1
      %p351 = por %p349, %p350
      %p352 = scmp.ne.s32.totalorder %s341, %s342
      %p353 = scmp.eq.s32.totalorder %s26, 0
      %p354 = por %p352, %p353
      %p355 = scmp.ne.s32.totalorder %s341, %s342
      %p356 = scmp.eq.s32.totalorder %s27, 1
      %p357 = por %p355, %p356
      %p359 = scmp.ne.s32.totalorder %s342, %s358
      %p360 = scmp.eq.s32.totalorder %s27, 0
      %p361 = por %p359, %p360
      %s362 = ssub.s32 %s21, %s28
      %p363 = scmp.eq.s32.totalorder %s362, 0
      %s365 = sadd.s32 %s364, 1
      %s366 = scalar_select %p363, %s364, %s365
      %p369 = pneg %p363
      %p370 = scmp.eq.s32.totalorder %s21, 1
      %p371 = por %p369, %p370
      %p372 = scmp.ne.s32.totalorder %s364, %s367
      %p373 = scmp.eq.s32.totalorder %s21, 0
      %p374 = por %p372, %p373
      %p375 = scmp.ne.s32.totalorder %s364, %s367
      %p376 = scmp.eq.s32.totalorder %s26, 1
      %p377 = por %p375, %p376
      %p378 = scmp.ne.s32.totalorder %s367, %s368
      %p379 = scmp.eq.s32.totalorder %s26, 0
      %p380 = por %p378, %p379
      %p381 = scmp.ne.s32.totalorder %s367, %s368
      %p382 = scmp.eq.s32.totalorder %s27, 1
      %p383 = por %p381, %p382
      %p385 = scmp.ne.s32.totalorder %s368, %s384
      %p386 = scmp.eq.s32.totalorder %s27, 0
      %p387 = por %p385, %p386
      %s389 = sadd.s32 %s388, 1
      %p392 = scmp.eq.s32.totalorder %s21, 1
      %p393 = scmp.ne.s32.totalorder %s388, %s390
      %p394 = scmp.eq.s32.totalorder %s21, 0
      %p395 = por %p393, %p394
      %p396 = scmp.ne.s32.totalorder %s388, %s390
      %p397 = scmp.eq.s32.totalorder %s26, 1
      %p398 = por %p396, %p397
      %p399 = scmp.ne.s32.totalorder %s390, %s391
      %p400 = scmp.eq.s32.totalorder %s26, 0
      %p401 = por %p399, %p400
      %p402 = scmp.ne.s32.totalorder %s390, %s391
      %p403 = scmp.eq.s32.totalorder %s27, 1
      %p404 = por %p402, %p403
      %p406 = scmp.ne.s32.totalorder %s391, %s405
      %p407 = scmp.eq.s32.totalorder %s27, 0
      %p408 = por %p406, %p407
      %p409 = scmp.le.s32.totalorder 1, %s21
      %p410 = scmp.lt.s32.totalorder %s21, 3
      %p411 = pnand %p409, %p410
      %p412 = pneg %p411
      // Predicated region
      $region9: #{tpu_custom_call.1} parent=5 // pred_check
        _
      $region10: #{tpu_custom_call.1} parent=5 // pred_check_branch
        %414 = sbr.rel (%p411) target = $region12
      $region11: #{tpu_custom_call.1} parent=5 // pred_region
        %s415 = ssub.s32 %s21, 1
        // Predicated region
        $region13: #{tpu_custom_call.1} parent=11 // pred_check
          %p416 = pneg %p42
        $region14: #{tpu_custom_call.1} parent=11 // pred_check_branch
          %418 = sbr.rel (%p416) target = $region16
        $region15: #{tpu_custom_call.1} parent=11 // pred_region
          _
        $region16: #{tpu_custom_call.1} parent=11 // pred_fallthru
          _
      $region12: #{tpu_custom_call.1} parent=5 // pred_fallthru
        _
      %p419 = scmp.lt.s32.totalorder %s21, 2
      // Predicated region
      $region17: #{tpu_custom_call.1} parent=5 // pred_check
        %p420 = pneg %p419
      $region18: #{tpu_custom_call.1} parent=5 // pred_check_branch
        %422 = sbr.rel (%p420) target = $region20
      $region19: #{tpu_custom_call.1} parent=5 // pred_region
        // Predicated region
        $region21: #{tpu_custom_call.1} parent=19 // pred_check
          %p423 = pneg %p62
        $region22: #{tpu_custom_call.1} parent=19 // pred_check_branch
          %425 = sbr.rel (%p423) target = $region24
        $region23: #{tpu_custom_call.1} parent=19 // pred_region
          %p426 = scmp.lt.s32.totalorder %s21, 1
          %s427 = scalar_select %p426, %s21, 1
          %s428 = smul.addr %s427, 16
          %s429 = smul.addr %s428, 8
          %s430 = scalar_lea.vmem %s1, %s429
        $region24: #{tpu_custom_call.1} parent=19 // pred_fallthru
          _
        // Predicated region
        $region25: #{tpu_custom_call.1} parent=19 // pred_check
          %p431 = pneg %p88
        $region26: #{tpu_custom_call.1} parent=19 // pred_check_branch
          %433 = sbr.rel (%p431) target = $region28
        $region27: #{tpu_custom_call.1} parent=19 // pred_region
          %p434 = scmp.lt.s32.totalorder %s21, 1
          %s435 = scalar_select %p434, %s21, 1
          %s436 = smul.addr %s435, 16
          %s437 = smul.addr %s436, 8
          %s438 = scalar_lea.vmem %s2, %s437
        $region28: #{tpu_custom_call.1} parent=19 // pred_fallthru
          _
        // Predicated region
        $region29: #{tpu_custom_call.1} parent=19 // pred_check
          %p439 = pneg %p114
        $region30: #{tpu_custom_call.1} parent=19 // pred_check_branch
          %441 = sbr.rel (%p439) target = $region32
        $region31: #{tpu_custom_call.1} parent=19 // pred_region
          %p442 = scmp.lt.s32.totalorder %s21, 1
          %s443 = scalar_select %p442, %s21, 1
          %s444 = smul.addr %s443, 16
          %s445 = smul.addr %s444, 8
          %s446 = scalar_lea.vmem %s3, %s445
        $region32: #{tpu_custom_call.1} parent=19 // pred_fallthru
          _
        // Predicated region
        $region33: #{tpu_custom_call.1} parent=19 // pred_check
          %p447 = pneg %p140
        $region34: #{tpu_custom_call.1} parent=19 // pred_check_branch
          %449 = sbr.rel (%p447) target = $region36
        $region35: #{tpu_custom_call.1} parent=19 // pred_region
          %p450 = scmp.lt.s32.totalorder %s21, 1
          %s451 = scalar_select %p450, %s21, 1
          %s452 = smul.addr %s451, 4
          %s453 = smul.addr %s452, 8
          %s454 = scalar_lea.vmem %s4, %s453
        $region36: #{tpu_custom_call.1} parent=19 // pred_fallthru
          _
        // Predicated region
        $region37: #{tpu_custom_call.1} parent=19 // pred_check
          %p455 = pneg %p166
        $region38: #{tpu_custom_call.1} parent=19 // pred_check_branch
          %457 = sbr.rel (%p455) target = $region40
        $region39: #{tpu_custom_call.1} parent=19 // pred_region
          %p458 = scmp.lt.s32.totalorder %s21, 1
          %s459 = scalar_select %p458, %s21, 1
          %s460 = scalar_lea.vmem %s5, %s459
        $region40: #{tpu_custom_call.1} parent=19 // pred_fallthru
          _
        // Predicated region
        $region41: #{tpu_custom_call.1} parent=19 // pred_check
          %p461 = pneg %p192
        $region42: #{tpu_custom_call.1} parent=19 // pred_check_branch
          %463 = sbr.rel (%p461) target = $region44
        $region43: #{tpu_custom_call.1} parent=19 // pred_region
          %p464 = scmp.lt.s32.totalorder %s21, 1
          %s465 = scalar_select %p464, %s21, 1
          %s466 = scalar_lea.vmem %s6, %s465
        $region44: #{tpu_custom_call.1} parent=19 // pred_fallthru
          _
        // Predicated region
        $region45: #{tpu_custom_call.1} parent=19 // pred_check
          %p467 = pneg %p218
        $region46: #{tpu_custom_call.1} parent=19 // pred_check_branch
          %469 = sbr.rel (%p467) target = $region48
        $region47: #{tpu_custom_call.1} parent=19 // pred_region
          %p470 = scmp.lt.s32.totalorder %s21, 1
          %s471 = scalar_select %p470, %s21, 1
          %s472 = scalar_lea.vmem %s7, %s471
        $region48: #{tpu_custom_call.1} parent=19 // pred_fallthru
          _
        // Predicated region
        $region49: #{tpu_custom_call.1} parent=19 // pred_check
          %p473 = pneg %p244
        $region50: #{tpu_custom_call.1} parent=19 // pred_check_branch
          %475 = sbr.rel (%p473) target = $region52
        $region51: #{tpu_custom_call.1} parent=19 // pred_region
          %p476 = scmp.lt.s32.totalorder %s21, 1
          %s477 = scalar_select %p476, %s21, 1
          %s478 = smul.addr %s477, 4
          %s479 = smul.addr %s478, 8
          %s480 = scalar_lea.vmem %s8, %s479
        $region52: #{tpu_custom_call.1} parent=19 // pred_fallthru
          _
        // Predicated region
        $region53: #{tpu_custom_call.1} parent=19 // pred_check
          %p481 = pneg %p270
        $region54: #{tpu_custom_call.1} parent=19 // pred_check_branch
          %483 = sbr.rel (%p481) target = $region56
        $region55: #{tpu_custom_call.1} parent=19 // pred_region
          %p484 = scmp.lt.s32.totalorder %s21, 1
          %s485 = scalar_select %p484, %s21, 1
          %s486 = scalar_lea.vmem %s9, %s485
        $region56: #{tpu_custom_call.1} parent=19 // pred_fallthru
          _
        // Predicated region
        $region57: #{tpu_custom_call.1} parent=19 // pred_check
          %p487 = pneg %p296
        $region58: #{tpu_custom_call.1} parent=19 // pred_check_branch
          %489 = sbr.rel (%p487) target = $region60
        $region59: #{tpu_custom_call.1} parent=19 // pred_region
          %p490 = scmp.lt.s32.totalorder %s21, 1
          %s491 = scalar_select %p490, %s21, 1
          %s492 = smul.addr %s491, 8
          %s493 = smul.addr %s492, 8
          %s494 = scalar_lea.vmem %s10, %s493
        $region60: #{tpu_custom_call.1} parent=19 // pred_fallthru
          _
        // Predicated region
        $region61: #{tpu_custom_call.1} parent=19 // pred_check
          %p495 = pneg %p322
        $region62: #{tpu_custom_call.1} parent=19 // pred_check_branch
          %497 = sbr.rel (%p495) target = $region64
        $region63: #{tpu_custom_call.1} parent=19 // pred_region
          %p498 = scmp.lt.s32.totalorder %s21, 1
          %s499 = scalar_select %p498, %s21, 1
          %s500 = scalar_lea.vmem %s11, %s499
        $region64: #{tpu_custom_call.1} parent=19 // pred_fallthru
          _
        // Predicated region
        $region65: #{tpu_custom_call.1} parent=19 // pred_check
          %p501 = pneg %p348
        $region66: #{tpu_custom_call.1} parent=19 // pred_check_branch
          %503 = sbr.rel (%p501) target = $region68
        $region67: #{tpu_custom_call.1} parent=19 // pred_region
          %p504 = scmp.lt.s32.totalorder %s21, 1
          %s505 = scalar_select %p504, %s21, 1
          %s506 = scalar_lea.vmem %s12, %s505
        $region68: #{tpu_custom_call.1} parent=19 // pred_fallthru
          _
        // Predicated region
        $region69: #{tpu_custom_call.1} parent=19 // pred_check
          %p507 = pneg %p374
        $region70: #{tpu_custom_call.1} parent=19 // pred_check_branch
          %509 = sbr.rel (%p507) target = $region72
        $region71: #{tpu_custom_call.1} parent=19 // pred_region
          %p510 = scmp.lt.s32.totalorder %s21, 1
          %s511 = scalar_select %p510, %s21, 1
          %s512 = scalar_lea.vmem %s13, %s511
        $region72: #{tpu_custom_call.1} parent=19 // pred_fallthru
          _
      $region20: #{tpu_custom_call.1} parent=5 // pred_fallthru
        _
      %p513 = scmp.le.s32.totalorder 1, %s21
      %p514 = scmp.lt.s32.totalorder %s21, 3
      %p515 = pnand %p513, %p514
      %p516 = pneg %p515
      // Predicated region
      $region73: #{tpu_custom_call.1} parent=5 // pred_check
        _
      $region74: #{tpu_custom_call.1} parent=5 // pred_check_branch
        %518 = sbr.rel (%p515) target = $region76
      $region75: #{tpu_custom_call.1} parent=5 // pred_region
        %s519 = ssub.s32 %s21, 1
        %p520 = pneg %p42
        %p521 = pneg %p39
        %p522 = scmp.lt.s32.totalorder %s26, 1
        %s523 = scalar_select %p522, %s26, 1
        %s524 = smul.addr %s523, 16
        %s525 = smul.addr %s524, 8
        %s526 = scalar_lea.vmem %s1, %s525
        %p527 = pneg %p68
        %p528 = pneg %p65
        %p529 = scmp.lt.s32.totalorder %s26, 1
        %s530 = scalar_select %p529, %s26, 1
        %s531 = smul.addr %s530, 16
        %s532 = smul.addr %s531, 8
        %s533 = scalar_lea.vmem %s2, %s532
        %p534 = pneg %p94
        %p535 = pneg %p91
        %p536 = scmp.lt.s32.totalorder %s26, 1
        %s537 = scalar_select %p536, %s26, 1
        %s538 = smul.addr %s537, 16
        %s539 = smul.addr %s538, 8
        %s540 = scalar_lea.vmem %s3, %s539
        %p541 = pneg %p120
        %p542 = pneg %p117
        %p543 = scmp.lt.s32.totalorder %s26, 1
        %s544 = scalar_select %p543, %s26, 1
        %s545 = smul.addr %s544, 4
        %s546 = smul.addr %s545, 8
        %s547 = scalar_lea.vmem %s4, %s546
        %p548 = pneg %p146
        %p549 = pneg %p143
        %p550 = scmp.lt.s32.totalorder %s26, 1
        %s551 = scalar_select %p550, %s26, 1
        %s552 = scalar_lea.vmem %s5, %s551
        %p553 = pneg %p172
        %p554 = pneg %p169
        %p555 = scmp.lt.s32.totalorder %s26, 1
        %s556 = scalar_select %p555, %s26, 1
        %s557 = scalar_lea.vmem %s6, %s556
        %p558 = pneg %p198
        %p559 = pneg %p195
        %p560 = scmp.lt.s32.totalorder %s26, 1
        %s561 = scalar_select %p560, %s26, 1
        %s562 = scalar_lea.vmem %s7, %s561
        %p563 = pneg %p224
        %p564 = pneg %p221
        %p565 = scmp.lt.s32.totalorder %s26, 1
        %s566 = scalar_select %p565, %s26, 1
        %s567 = smul.addr %s566, 4
        %s568 = smul.addr %s567, 8
        %s569 = scalar_lea.vmem %s8, %s568
        %p570 = pneg %p250
        %p571 = pneg %p247
        %p572 = scmp.lt.s32.totalorder %s26, 1
        %s573 = scalar_select %p572, %s26, 1
        %s574 = scalar_lea.vmem %s9, %s573
        %p575 = pneg %p276
        %p576 = pneg %p273
        %p577 = scmp.lt.s32.totalorder %s26, 1
        %s578 = scalar_select %p577, %s26, 1
        %s579 = smul.addr %s578, 8
        %s580 = smul.addr %s579, 8
        %s581 = scalar_lea.vmem %s10, %s580
        %p582 = pneg %p302
        %p583 = pneg %p299
        %p584 = scmp.lt.s32.totalorder %s26, 1
        %s585 = scalar_select %p584, %s26, 1
        %s586 = scalar_lea.vmem %s11, %s585
        %p587 = pneg %p328
        %p588 = pneg %p325
        %p589 = scmp.lt.s32.totalorder %s26, 1
        %s590 = scalar_select %p589, %s26, 1
        %s591 = scalar_lea.vmem %s12, %s590
        %p592 = pneg %p354
        %p593 = pneg %p351
        %p594 = scmp.lt.s32.totalorder %s26, 1
        %s595 = scalar_select %p594, %s26, 1
        %s596 = scalar_lea.vmem %s13, %s595
        %p597 = pneg %p380
        %p598 = pneg %p377
        %p599 = pneg %p401
        %p600 = pneg %p398
        %p601 = scmp.lt.s32.totalorder %s26, 1
        %s602 = scalar_select %p601, %s26, 1
        %s603 = smul.addr %s602, 16
        %s604 = smul.addr %s603, 8
        %s605 = scalar_lea.vmem %s1, %s604
        %p606 = scmp.lt.s32.totalorder %s26, 1
        %s607 = scalar_select %p606, %s26, 1
        %s608 = smul.addr %s607, 16
        %s609 = smul.addr %s608, 8
        %s610 = scalar_lea.vmem %s2, %s609
        %p611 = scmp.lt.s32.totalorder %s26, 1
        %s612 = scalar_select %p611, %s26, 1
        %s613 = smul.addr %s612, 16
        %s614 = smul.addr %s613, 8
        %s615 = scalar_lea.vmem %s3, %s614
        %p616 = scmp.lt.s32.totalorder %s26, 1
        %s617 = scalar_select %p616, %s26, 1
        %s618 = smul.addr %s617, 4
        %s619 = smul.addr %s618, 8
        %s620 = scalar_lea.vmem %s4, %s619
        %p621 = scmp.lt.s32.totalorder %s26, 1
        %s622 = scalar_select %p621, %s26, 1
        %s623 = scalar_lea.vmem %s5, %s622
        %p624 = scmp.lt.s32.totalorder %s26, 1
        %s625 = scalar_select %p624, %s26, 1
        %s626 = scalar_lea.vmem %s6, %s625
        %p627 = scmp.lt.s32.totalorder %s26, 1
        %s628 = scalar_select %p627, %s26, 1
        %s629 = scalar_lea.vmem %s7, %s628
        %p630 = scmp.lt.s32.totalorder %s26, 1
        %s631 = scalar_select %p630, %s26, 1
        %s632 = smul.addr %s631, 4
        %s633 = smul.addr %s632, 8
        %s634 = scalar_lea.vmem %s8, %s633
        %p635 = scmp.lt.s32.totalorder %s26, 1
        %s636 = scalar_select %p635, %s26, 1
        %s637 = scalar_lea.vmem %s9, %s636
        %p638 = scmp.lt.s32.totalorder %s26, 1
        %s639 = scalar_select %p638, %s26, 1
        %s640 = smul.addr %s639, 8
        %s641 = smul.addr %s640, 8
        %s642 = scalar_lea.vmem %s10, %s641
        %p643 = scmp.lt.s32.totalorder %s26, 1
        %s644 = scalar_select %p643, %s26, 1
        %s645 = scalar_lea.vmem %s11, %s644
        %p646 = scmp.lt.s32.totalorder %s26, 1
        %s647 = scalar_select %p646, %s26, 1
        %s648 = scalar_lea.vmem %s12, %s647
        %p649 = scmp.lt.s32.totalorder %s26, 1
        %s650 = scalar_select %p649, %s26, 1
        %s651 = scalar_lea.vmem %s13, %s650
        %p652 = scmp.eq.s32.totalorder %s26, 0
        // Predicated region
        $region77: #{tpu_custom_call.1} parent=75 // pred_check
          %p653 = pneg %p652
        $region78: #{tpu_custom_call.1} parent=75 // pred_check_branch
          %655 = sbr.rel (%p653) target = $region80
        $region79: #{tpu_custom_call.1} parent=75 // pred_region
          %v656 = vld [vmem:[%s0] sm:$0xff]
          %v657 = vld [vmem:[%s0 + $0x8] sm:$0xff]
          %vm658 = vcmask 261120
          %659 = vst.msk [vmem:[#allocation2] sm:$0xff] %vm658, %v656
          %660 = vst.msk [vmem:[#allocation2 + $0x8] sm:$0xff] %vm658, %v657
        $region80: #{tpu_custom_call.1} parent=75 // pred_fallthru
          _
        %v661 = vld [vmem:[#allocation2] sm:$0xff]
        %v662 = vld [vmem:[#allocation2 + $0x8] sm:$0xff]
        %v663 = vld [vmem:[%s626] sm:$0x1]
        %v664 = vld [vmem:[%s629] sm:$0x1]
        %vm665 = vcmask 261120
        %v666 = vsel %vm665, %v661, 0.0
        %667 = vadd.xlane.f32.xlu0 %v666
        %v668 = vpop.xlane.xlu0 %667
        %v669 = vsel %vm665, %v662, 0.0
        %670 = vadd.xlane.f32.xlu0 %v669
        %v671 = vpop.xlane.xlu0 %670
        %v672 = vrcp.pop 32.0
        %v673 = vmul.f32 %v668, %v672
        %v674 = vmul.f32 %v671, %v672
        %v675 = vsub.f32 %v661, %v673
        %v676 = vsub.f32 %v662, %v674
        %v677 = vmul.f32 %v675, %v675
        %v678 = vmul.f32 %v676, %v676
        %v679 = vsel %vm665, %v677, 0.0
        %680 = vadd.xlane.f32.xlu0 %v679
        %v681 = vpop.xlane.xlu0 %680
        %v682 = vsel %vm665, %v678, 0.0
        %683 = vadd.xlane.f32.xlu0 %v682
        %v684 = vpop.xlane.xlu0 %683
        %v685 = vmul.f32 %v681, %v672
        %v686 = vmul.f32 %v684, %v672
        %v687 = vadd.f32 %v685, 1e-05
        %v688 = vadd.f32 %v686, 1e-05
        %v689 = vrsqrt.pop %v687
        %v690 = vrsqrt.pop %v688
        %v691 = vmul.f32 %v675, %v689
        %v692 = vmul.f32 %v676, %v690
        %v694 = vlaneseq
        %v695 = vshrl.u32 %v694, 7
        %v696 = vsub.s32 0, %v695
        %v697 = vrot.slane %v663, %v696
        %v699 = vmul.f32 %v691, %v697
        %v700 = vmul.f32 %v692, %v697
        %v702 = vlaneseq
        %v703 = vshrl.u32 %v702, 7
        %v704 = vsub.s32 0, %v703
        %v705 = vrot.slane %v664, %v704
        %v707 = vadd.f32 %v699, %v705
        %v708 = vadd.f32 %v700, %v705
        %v709 = vld [vmem:[%s605] sm:$0xff]
        %v710 = vld [vmem:[%s605 + $0x8] sm:$0xff]
        %v711 = vld [vmem:[%s605 + $0x10] sm:$0xff]
        %v712 = vld [vmem:[%s605 + $0x18] sm:$0xff]
        %v713 = vld [vmem:[%s605 + $0x20] sm:$0xff]
        %v714 = vld [vmem:[%s605 + $0x28] sm:$0xff]
        %v715 = vld [vmem:[%s605 + $0x30] sm:$0xff]
        %v716 = vld [vmem:[%s605 + $0x38] sm:$0xff]
        %v717 = vld [vmem:[%s605 + $0x40] sm:$0xff]
        %v718 = vld [vmem:[%s605 + $0x48] sm:$0xff]
        %v719 = vld [vmem:[%s605 + $0x50] sm:$0xff]
        %v720 = vld [vmem:[%s605 + $0x58] sm:$0xff]
        %v721 = vld [vmem:[%s605 + $0x60] sm:$0xff]
        %v722 = vld [vmem:[%s605 + $0x68] sm:$0xff]
        %v723 = vld [vmem:[%s605 + $0x70] sm:$0xff]
        %v724 = vld [vmem:[%s605 + $0x78] sm:$0xff]
        %v726 = vsel %vm665, %v707, 0
        %728 = vmatprep.subr.mxu0 0.0
        %729 = vmatpush1.msra.mxu0 %v709
        %730 = vmatprep.subr.mxu0 0.0
        %731 = vmatpush1.msra.mxu0 %v710
        %732 = vmatprep.subr.mxu0 0.0
        %733 = vmatpush1.msra.mxu0 %v711
        %734 = vmatprep.subr.mxu0 0.0
        %735 = vmatpush1.msra.mxu0 %v712
        %736 = vmatprep.subr.mxu0 0.0
        %737 = vmatpush1.msra.mxu0 0.0
        %738 = vmatprep.subr.mxu0 0.0
        %739 = vmatpush1.msra.mxu0 0.0
        %740 = vmatprep.subr.mxu0 0.0
        %741 = vmatpush1.msra.mxu0 0.0
        %742 = vmatprep.subr.mxu0 0.0
        %743 = vmatpush1.msra.mxu0 0.0
        %744 = vmatprep.subr.mxu0 0.0
        %745 = vmatpush1.msra.mxu0 0.0
        %746 = vmatprep.subr.mxu0 0.0
        %747 = vmatpush1.msra.mxu0 0.0
        %748 = vmatprep.subr.mxu0 0.0
        %749 = vmatpush1.msra.mxu0 0.0
        %750 = vmatprep.subr.mxu0 0.0
        %751 = vmatpush1.msra.mxu0 0.0
        %752 = vmatprep.subr.mxu0 0.0
        %753 = vmatpush1.msra.mxu0 0.0
        %754 = vmatprep.subr.mxu0 0.0
        %755 = vmatpush1.msra.mxu0 0.0
        %756 = vmatprep.subr.mxu0 0.0
        %757 = vmatpush1.msra.mxu0 0.0
        %758 = vmatprep.subr.mxu0 0.0
        %759 = vmatpush1.msra.mxu0 0.0
        %760 = vmatprep.subr.mxu0 0.0
        %761 = vmatpush1.msra.mxu0 0.0
        %762 = vmatprep.subr.mxu0 0.0
        %763 = vmatpush1.msra.mxu0 0.0
        %764 = vmatprep.subr.mxu0 0.0
        %765 = vmatpush1.msra.mxu0 0.0
        %766 = vmatprep.subr.mxu0 0.0
        %767 = vmatpush1.msra.mxu0 0.0
        %768 = vmatprep.subr.mxu0 0.0
        %769 = vmatpush1.msra.mxu0 0.0
        %770 = vmatprep.subr.mxu0 0.0
        %771 = vmatpush1.msra.mxu0 0.0
        %772 = vmatprep.subr.mxu0 0.0
        %773 = vmatpush1.msra.mxu0 0.0
        %774 = vmatprep.subr.mxu0 0.0
        %775 = vmatpush1.msra.mxu0 0.0
        %776 = vmatprep.subr.mxu0 0.0
        %777 = vmatpush1.msra.mxu0 0.0
        %778 = vmatprep.subr.mxu0 0.0
        %779 = vmatpush1.msra.mxu0 0.0
        %780 = vmatprep.subr.mxu0 0.0
        %781 = vmatpush1.msra.mxu0 0.0
        %782 = vmatprep.subr.mxu0 0.0
        %783 = vmatpush1.msra.mxu0 0.0
        %784 = vmatprep.subr.mxu0 0.0
        %785 = vmatpush1.msra.mxu0 0.0
        %786 = vmatprep.subr.mxu0 0.0
        %787 = vmatpush1.msra.mxu0 0.0
        %788 = vmatprep.subr.mxu0 0.0
        %789 = vmatpush1.msra.mxu0 0.0
        %790 = vmatprep.subr.mxu0 0.0
        %791 = vmatpush1.msra.mxu0 0.0
        %792 = vmatprep.mubr.f32.mxu0 0.0
        %793 = vmatmul.mubr.f32.gmra.mrb[0].mxu0 %v726
        %v794 = vpop.f32.mrb[0].mxu0
        %v795 = vadd.f32 0.0, %v794
        %v796 = vpop.f32.mrb[0].mxu0
        %797 = vdwg.mxu0
        %v799 = vsel %vm665, %v708, 0
        %801 = vmatprep.subr.mxu0 0.0
        %802 = vmatpush1.msra.mxu0 %v709
        %803 = vmatprep.subr.mxu0 0.0
        %804 = vmatpush1.msra.mxu0 %v710
        %805 = vmatprep.subr.mxu0 0.0
        %806 = vmatpush1.msra.mxu0 %v711
        %807 = vmatprep.subr.mxu0 0.0
        %808 = vmatpush1.msra.mxu0 %v712
        %809 = vmatprep.subr.mxu0 0.0
        %810 = vmatpush1.msra.mxu0 0.0
        %811 = vmatprep.subr.mxu0 0.0
        %812 = vmatpush1.msra.mxu0 0.0
        %813 = vmatprep.subr.mxu0 0.0
        %814 = vmatpush1.msra.mxu0 0.0
        %815 = vmatprep.subr.mxu0 0.0
        %816 = vmatpush1.msra.mxu0 0.0
        %817 = vmatprep.subr.mxu0 0.0
        %818 = vmatpush1.msra.mxu0 0.0
        %819 = vmatprep.subr.mxu0 0.0
        %820 = vmatpush1.msra.mxu0 0.0
        %821 = vmatprep.subr.mxu0 0.0
        %822 = vmatpush1.msra.mxu0 0.0
        %823 = vmatprep.subr.mxu0 0.0
        %824 = vmatpush1.msra.mxu0 0.0
        %825 = vmatprep.subr.mxu0 0.0
        %826 = vmatpush1.msra.mxu0 0.0
        %827 = vmatprep.subr.mxu0 0.0
        %828 = vmatpush1.msra.mxu0 0.0
        %829 = vmatprep.subr.mxu0 0.0
        %830 = vmatpush1.msra.mxu0 0.0
        %831 = vmatprep.subr.mxu0 0.0
        %832 = vmatpush1.msra.mxu0 0.0
        %833 = vmatprep.subr.mxu0 0.0
        %834 = vmatpush1.msra.mxu0 0.0
        %835 = vmatprep.subr.mxu0 0.0
        %836 = vmatpush1.msra.mxu0 0.0
        %837 = vmatprep.subr.mxu0 0.0
        %838 = vmatpush1.msra.mxu0 0.0
        %839 = vmatprep.subr.mxu0 0.0
        %840 = vmatpush1.msra.mxu0 0.0
        %841 = vmatprep.subr.mxu0 0.0
        %842 = vmatpush1.msra.mxu0 0.0
        %843 = vmatprep.subr.mxu0 0.0
        %844 = vmatpush1.msra.mxu0 0.0
        %845 = vmatprep.subr.mxu0 0.0
        %846 = vmatpush1.msra.mxu0 0.0
        %847 = vmatprep.subr.mxu0 0.0
        %848 = vmatpush1.msra.mxu0 0.0
        %849 = vmatprep.subr.mxu0 0.0
        %850 = vmatpush1.msra.mxu0 0.0
        %851 = vmatprep.subr.mxu0 0.0
        %852 = vmatpush1.msra.mxu0 0.0
        %853 = vmatprep.subr.mxu0 0.0
        %854 = vmatpush1.msra.mxu0 0.0
        %855 = vmatprep.subr.mxu0 0.0
        %856 = vmatpush1.msra.mxu0 0.0
        %857 = vmatprep.subr.mxu0 0.0
        %858 = vmatpush1.msra.mxu0 0.0
        %859 = vmatprep.subr.mxu0 0.0
        %860 = vmatpush1.msra.mxu0 0.0
        %861 = vmatprep.subr.mxu0 0.0
        %862 = vmatpush1.msra.mxu0 0.0
        %863 = vmatprep.subr.mxu0 0.0
        %864 = vmatpush1.msra.mxu0 0.0
        %865 = vmatprep.mubr.f32.mxu0 0.0
        %866 = vmatmul.mubr.f32.gmra.mrb[0].mxu0 %v799
        %v867 = vpop.f32.mrb[0].mxu0
        %v868 = vadd.f32 0.0, %v867
        %v869 = vpop.f32.mrb[0].mxu0
        %870 = vdwg.mxu0
        %871 = vmatprep.subr.mxu0 0.0
        %872 = vmatpush1.msra.mxu0 %v713
        %873 = vmatprep.subr.mxu0 0.0
        %874 = vmatpush1.msra.mxu0 %v714
        %875 = vmatprep.subr.mxu0 0.0
        %876 = vmatpush1.msra.mxu0 %v715
        %877 = vmatprep.subr.mxu0 0.0
        %878 = vmatpush1.msra.mxu0 %v716
        %879 = vmatprep.subr.mxu0 0.0
        %880 = vmatpush1.msra.mxu0 0.0
        %881 = vmatprep.subr.mxu0 0.0
        %882 = vmatpush1.msra.mxu0 0.0
        %883 = vmatprep.subr.mxu0 0.0
        %884 = vmatpush1.msra.mxu0 0.0
        %885 = vmatprep.subr.mxu0 0.0
        %886 = vmatpush1.msra.mxu0 0.0
        %887 = vmatprep.subr.mxu0 0.0
        %888 = vmatpush1.msra.mxu0 0.0
        %889 = vmatprep.subr.mxu0 0.0
        %890 = vmatpush1.msra.mxu0 0.0
        %891 = vmatprep.subr.mxu0 0.0
        %892 = vmatpush1.msra.mxu0 0.0
        %893 = vmatprep.subr.mxu0 0.0
        %894 = vmatpush1.msra.mxu0 0.0
        %895 = vmatprep.subr.mxu0 0.0
        %896 = vmatpush1.msra.mxu0 0.0
        %897 = vmatprep.subr.mxu0 0.0
        %898 = vmatpush1.msra.mxu0 0.0
        %899 = vmatprep.subr.mxu0 0.0
        %900 = vmatpush1.msra.mxu0 0.0
        %901 = vmatprep.subr.mxu0 0.0
        %902 = vmatpush1.msra.mxu0 0.0
        %903 = vmatprep.subr.mxu0 0.0
        %904 = vmatpush1.msra.mxu0 0.0
        %905 = vmatprep.subr.mxu0 0.0
        %906 = vmatpush1.msra.mxu0 0.0
        %907 = vmatprep.subr.mxu0 0.0
        %908 = vmatpush1.msra.mxu0 0.0
        %909 = vmatprep.subr.mxu0 0.0
        %910 = vmatpush1.msra.mxu0 0.0
        %911 = vmatprep.subr.mxu0 0.0
        %912 = vmatpush1.msra.mxu0 0.0
        %913 = vmatprep.subr.mxu0 0.0
        %914 = vmatpush1.msra.mxu0 0.0
        %915 = vmatprep.subr.mxu0 0.0
        %916 = vmatpush1.msra.mxu0 0.0
        %917 = vmatprep.subr.mxu0 0.0
        %918 = vmatpush1.msra.mxu0 0.0
        %919 = vmatprep.subr.mxu0 0.0
        %920 = vmatpush1.msra.mxu0 0.0
        %921 = vmatprep.subr.mxu0 0.0
        %922 = vmatpush1.msra.mxu0 0.0
        %923 = vmatprep.subr.mxu0 0.0
        %924 = vmatpush1.msra.mxu0 0.0
        %925 = vmatprep.subr.mxu0 0.0
        %926 = vmatpush1.msra.mxu0 0.0
        %927 = vmatprep.subr.mxu0 0.0
        %928 = vmatpush1.msra.mxu0 0.0
        %929 = vmatprep.subr.mxu0 0.0
        %930 = vmatpush1.msra.mxu0 0.0
        %931 = vmatprep.subr.mxu0 0.0
        %932 = vmatpush1.msra.mxu0 0.0
        %933 = vmatprep.subr.mxu0 0.0
        %934 = vmatpush1.msra.mxu0 0.0
        %935 = vmatprep.mubr.f32.mxu0 0.0
        %936 = vmatmul.mubr.f32.gmra.mrb[0].mxu0 %v726
        %v937 = vpop.f32.mrb[0].mxu0
        %v938 = vadd.f32 0.0, %v937
        %v939 = vpop.f32.mrb[0].mxu0
        %940 = vdwg.mxu0
        %941 = vmatprep.subr.mxu0 0.0
        %942 = vmatpush1.msra.mxu0 %v713
        %943 = vmatprep.subr.mxu0 0.0
        %944 = vmatpush1.msra.mxu0 %v714
        %945 = vmatprep.subr.mxu0 0.0
        %946 = vmatpush1.msra.mxu0 %v715
        %947 = vmatprep.subr.mxu0 0.0
        %948 = vmatpush1.msra.mxu0 %v716
        %949 = vmatprep.subr.mxu0 0.0
        %950 = vmatpush1.msra.mxu0 0.0
        %951 = vmatprep.subr.mxu0 0.0
        %952 = vmatpush1.msra.mxu0 0.0
        %953 = vmatprep.subr.mxu0 0.0
        %954 = vmatpush1.msra.mxu0 0.0
        %955 = vmatprep.subr.mxu0 0.0
        %956 = vmatpush1.msra.mxu0 0.0
        %957 = vmatprep.subr.mxu0 0.0
        %958 = vmatpush1.msra.mxu0 0.0
        %959 = vmatprep.subr.mxu0 0.0
        %960 = vmatpush1.msra.mxu0 0.0
        %961 = vmatprep.subr.mxu0 0.0
        %962 = vmatpush1.msra.mxu0 0.0
        %963 = vmatprep.subr.mxu0 0.0
        %964 = vmatpush1.msra.mxu0 0.0
        %965 = vmatprep.subr.mxu0 0.0
        %966 = vmatpush1.msra.mxu0 0.0
        %967 = vmatprep.subr.mxu0 0.0
        %968 = vmatpush1.msra.mxu0 0.0
        %969 = vmatprep.subr.mxu0 0.0
        %970 = vmatpush1.msra.mxu0 0.0
        %971 = vmatprep.subr.mxu0 0.0
        %972 = vmatpush1.msra.mxu0 0.0
        %973 = vmatprep.subr.mxu0 0.0
        %974 = vmatpush1.msra.mxu0 0.0
        %975 = vmatprep.subr.mxu0 0.0
        %976 = vmatpush1.msra.mxu0 0.0
        %977 = vmatprep.subr.mxu0 0.0
        %978 = vmatpush1.msra.mxu0 0.0
        %979 = vmatprep.subr.mxu0 0.0
        %980 = vmatpush1.msra.mxu0 0.0
        %981 = vmatprep.subr.mxu0 0.0
        %982 = vmatpush1.msra.mxu0 0.0
        %983 = vmatprep.subr.mxu0 0.0
        %984 = vmatpush1.msra.mxu0 0.0
        %985 = vmatprep.subr.mxu0 0.0
        %986 = vmatpush1.msra.mxu0 0.0
        %987 = vmatprep.subr.mxu0 0.0
        %988 = vmatpush1.msra.mxu0 0.0
        %989 = vmatprep.subr.mxu0 0.0
        %990 = vmatpush1.msra.mxu0 0.0
        %991 = vmatprep.subr.mxu0 0.0
        %992 = vmatpush1.msra.mxu0 0.0
        %993 = vmatprep.subr.mxu0 0.0
        %994 = vmatpush1.msra.mxu0 0.0
        %995 = vmatprep.subr.mxu0 0.0
        %996 = vmatpush1.msra.mxu0 0.0
        %997 = vmatprep.subr.mxu0 0.0
        %998 = vmatpush1.msra.mxu0 0.0
        %999 = vmatprep.subr.mxu0 0.0
        %1000 = vmatpush1.msra.mxu0 0.0
        %1001 = vmatprep.subr.mxu0 0.0
        %1002 = vmatpush1.msra.mxu0 0.0
        %1003 = vmatprep.subr.mxu0 0.0
        %1004 = vmatpush1.msra.mxu0 0.0
        %1005 = vmatprep.mubr.f32.mxu0 0.0
        %1006 = vmatmul.mubr.f32.gmra.mrb[0].mxu0 %v799
        %v1007 = vpop.f32.mrb[0].mxu0
        %v1008 = vadd.f32 0.0, %v1007
        %v1009 = vpop.f32.mrb[0].mxu0
        %1010 = vdwg.mxu0
        %1011 = vmatprep.subr.mxu0 0.0
        %1012 = vmatpush1.msra.mxu0 %v717
        %1013 = vmatprep.subr.mxu0 0.0
        %1014 = vmatpush1.msra.mxu0 %v718
        %1015 = vmatprep.subr.mxu0 0.0
        %1016 = vmatpush1.msra.mxu0 %v719
        %1017 = vmatprep.subr.mxu0 0.0
        %1018 = vmatpush1.msra.mxu0 %v720
        %1019 = vmatprep.subr.mxu0 0.0
        %1020 = vmatpush1.msra.mxu0 0.0
        %1021 = vmatprep.subr.mxu0 0.0
        %1022 = vmatpush1.msra.mxu0 0.0
        %1023 = vmatprep.subr.mxu0 0.0
        %1024 = vmatpush1.msra.mxu0 0.0
        %1025 = vmatprep.subr.mxu0 0.0
        %1026 = vmatpush1.msra.mxu0 0.0
        %1027 = vmatprep.subr.mxu0 0.0
        %1028 = vmatpush1.msra.mxu0 0.0
        %1029 = vmatprep.subr.mxu0 0.0
        %1030 = vmatpush1.msra.mxu0 0.0
        %1031 = vmatprep.subr.mxu0 0.0
        %1032 = vmatpush1.msra.mxu0 0.0
        %1033 = vmatprep.subr.mxu0 0.0
        %1034 = vmatpush1.msra.mxu0 0.0
        %1035 = vmatprep.subr.mxu0 0.0
        %1036 = vmatpush1.msra.mxu0 0.0
        %1037 = vmatprep.subr.mxu0 0.0
        %1038 = vmatpush1.msra.mxu0 0.0
        %1039 = vmatprep.subr.mxu0 0.0
        %1040 = vmatpush1.msra.mxu0 0.0
        %1041 = vmatprep.subr.mxu0 0.0
        %1042 = vmatpush1.msra.mxu0 0.0
        %1043 = vmatprep.subr.mxu0 0.0
        %1044 = vmatpush1.msra.mxu0 0.0
        %1045 = vmatprep.subr.mxu0 0.0
        %1046 = vmatpush1.msra.mxu0 0.0
        %1047 = vmatprep.subr.mxu0 0.0
        %1048 = vmatpush1.msra.mxu0 0.0
        %1049 = vmatprep.subr.mxu0 0.0
        %1050 = vmatpush1.msra.mxu0 0.0
        %1051 = vmatprep.subr.mxu0 0.0
        %1052 = vmatpush1.msra.mxu0 0.0
        %1053 = vmatprep.subr.mxu0 0.0
        %1054 = vmatpush1.msra.mxu0 0.0
        %1055 = vmatprep.subr.mxu0 0.0
        %1056 = vmatpush1.msra.mxu0 0.0
        %1057 = vmatprep.subr.mxu0 0.0
        %1058 = vmatpush1.msra.mxu0 0.0
        %1059 = vmatprep.subr.mxu0 0.0
        %1060 = vmatpush1.msra.mxu0 0.0
        %1061 = vmatprep.subr.mxu0 0.0
        %1062 = vmatpush1.msra.mxu0 0.0
        %1063 = vmatprep.subr.mxu0 0.0
        %1064 = vmatpush1.msra.mxu0 0.0
        %1065 = vmatprep.subr.mxu0 0.0
        %1066 = vmatpush1.msra.mxu0 0.0
        %1067 = vmatprep.subr.mxu0 0.0
        %1068 = vmatpush1.msra.mxu0 0.0
        %1069 = vmatprep.subr.mxu0 0.0
        %1070 = vmatpush1.msra.mxu0 0.0
        %1071 = vmatprep.subr.mxu0 0.0
        %1072 = vmatpush1.msra.mxu0 0.0
        %1073 = vmatprep.subr.mxu0 0.0
        %1074 = vmatpush1.msra.mxu0 0.0
        %1075 = vmatprep.mubr.f32.mxu0 0.0
        %1076 = vmatmul.mubr.f32.gmra.mrb[0].mxu0 %v726
        %v1077 = vpop.f32.mrb[0].mxu0
        %v1078 = vadd.f32 0.0, %v1077
        %v1079 = vpop.f32.mrb[0].mxu0
        %1080 = vdwg.mxu0
        %1081 = vmatprep.subr.mxu0 0.0
        %1082 = vmatpush1.msra.mxu0 %v717
        %1083 = vmatprep.subr.mxu0 0.0
        %1084 = vmatpush1.msra.mxu0 %v718
        %1085 = vmatprep.subr.mxu0 0.0
        %1086 = vmatpush1.msra.mxu0 %v719
        %1087 = vmatprep.subr.mxu0 0.0
        %1088 = vmatpush1.msra.mxu0 %v720
        %1089 = vmatprep.subr.mxu0 0.0
        %1090 = vmatpush1.msra.mxu0 0.0
        %1091 = vmatprep.subr.mxu0 0.0
        %1092 = vmatpush1.msra.mxu0 0.0
        %1093 = vmatprep.subr.mxu0 0.0
        %1094 = vmatpush1.msra.mxu0 0.0
        %1095 = vmatprep.subr.mxu0 0.0
        %1096 = vmatpush1.msra.mxu0 0.0
        %1097 = vmatprep.subr.mxu0 0.0
        %1098 = vmatpush1.msra.mxu0 0.0
        %1099 = vmatprep.subr.mxu0 0.0
        %1100 = vmatpush1.msra.mxu0 0.0
        %1101 = vmatprep.subr.mxu0 0.0
        %1102 = vmatpush1.msra.mxu0 0.0
        %1103 = vmatprep.subr.mxu0 0.0
        %1104 = vmatpush1.msra.mxu0 0.0
        %1105 = vmatprep.subr.mxu0 0.0
        %1106 = vmatpush1.msra.mxu0 0.0
        %1107 = vmatprep.subr.mxu0 0.0
        %1108 = vmatpush1.msra.mxu0 0.0
        %1109 = vmatprep.subr.mxu0 0.0
        %1110 = vmatpush1.msra.mxu0 0.0
        %1111 = vmatprep.subr.mxu0 0.0
        %1112 = vmatpush1.msra.mxu0 0.0
        %1113 = vmatprep.subr.mxu0 0.0
        %1114 = vmatpush1.msra.mxu0 0.0
        %1115 = vmatprep.subr.mxu0 0.0
        %1116 = vmatpush1.msra.mxu0 0.0
        %1117 = vmatprep.subr.mxu0 0.0
        %1118 = vmatpush1.msra.mxu0 0.0
        %1119 = vmatprep.subr.mxu0 0.0
        %1120 = vmatpush1.msra.mxu0 0.0
        %1121 = vmatprep.subr.mxu0 0.0
        %1122 = vmatpush1.msra.mxu0 0.0
        %1123 = vmatprep.subr.mxu0 0.0
        %1124 = vmatpush1.msra.mxu0 0.0
        %1125 = vmatprep.subr.mxu0 0.0
        %1126 = vmatpush1.msra.mxu0 0.0
        %1127 = vmatprep.subr.mxu0 0.0
        %1128 = vmatpush1.msra.mxu0 0.0
        %1129 = vmatprep.subr.mxu0 0.0
        %1130 = vmatpush1.msra.mxu0 0.0
        %1131 = vmatprep.subr.mxu0 0.0
        %1132 = vmatpush1.msra.mxu0 0.0
        %1133 = vmatprep.subr.mxu0 0.0
        %1134 = vmatpush1.msra.mxu0 0.0
        %1135 = vmatprep.subr.mxu0 0.0
        %1136 = vmatpush1.msra.mxu0 0.0
        %1137 = vmatprep.subr.mxu0 0.0
        %1138 = vmatpush1.msra.mxu0 0.0
        %1139 = vmatprep.subr.mxu0 0.0
        %1140 = vmatpush1.msra.mxu0 0.0
        %1141 = vmatprep.subr.mxu0 0.0
        %1142 = vmatpush1.msra.mxu0 0.0
        %1143 = vmatprep.subr.mxu0 0.0
        %1144 = vmatpush1.msra.mxu0 0.0
        %1145 = vmatprep.mubr.f32.mxu0 0.0
        %1146 = vmatmul.mubr.f32.gmra.mrb[0].mxu0 %v799
        %v1147 = vpop.f32.mrb[0].mxu0
        %v1148 = vadd.f32 0.0, %v1147
        %v1149 = vpop.f32.mrb[0].mxu0
        %1150 = vdwg.mxu0
        %1151 = vmatprep.subr.mxu0 0.0
        %1152 = vmatpush1.msra.mxu0 %v721
        %1153 = vmatprep.subr.mxu0 0.0
        %1154 = vmatpush1.msra.mxu0 %v722
        %1155 = vmatprep.subr.mxu0 0.0
        %1156 = vmatpush1.msra.mxu0 %v723
        %1157 = vmatprep.subr.mxu0 0.0
        %1158 = vmatpush1.msra.mxu0 %v724
        %1159 = vmatprep.subr.mxu0 0.0
        %1160 = vmatpush1.msra.mxu0 0.0
        %1161 = vmatprep.subr.mxu0 0.0
        %1162 = vmatpush1.msra.mxu0 0.0
        %1163 = vmatprep.subr.mxu0 0.0
        %1164 = vmatpush1.msra.mxu0 0.0
        %1165 = vmatprep.subr.mxu0 0.0
        %1166 = vmatpush1.msra.mxu0 0.0
        %1167 = vmatprep.subr.mxu0 0.0
        %1168 = vmatpush1.msra.mxu0 0.0
        %1169 = vmatprep.subr.mxu0 0.0
        %1170 = vmatpush1.msra.mxu0 0.0
        %1171 = vmatprep.subr.mxu0 0.0
        %1172 = vmatpush1.msra.mxu0 0.0
        %1173 = vmatprep.subr.mxu0 0.0
        %1174 = vmatpush1.msra.mxu0 0.0
        %1175 = vmatprep.subr.mxu0 0.0
        %1176 = vmatpush1.msra.mxu0 0.0
        %1177 = vmatprep.subr.mxu0 0.0
        %1178 = vmatpush1.msra.mxu0 0.0
        %1179 = vmatprep.subr.mxu0 0.0
        %1180 = vmatpush1.msra.mxu0 0.0
        %1181 = vmatprep.subr.mxu0 0.0
        %1182 = vmatpush1.msra.mxu0 0.0
        %1183 = vmatprep.subr.mxu0 0.0
        %1184 = vmatpush1.msra.mxu0 0.0
        %1185 = vmatprep.subr.mxu0 0.0
        %1186 = vmatpush1.msra.mxu0 0.0
        %1187 = vmatprep.subr.mxu0 0.0
        %1188 = vmatpush1.msra.mxu0 0.0
        %1189 = vmatprep.subr.mxu0 0.0
        %1190 = vmatpush1.msra.mxu0 0.0
        %1191 = vmatprep.subr.mxu0 0.0
        %1192 = vmatpush1.msra.mxu0 0.0
        %1193 = vmatprep.subr.mxu0 0.0
        %1194 = vmatpush1.msra.mxu0 0.0
        %1195 = vmatprep.subr.mxu0 0.0
        %1196 = vmatpush1.msra.mxu0 0.0
        %1197 = vmatprep.subr.mxu0 0.0
        %1198 = vmatpush1.msra.mxu0 0.0
        %1199 = vmatprep.subr.mxu0 0.0
        %1200 = vmatpush1.msra.mxu0 0.0
        %1201 = vmatprep.subr.mxu0 0.0
        %1202 = vmatpush1.msra.mxu0 0.0
        %1203 = vmatprep.subr.mxu0 0.0
        %1204 = vmatpush1.msra.mxu0 0.0
        %1205 = vmatprep.subr.mxu0 0.0
        %1206 = vmatpush1.msra.mxu0 0.0
        %1207 = vmatprep.subr.mxu0 0.0
        %1208 = vmatpush1.msra.mxu0 0.0
        %1209 = vmatprep.subr.mxu0 0.0
        %1210 = vmatpush1.msra.mxu0 0.0
        %1211 = vmatprep.subr.mxu0 0.0
        %1212 = vmatpush1.msra.mxu0 0.0
        %1213 = vmatprep.subr.mxu0 0.0
        %1214 = vmatpush1.msra.mxu0 0.0
        %1215 = vmatprep.mubr.f32.mxu0 0.0
        %1216 = vmatmul.mubr.f32.gmra.mrb[0].mxu0 %v726
        %v1217 = vpop.f32.mrb[0].mxu0
        %v1218 = vadd.f32 0.0, %v1217
        %v1219 = vpop.f32.mrb[0].mxu0
        %1220 = vdwg.mxu0
        %1221 = vmatprep.subr.mxu0 0.0
        %1222 = vmatpush1.msra.mxu0 %v721
        %1223 = vmatprep.subr.mxu0 0.0
        %1224 = vmatpush1.msra.mxu0 %v722
        %1225 = vmatprep.subr.mxu0 0.0
        %1226 = vmatpush1.msra.mxu0 %v723
        %1227 = vmatprep.subr.mxu0 0.0
        %1228 = vmatpush1.msra.mxu0 %v724
        %1229 = vmatprep.subr.mxu0 0.0
        %1230 = vmatpush1.msra.mxu0 0.0
        %1231 = vmatprep.subr.mxu0 0.0
        %1232 = vmatpush1.msra.mxu0 0.0
        %1233 = vmatprep.subr.mxu0 0.0
        %1234 = vmatpush1.msra.mxu0 0.0
        %1235 = vmatprep.subr.mxu0 0.0
        %1236 = vmatpush1.msra.mxu0 0.0
        %1237 = vmatprep.subr.mxu0 0.0
        %1238 = vmatpush1.msra.mxu0 0.0
        %1239 = vmatprep.subr.mxu0 0.0
        %1240 = vmatpush1.msra.mxu0 0.0
        %1241 = vmatprep.subr.mxu0 0.0
        %1242 = vmatpush1.msra.mxu0 0.0
        %1243 = vmatprep.subr.mxu0 0.0
        %1244 = vmatpush1.msra.mxu0 0.0
        %1245 = vmatprep.subr.mxu0 0.0
        %1246 = vmatpush1.msra.mxu0 0.0
        %1247 = vmatprep.subr.mxu0 0.0
        %1248 = vmatpush1.msra.mxu0 0.0
        %1249 = vmatprep.subr.mxu0 0.0
        %1250 = vmatpush1.msra.mxu0 0.0
        %1251 = vmatprep.subr.mxu0 0.0
        %1252 = vmatpush1.msra.mxu0 0.0
        %1253 = vmatprep.subr.mxu0 0.0
        %1254 = vmatpush1.msra.mxu0 0.0
        %1255 = vmatprep.subr.mxu0 0.0
        %1256 = vmatpush1.msra.mxu0 0.0
        %1257 = vmatprep.subr.mxu0 0.0
        %1258 = vmatpush1.msra.mxu0 0.0
        %1259 = vmatprep.subr.mxu0 0.0
        %1260 = vmatpush1.msra.mxu0 0.0
        %1261 = vmatprep.subr.mxu0 0.0
        %1262 = vmatpush1.msra.mxu0 0.0
        %1263 = vmatprep.subr.mxu0 0.0
        %1264 = vmatpush1.msra.mxu0 0.0
        %1265 = vmatprep.subr.mxu0 0.0
        %1266 = vmatpush1.msra.mxu0 0.0
        %1267 = vmatprep.subr.mxu0 0.0
        %1268 = vmatpush1.msra.mxu0 0.0
        %1269 = vmatprep.subr.mxu0 0.0
        %1270 = vmatpush1.msra.mxu0 0.0
        %1271 = vmatprep.subr.mxu0 0.0
        %1272 = vmatpush1.msra.mxu0 0.0
        %1273 = vmatprep.subr.mxu0 0.0
        %1274 = vmatpush1.msra.mxu0 0.0
        %1275 = vmatprep.subr.mxu0 0.0
        %1276 = vmatpush1.msra.mxu0 0.0
        %1277 = vmatprep.subr.mxu0 0.0
        %1278 = vmatpush1.msra.mxu0 0.0
        %1279 = vmatprep.subr.mxu0 0.0
        %1280 = vmatpush1.msra.mxu0 0.0
        %1281 = vmatprep.subr.mxu0 0.0
        %1282 = vmatpush1.msra.mxu0 0.0
        %1283 = vmatprep.subr.mxu0 0.0
        %1284 = vmatpush1.msra.mxu0 0.0
        %1285 = vmatprep.mubr.f32.mxu0 0.0
        %1286 = vmatmul.mubr.f32.gmra.mrb[0].mxu0 %v799
        %v1287 = vpop.f32.mrb[0].mxu0
        %v1288 = vadd.f32 0.0, %v1287
        %v1289 = vpop.f32.mrb[0].mxu0
        %1290 = vdwg.mxu0
        %v1291 = vld [vmem:[%s610] sm:$0xff]
        %v1292 = vld [vmem:[%s610 + $0x8] sm:$0xff]
        %v1293 = vld [vmem:[%s610 + $0x10] sm:$0xff]
        %v1294 = vld [vmem:[%s610 + $0x18] sm:$0xff]
        %v1295 = vld [vmem:[%s610 + $0x20] sm:$0xff]
        %v1296 = vld [vmem:[%s610 + $0x28] sm:$0xff]
        %v1297 = vld [vmem:[%s610 + $0x30] sm:$0xff]
        %v1298 = vld [vmem:[%s610 + $0x38] sm:$0xff]
        %v1299 = vld [vmem:[%s610 + $0x40] sm:$0xff]
        %v1300 = vld [vmem:[%s610 + $0x48] sm:$0xff]
        %v1301 = vld [vmem:[%s610 + $0x50] sm:$0xff]
        %v1302 = vld [vmem:[%s610 + $0x58] sm:$0xff]
        %v1303 = vld [vmem:[%s610 + $0x60] sm:$0xff]
        %v1304 = vld [vmem:[%s610 + $0x68] sm:$0xff]
        %v1305 = vld [vmem:[%s610 + $0x70] sm:$0xff]
        %v1306 = vld [vmem:[%s610 + $0x78] sm:$0xff]
        %1307 = vmatprep.subr.mxu0 0.0
        %1308 = vmatpush1.msra.mxu0 %v1291
        %1309 = vmatprep.subr.mxu0 0.0
        %1310 = vmatpush1.msra.mxu0 %v1292
        %1311 = vmatprep.subr.mxu0 0.0
        %1312 = vmatpush1.msra.mxu0 %v1293
        %1313 = vmatprep.subr.mxu0 0.0
        %1314 = vmatpush1.msra.mxu0 %v1294
        %1315 = vmatprep.subr.mxu0 0.0
        %1316 = vmatpush1.msra.mxu0 0.0
        %1317 = vmatprep.subr.mxu0 0.0
        %1318 = vmatpush1.msra.mxu0 0.0
        %1319 = vmatprep.subr.mxu0 0.0
        %1320 = vmatpush1.msra.mxu0 0.0
        %1321 = vmatprep.subr.mxu0 0.0
        %1322 = vmatpush1.msra.mxu0 0.0
        %1323 = vmatprep.subr.mxu0 0.0
        %1324 = vmatpush1.msra.mxu0 0.0
        %1325 = vmatprep.subr.mxu0 0.0
        %1326 = vmatpush1.msra.mxu0 0.0
        %1327 = vmatprep.subr.mxu0 0.0
        %1328 = vmatpush1.msra.mxu0 0.0
        %1329 = vmatprep.subr.mxu0 0.0
        %1330 = vmatpush1.msra.mxu0 0.0
        %1331 = vmatprep.subr.mxu0 0.0
        %1332 = vmatpush1.msra.mxu0 0.0
        %1333 = vmatprep.subr.mxu0 0.0
        %1334 = vmatpush1.msra.mxu0 0.0
        %1335 = vmatprep.subr.mxu0 0.0
        %1336 = vmatpush1.msra.mxu0 0.0
        %1337 = vmatprep.subr.mxu0 0.0
        %1338 = vmatpush1.msra.mxu0 0.0
        %1339 = vmatprep.subr.mxu0 0.0
        %1340 = vmatpush1.msra.mxu0 0.0
        %1341 = vmatprep.subr.mxu0 0.0
        %1342 = vmatpush1.msra.mxu0 0.0
        %1343 = vmatprep.subr.mxu0 0.0
        %1344 = vmatpush1.msra.mxu0 0.0
        %1345 = vmatprep.subr.mxu0 0.0
        %1346 = vmatpush1.msra.mxu0 0.0
        %1347 = vmatprep.subr.mxu0 0.0
        %1348 = vmatpush1.msra.mxu0 0.0
        %1349 = vmatprep.subr.mxu0 0.0
        %1350 = vmatpush1.msra.mxu0 0.0
        %1351 = vmatprep.subr.mxu0 0.0
        %1352 = vmatpush1.msra.mxu0 0.0
        %1353 = vmatprep.subr.mxu0 0.0
        %1354 = vmatpush1.msra.mxu0 0.0
        %1355 = vmatprep.subr.mxu0 0.0
        %1356 = vmatpush1.msra.mxu0 0.0
        %1357 = vmatprep.subr.mxu0 0.0
        %1358 = vmatpush1.msra.mxu0 0.0
        %1359 = vmatprep.subr.mxu0 0.0
        %1360 = vmatpush1.msra.mxu0 0.0
        %1361 = vmatprep.subr.mxu0 0.0
        %1362 = vmatpush1.msra.mxu0 0.0
        %1363 = vmatprep.subr.mxu0 0.0
        %1364 = vmatpush1.msra.mxu0 0.0
        %1365 = vmatprep.subr.mxu0 0.0
        %1366 = vmatpush1.msra.mxu0 0.0
        %1367 = vmatprep.subr.mxu0 0.0
        %1368 = vmatpush1.msra.mxu0 0.0
        %1369 = vmatprep.subr.mxu0 0.0
        %1370 = vmatpush1.msra.mxu0 0.0
        %1371 = vmatprep.mubr.f32.mxu0 0.0
        %1372 = vmatmul.mubr.f32.gmra.mrb[0].mxu0 %v726
        %v1373 = vpop.f32.mrb[0].mxu0
        %v1374 = vadd.f32 0.0, %v1373
        %v1375 = vpop.f32.mrb[0].mxu0
        %1376 = vdwg.mxu0
        %1377 = vmatprep.subr.mxu0 0.0
        %1378 = vmatpush1.msra.mxu0 %v1291
        %1379 = vmatprep.subr.mxu0 0.0
        %1380 = vmatpush1.msra.mxu0 %v1292
        %1381 = vmatprep.subr.mxu0 0.0
        %1382 = vmatpush1.msra.mxu0 %v1293
        %1383 = vmatprep.subr.mxu0 0.0
        %1384 = vmatpush1.msra.mxu0 %v1294
        %1385 = vmatprep.subr.mxu0 0.0
        %1386 = vmatpush1.msra.mxu0 0.0
        %1387 = vmatprep.subr.mxu0 0.0
        %1388 = vmatpush1.msra.mxu0 0.0
        %1389 = vmatprep.subr.mxu0 0.0
        %1390 = vmatpush1.msra.mxu0 0.0
        %1391 = vmatprep.subr.mxu0 0.0
        %1392 = vmatpush1.msra.mxu0 0.0
        %1393 = vmatprep.subr.mxu0 0.0
        %1394 = vmatpush1.msra.mxu0 0.0
        %1395 = vmatprep.subr.mxu0 0.0
        %1396 = vmatpush1.msra.mxu0 0.0
        %1397 = vmatprep.subr.mxu0 0.0
        %1398 = vmatpush1.msra.mxu0 0.0
        %1399 = vmatprep.subr.mxu0 0.0
        %1400 = vmatpush1.msra.mxu0 0.0
        %1401 = vmatprep.subr.mxu0 0.0
        %1402 = vmatpush1.msra.mxu0 0.0
        %1403 = vmatprep.subr.mxu0 0.0
        %1404 = vmatpush1.msra.mxu0 0.0
        %1405 = vmatprep.subr.mxu0 0.0
        %1406 = vmatpush1.msra.mxu0 0.0
        %1407 = vmatprep.subr.mxu0 0.0
        %1408 = vmatpush1.msra.mxu0 0.0
        %1409 = vmatprep.subr.mxu0 0.0
        %1410 = vmatpush1.msra.mxu0 0.0
        %1411 = vmatprep.subr.mxu0 0.0
        %1412 = vmatpush1.msra.mxu0 0.0
        %1413 = vmatprep.subr.mxu0 0.0
        %1414 = vmatpush1.msra.mxu0 0.0
        %1415 = vmatprep.subr.mxu0 0.0
        %1416 = vmatpush1.msra.mxu0 0.0
        %1417 = vmatprep.subr.mxu0 0.0
        %1418 = vmatpush1.msra.mxu0 0.0
        %1419 = vmatprep.subr.mxu0 0.0
        %1420 = vmatpush1.msra.mxu0 0.0
        %1421 = vmatprep.subr.mxu0 0.0
        %1422 = vmatpush1.msra.mxu0 0.0
        %1423 = vmatprep.subr.mxu0 0.0
        %1424 = vmatpush1.msra.mxu0 0.0
        %1425 = vmatprep.subr.mxu0 0.0
        %1426 = vmatpush1.msra.mxu0 0.0
        %1427 = vmatprep.subr.mxu0 0.0
        %1428 = vmatpush1.msra.mxu0 0.0
        %1429 = vmatprep.subr.mxu0 0.0
        %1430 = vmatpush1.msra.mxu0 0.0
        %1431 = vmatprep.subr.mxu0 0.0
        %1432 = vmatpush1.msra.mxu0 0.0
        %1433 = vmatprep.subr.mxu0 0.0
        %1434 = vmatpush1.msra.mxu0 0.0
        %1435 = vmatprep.subr.mxu0 0.0
        %1436 = vmatpush1.msra.mxu0 0.0
        %1437 = vmatprep.subr.mxu0 0.0
        %1438 = vmatpush1.msra.mxu0 0.0
        %1439 = vmatprep.subr.mxu0 0.0
        %1440 = vmatpush1.msra.mxu0 0.0
        %1441 = vmatprep.mubr.f32.mxu0 0.0
        %1442 = vmatmul.mubr.f32.gmra.mrb[0].mxu0 %v799
        %v1443 = vpop.f32.mrb[0].mxu0
        %v1444 = vadd.f32 0.0, %v1443
        %v1445 = vpop.f32.mrb[0].mxu0
        %1446 = vdwg.mxu0
        %1447 = vmatprep.subr.mxu0 0.0
        %1448 = vmatpush1.msra.mxu0 %v1295
        %1449 = vmatprep.subr.mxu0 0.0
        %1450 = vmatpush1.msra.mxu0 %v1296
        %1451 = vmatprep.subr.mxu0 0.0
        %1452 = vmatpush1.msra.mxu0 %v1297
        %1453 = vmatprep.subr.mxu0 0.0
        %1454 = vmatpush1.msra.mxu0 %v1298
        %1455 = vmatprep.subr.mxu0 0.0
        %1456 = vmatpush1.msra.mxu0 0.0
        %1457 = vmatprep.subr.mxu0 0.0
        %1458 = vmatpush1.msra.mxu0 0.0
        %1459 = vmatprep.subr.mxu0 0.0
        %1460 = vmatpush1.msra.mxu0 0.0
        %1461 = vmatprep.subr.mxu0 0.0
        %1462 = vmatpush1.msra.mxu0 0.0
        %1463 = vmatprep.subr.mxu0 0.0
        %1464 = vmatpush1.msra.mxu0 0.0
        %1465 = vmatprep.subr.mxu0 0.0
        %1466 = vmatpush1.msra.mxu0 0.0
        %1467 = vmatprep.subr.mxu0 0.0
        %1468 = vmatpush1.msra.mxu0 0.0
        %1469 = vmatprep.subr.mxu0 0.0
        %1470 = vmatpush1.msra.mxu0 0.0
        %1471 = vmatprep.subr.mxu0 0.0
        %1472 = vmatpush1.msra.mxu0 0.0
        %1473 = vmatprep.subr.mxu0 0.0
        %1474 = vmatpush1.msra.mxu0 0.0
        %1475 = vmatprep.subr.mxu0 0.0
        %1476 = vmatpush1.msra.mxu0 0.0
        %1477 = vmatprep.subr.mxu0 0.0
        %1478 = vmatpush1.msra.mxu0 0.0
        %1479 = vmatprep.subr.mxu0 0.0
        %1480 = vmatpush1.msra.mxu0 0.0
        %1481 = vmatprep.subr.mxu0 0.0
        %1482 = vmatpush1.msra.mxu0 0.0
        %1483 = vmatprep.subr.mxu0 0.0
        %1484 = vmatpush1.msra.mxu0 0.0
        %1485 = vmatprep.subr.mxu0 0.0
        %1486 = vmatpush1.msra.mxu0 0.0
        %1487 = vmatprep.subr.mxu0 0.0
        %1488 = vmatpush1.msra.mxu0 0.0
        %1489 = vmatprep.subr.mxu0 0.0
        %1490 = vmatpush1.msra.mxu0 0.0
        %1491 = vmatprep.subr.mxu0 0.0
        %1492 = vmatpush1.msra.mxu0 0.0
        %1493 = vmatprep.subr.mxu0 0.0
        %1494 = vmatpush1.msra.mxu0 0.0
        %1495 = vmatprep.subr.mxu0 0.0
        %1496 = vmatpush1.msra.mxu0 0.0
        %1497 = vmatprep.subr.mxu0 0.0
        %1498 = vmatpush1.msra.mxu0 0.0
        %1499 = vmatprep.subr.mxu0 0.0
        %1500 = vmatpush1.msra.mxu0 0.0
        %1501 = vmatprep.subr.mxu0 0.0
        %1502 = vmatpush1.msra.mxu0 0.0
        %1503 = vmatprep.subr.mxu0 0.0
        %1504 = vmatpush1.msra.mxu0 0.0
        %1505 = vmatprep.subr.mxu0 0.0
        %1506 = vmatpush1.msra.mxu0 0.0
        %1507 = vmatprep.subr.mxu0 0.0
        %1508 = vmatpush1.msra.mxu0 0.0
        %1509 = vmatprep.subr.mxu0 0.0
        %1510 = vmatpush1.msra.mxu0 0.0
        %1511 = vmatprep.mubr.f32.mxu0 0.0
        %1512 = vmatmul.mubr.f32.gmra.mrb[0].mxu0 %v726
        %v1513 = vpop.f32.mrb[0].mxu0
        %v1514 = vadd.f32 0.0, %v1513
        %v1515 = vpop.f32.mrb[0].mxu0
        %1516 = vdwg.mxu0
        %1517 = vmatprep.subr.mxu0 0.0
        %1518 = vmatpush1.msra.mxu0 %v1295
        %1519 = vmatprep.subr.mxu0 0.0
        %1520 = vmatpush1.msra.mxu0 %v1296
        %1521 = vmatprep.subr.mxu0 0.0
        %1522 = vmatpush1.msra.mxu0 %v1297
        %1523 = vmatprep.subr.mxu0 0.0
        %1524 = vmatpush1.msra.mxu0 %v1298
        %1525 = vmatprep.subr.mxu0 0.0
        %1526 = vmatpush1.msra.mxu0 0.0
        %1527 = vmatprep.subr.mxu0 0.0
        %1528 = vmatpush1.msra.mxu0 0.0
        %1529 = vmatprep.subr.mxu0 0.0
        %1530 = vmatpush1.msra.mxu0 0.0
        %1531 = vmatprep.subr.mxu0 0.0
        %1532 = vmatpush1.msra.mxu0 0.0
        %1533 = vmatprep.subr.mxu0 0.0
        %1534 = vmatpush1.msra.mxu0 0.0
        %1535 = vmatprep.subr.mxu0 0.0
        %1536 = vmatpush1.msra.mxu0 0.0
        %1537 = vmatprep.subr.mxu0 0.0
        %1538 = vmatpush1.msra.mxu0 0.0
        %1539 = vmatprep.subr.mxu0 0.0
        %1540 = vmatpush1.msra.mxu0 0.0
        %1541 = vmatprep.subr.mxu0 0.0
        %1542 = vmatpush1.msra.mxu0 0.0
        %1543 = vmatprep.subr.mxu0 0.0
        %1544 = vmatpush1.msra.mxu0 0.0
        %1545 = vmatprep.subr.mxu0 0.0
        %1546 = vmatpush1.msra.mxu0 0.0
        %1547 = vmatprep.subr.mxu0 0.0
        %1548 = vmatpush1.msra.mxu0 0.0
        %1549 = vmatprep.subr.mxu0 0.0
        %1550 = vmatpush1.msra.mxu0 0.0
        %1551 = vmatprep.subr.mxu0 0.0
        %1552 = vmatpush1.msra.mxu0 0.0
        %1553 = vmatprep.subr.mxu0 0.0
        %1554 = vmatpush1.msra.mxu0 0.0
        %1555 = vmatprep.subr.mxu0 0.0
        %1556 = vmatpush1.msra.mxu0 0.0
        %1557 = vmatprep.subr.mxu0 0.0
        %1558 = vmatpush1.msra.mxu0 0.0
        %1559 = vmatprep.subr.mxu0 0.0
        %1560 = vmatpush1.msra.mxu0 0.0
        %1561 = vmatprep.subr.mxu0 0.0
        %1562 = vmatpush1.msra.mxu0 0.0
        %1563 = vmatprep.subr.mxu0 0.0
        %1564 = vmatpush1.msra.mxu0 0.0
        %1565 = vmatprep.subr.mxu0 0.0
        %1566 = vmatpush1.msra.mxu0 0.0
        %1567 = vmatprep.subr.mxu0 0.0
        %1568 = vmatpush1.msra.mxu0 0.0
        %1569 = vmatprep.subr.mxu0 0.0
        %1570 = vmatpush1.msra.mxu0 0.0
        %1571 = vmatprep.subr.mxu0 0.0
        %1572 = vmatpush1.msra.mxu0 0.0
        %1573 = vmatprep.subr.mxu0 0.0
        %1574 = vmatpush1.msra.mxu0 0.0
        %1575 = vmatprep.subr.mxu0 0.0
        %1576 = vmatpush1.msra.mxu0 0.0
        %1577 = vmatprep.subr.mxu0 0.0
        %1578 = vmatpush1.msra.mxu0 0.0
        %1579 = vmatprep.subr.mxu0 0.0
        %1580 = vmatpush1.msra.mxu0 0.0
        %1581 = vmatprep.mubr.f32.mxu0 0.0
        %1582 = vmatmul.mubr.f32.gmra.mrb[0].mxu0 %v799
        %v1583 = vpop.f32.mrb[0].mxu0
        %v1584 = vadd.f32 0.0, %v1583
        %v1585 = vpop.f32.mrb[0].mxu0
        %1586 = vdwg.mxu0
        %1587 = vmatprep.subr.mxu0 0.0
        %1588 = vmatpush1.msra.mxu0 %v1299
        %1589 = vmatprep.subr.mxu0 0.0
        %1590 = vmatpush1.msra.mxu0 %v1300
        %1591 = vmatprep.subr.mxu0 0.0
        %1592 = vmatpush1.msra.mxu0 %v1301
        %1593 = vmatprep.subr.mxu0 0.0
        %1594 = vmatpush1.msra.mxu0 %v1302
        %1595 = vmatprep.subr.mxu0 0.0
        %1596 = vmatpush1.msra.mxu0 0.0
        %1597 = vmatprep.subr.mxu0 0.0
        %1598 = vmatpush1.msra.mxu0 0.0
        %1599 = vmatprep.subr.mxu0 0.0
        %1600 = vmatpush1.msra.mxu0 0.0
        %1601 = vmatprep.subr.mxu0 0.0
        %1602 = vmatpush1.msra.mxu0 0.0
        %1603 = vmatprep.subr.mxu0 0.0
        %1604 = vmatpush1.msra.mxu0 0.0
        %1605 = vmatprep.subr.mxu0 0.0
        %1606 = vmatpush1.msra.mxu0 0.0
        %1607 = vmatprep.subr.mxu0 0.0
        %1608 = vmatpush1.msra.mxu0 0.0
        %1609 = vmatprep.subr.mxu0 0.0
        %1610 = vmatpush1.msra.mxu0 0.0
        %1611 = vmatprep.subr.mxu0 0.0
        %1612 = vmatpush1.msra.mxu0 0.0
        %1613 = vmatprep.subr.mxu0 0.0
        %1614 = vmatpush1.msra.mxu0 0.0
        %1615 = vmatprep.subr.mxu0 0.0
        %1616 = vmatpush1.msra.mxu0 0.0
        %1617 = vmatprep.subr.mxu0 0.0
        %1618 = vmatpush1.msra.mxu0 0.0
        %1619 = vmatprep.subr.mxu0 0.0
        %1620 = vmatpush1.msra.mxu0 0.0
        %1621 = vmatprep.subr.mxu0 0.0
        %1622 = vmatpush1.msra.mxu0 0.0
        %1623 = vmatprep.subr.mxu0 0.0
        %1624 = vmatpush1.msra.mxu0 0.0
        %1625 = vmatprep.subr.mxu0 0.0
        %1626 = vmatpush1.msra.mxu0 0.0
        %1627 = vmatprep.subr.mxu0 0.0
        %1628 = vmatpush1.msra.mxu0 0.0
        %1629 = vmatprep.subr.mxu0 0.0
        %1630 = vmatpush1.msra.mxu0 0.0
        %1631 = vmatprep.subr.mxu0 0.0
        %1632 = vmatpush1.msra.mxu0 0.0
        %1633 = vmatprep.subr.mxu0 0.0
        %1634 = vmatpush1.msra.mxu0 0.0
        %1635 = vmatprep.subr.mxu0 0.0
        %1636 = vmatpush1.msra.mxu0 0.0
        %1637 = vmatprep.subr.mxu0 0.0
        %1638 = vmatpush1.msra.mxu0 0.0
        %1639 = vmatprep.subr.mxu0 0.0
        %1640 = vmatpush1.msra.mxu0 0.0
        %1641 = vmatprep.subr.mxu0 0.0
        %1642 = vmatpush1.msra.mxu0 0.0
        %1643 = vmatprep.subr.mxu0 0.0
        %1644 = vmatpush1.msra.mxu0 0.0
        %1645 = vmatprep.subr.mxu0 0.0
        %1646 = vmatpush1.msra.mxu0 0.0
        %1647 = vmatprep.subr.mxu0 0.0
        %1648 = vmatpush1.msra.mxu0 0.0
        %1649 = vmatprep.subr.mxu0 0.0
        %1650 = vmatpush1.msra.mxu0 0.0
        %1651 = vmatprep.mubr.f32.mxu0 0.0
        %1652 = vmatmul.mubr.f32.gmra.mrb[0].mxu0 %v726
        %v1653 = vpop.f32.mrb[0].mxu0
        %v1654 = vadd.f32 0.0, %v1653
        %v1655 = vpop.f32.mrb[0].mxu0
        %1656 = vdwg.mxu0
        %1657 = vmatprep.subr.mxu0 0.0
        %1658 = vmatpush1.msra.mxu0 %v1299
        %1659 = vmatprep.subr.mxu0 0.0
        %1660 = vmatpush1.msra.mxu0 %v1300
        %1661 = vmatprep.subr.mxu0 0.0
        %1662 = vmatpush1.msra.mxu0 %v1301
        %1663 = vmatprep.subr.mxu0 0.0
        %1664 = vmatpush1.msra.mxu0 %v1302
        %1665 = vmatprep.subr.mxu0 0.0
        %1666 = vmatpush1.msra.mxu0 0.0
        %1667 = vmatprep.subr.mxu0 0.0
        %1668 = vmatpush1.msra.mxu0 0.0
        %1669 = vmatprep.subr.mxu0 0.0
        %1670 = vmatpush1.msra.mxu0 0.0
        %1671 = vmatprep.subr.mxu0 0.0
        %1672 = vmatpush1.msra.mxu0 0.0
        %1673 = vmatprep.subr.mxu0 0.0
        %1674 = vmatpush1.msra.mxu0 0.0
        %1675 = vmatprep.subr.mxu0 0.0
        %1676 = vmatpush1.msra.mxu0 0.0
        %1677 = vmatprep.subr.mxu0 0.0
        %1678 = vmatpush1.msra.mxu0 0.0
        %1679 = vmatprep.subr.mxu0 0.0
        %1680 = vmatpush1.msra.mxu0 0.0
        %1681 = vmatprep.subr.mxu0 0.0
        %1682 = vmatpush1.msra.mxu0 0.0
        %1683 = vmatprep.subr.mxu0 0.0
        %1684 = vmatpush1.msra.mxu0 0.0
        %1685 = vmatprep.subr.mxu0 0.0
        %1686 = vmatpush1.msra.mxu0 0.0
        %1687 = vmatprep.subr.mxu0 0.0
        %1688 = vmatpush1.msra.mxu0 0.0
        %1689 = vmatprep.subr.mxu0 0.0
        %1690 = vmatpush1.msra.mxu0 0.0
        %1691 = vmatprep.subr.mxu0 0.0
        %1692 = vmatpush1.msra.mxu0 0.0
        %1693 = vmatprep.subr.mxu0 0.0
        %1694 = vmatpush1.msra.mxu0 0.0
        %1695 = vmatprep.subr.mxu0 0.0
        %1696 = vmatpush1.msra.mxu0 0.0
        %1697 = vmatprep.subr.mxu0 0.0
        %1698 = vmatpush1.msra.mxu0 0.0
        %1699 = vmatprep.subr.mxu0 0.0
        %1700 = vmatpush1.msra.mxu0 0.0
        %1701 = vmatprep.subr.mxu0 0.0
        %1702 = vmatpush1.msra.mxu0 0.0
        %1703 = vmatprep.subr.mxu0 0.0
        %1704 = vmatpush1.msra.mxu0 0.0
        %1705 = vmatprep.subr.mxu0 0.0
        %1706 = vmatpush1.msra.mxu0 0.0
        %1707 = vmatprep.subr.mxu0 0.0
        %1708 = vmatpush1.msra.mxu0 0.0
        %1709 = vmatprep.subr.mxu0 0.0
        %1710 = vmatpush1.msra.mxu0 0.0
        %1711 = vmatprep.subr.mxu0 0.0
        %1712 = vmatpush1.msra.mxu0 0.0
        %1713 = vmatprep.subr.mxu0 0.0
        %1714 = vmatpush1.msra.mxu0 0.0
        %1715 = vmatprep.subr.mxu0 0.0
        %1716 = vmatpush1.msra.mxu0 0.0
        %1717 = vmatprep.subr.mxu0 0.0
        %1718 = vmatpush1.msra.mxu0 0.0
        %1719 = vmatprep.subr.mxu0 0.0
        %1720 = vmatpush1.msra.mxu0 0.0
        %1721 = vmatprep.mubr.f32.mxu0 0.0
        %1722 = vmatmul.mubr.f32.gmra.mrb[0].mxu0 %v799
        %v1723 = vpop.f32.mrb[0].mxu0
        %v1724 = vadd.f32 0.0, %v1723
        %v1725 = vpop.f32.mrb[0].mxu0
        %1726 = vdwg.mxu0
        %1727 = vmatprep.subr.mxu0 0.0
        %1728 = vmatpush1.msra.mxu0 %v1303
        %1729 = vmatprep.subr.mxu0 0.0
        %1730 = vmatpush1.msra.mxu0 %v1304
        %1731 = vmatprep.subr.mxu0 0.0
        %1732 = vmatpush1.msra.mxu0 %v1305
        %1733 = vmatprep.subr.mxu0 0.0
        %1734 = vmatpush1.msra.mxu0 %v1306
        %1735 = vmatprep.subr.mxu0 0.0
        %1736 = vmatpush1.msra.mxu0 0.0
        %1737 = vmatprep.subr.mxu0 0.0
        %1738 = vmatpush1.msra.mxu0 0.0
        %1739 = vmatprep.subr.mxu0 0.0
        %1740 = vmatpush1.msra.mxu0 0.0
        %1741 = vmatprep.subr.mxu0 0.0
        %1742 = vmatpush1.msra.mxu0 0.0
        %1743 = vmatprep.subr.mxu0 0.0
        %1744 = vmatpush1.msra.mxu0 0.0
        %1745 = vmatprep.subr.mxu0 0.0
        %1746 = vmatpush1.msra.mxu0 0.0
        %1747 = vmatprep.subr.mxu0 0.0
        %1748 = vmatpush1.msra.mxu0 0.0
        %1749 = vmatprep.subr.mxu0 0.0
        %1750 = vmatpush1.msra.mxu0 0.0
        %1751 = vmatprep.subr.mxu0 0.0
        %1752 = vmatpush1.msra.mxu0 0.0
        %1753 = vmatprep.subr.mxu0 0.0
        %1754 = vmatpush1.msra.mxu0 0.0
        %1755 = vmatprep.subr.mxu0 0.0
        %1756 = vmatpush1.msra.mxu0 0.0
        %1757 = vmatprep.subr.mxu0 0.0
        %1758 = vmatpush1.msra.mxu0 0.0
        %1759 = vmatprep.subr.mxu0 0.0
        %1760 = vmatpush1.msra.mxu0 0.0
        %1761 = vmatprep.subr.mxu0 0.0
        %1762 = vmatpush1.msra.mxu0 0.0
        %1763 = vmatprep.subr.mxu0 0.0
        %1764 = vmatpush1.msra.mxu0 0.0
        %1765 = vmatprep.subr.mxu0 0.0
        %1766 = vmatpush1.msra.mxu0 0.0
        %1767 = vmatprep.subr.mxu0 0.0
        %1768 = vmatpush1.msra.mxu0 0.0
        %1769 = vmatprep.subr.mxu0 0.0
        %1770 = vmatpush1.msra.mxu0 0.0
        %1771 = vmatprep.subr.mxu0 0.0
        %1772 = vmatpush1.msra.mxu0 0.0
        %1773 = vmatprep.subr.mxu0 0.0
        %1774 = vmatpush1.msra.mxu0 0.0
        %1775 = vmatprep.subr.mxu0 0.0
        %1776 = vmatpush1.msra.mxu0 0.0
        %1777 = vmatprep.subr.mxu0 0.0
        %1778 = vmatpush1.msra.mxu0 0.0
        %1779 = vmatprep.subr.mxu0 0.0
        %1780 = vmatpush1.msra.mxu0 0.0
        %1781 = vmatprep.subr.mxu0 0.0
        %1782 = vmatpush1.msra.mxu0 0.0
        %1783 = vmatprep.subr.mxu0 0.0
        %1784 = vmatpush1.msra.mxu0 0.0
        %1785 = vmatprep.subr.mxu0 0.0
        %1786 = vmatpush1.msra.mxu0 0.0
        %1787 = vmatprep.subr.mxu0 0.0
        %1788 = vmatpush1.msra.mxu0 0.0
        %1789 = vmatprep.subr.mxu0 0.0
        %1790 = vmatpush1.msra.mxu0 0.0
        %1791 = vmatprep.mubr.f32.mxu0 0.0
        %1792 = vmatmul.mubr.f32.gmra.mrb[0].mxu0 %v726
        %v1793 = vpop.f32.mrb[0].mxu0
        %v1794 = vadd.f32 0.0, %v1793
        %v1795 = vpop.f32.mrb[0].mxu0
        %1796 = vdwg.mxu0
        %1797 = vmatprep.subr.mxu0 0.0
        %1798 = vmatpush1.msra.mxu0 %v1303
        %1799 = vmatprep.subr.mxu0 0.0
        %1800 = vmatpush1.msra.mxu0 %v1304
        %1801 = vmatprep.subr.mxu0 0.0
        %1802 = vmatpush1.msra.mxu0 %v1305
        %1803 = vmatprep.subr.mxu0 0.0
        %1804 = vmatpush1.msra.mxu0 %v1306
        %1805 = vmatprep.subr.mxu0 0.0
        %1806 = vmatpush1.msra.mxu0 0.0
        %1807 = vmatprep.subr.mxu0 0.0
        %1808 = vmatpush1.msra.mxu0 0.0
        %1809 = vmatprep.subr.mxu0 0.0
        %1810 = vmatpush1.msra.mxu0 0.0
        %1811 = vmatprep.subr.mxu0 0.0
        %1812 = vmatpush1.msra.mxu0 0.0
        %1813 = vmatprep.subr.mxu0 0.0
        %1814 = vmatpush1.msra.mxu0 0.0
        %1815 = vmatprep.subr.mxu0 0.0
        %1816 = vmatpush1.msra.mxu0 0.0
        %1817 = vmatprep.subr.mxu0 0.0
        %1818 = vmatpush1.msra.mxu0 0.0
        %1819 = vmatprep.subr.mxu0 0.0
        %1820 = vmatpush1.msra.mxu0 0.0
        %1821 = vmatprep.subr.mxu0 0.0
        %1822 = vmatpush1.msra.mxu0 0.0
        %1823 = vmatprep.subr.mxu0 0.0
        %1824 = vmatpush1.msra.mxu0 0.0
        %1825 = vmatprep.subr.mxu0 0.0
        %1826 = vmatpush1.msra.mxu0 0.0
        %1827 = vmatprep.subr.mxu0 0.0
        %1828 = vmatpush1.msra.mxu0 0.0
        %1829 = vmatprep.subr.mxu0 0.0
        %1830 = vmatpush1.msra.mxu0 0.0
        %1831 = vmatprep.subr.mxu0 0.0
        %1832 = vmatpush1.msra.mxu0 0.0
        %1833 = vmatprep.subr.mxu0 0.0
        %1834 = vmatpush1.msra.mxu0 0.0
        %1835 = vmatprep.subr.mxu0 0.0
        %1836 = vmatpush1.msra.mxu0 0.0
        %1837 = vmatprep.subr.mxu0 0.0
        %1838 = vmatpush1.msra.mxu0 0.0
        %1839 = vmatprep.subr.mxu0 0.0
        %1840 = vmatpush1.msra.mxu0 0.0
        %1841 = vmatprep.subr.mxu0 0.0
        %1842 = vmatpush1.msra.mxu0 0.0
        %1843 = vmatprep.subr.mxu0 0.0
        %1844 = vmatpush1.msra.mxu0 0.0
        %1845 = vmatprep.subr.mxu0 0.0
        %1846 = vmatpush1.msra.mxu0 0.0
        %1847 = vmatprep.subr.mxu0 0.0
        %1848 = vmatpush1.msra.mxu0 0.0
        %1849 = vmatprep.subr.mxu0 0.0
        %1850 = vmatpush1.msra.mxu0 0.0
        %1851 = vmatprep.subr.mxu0 0.0
        %1852 = vmatpush1.msra.mxu0 0.0
        %1853 = vmatprep.subr.mxu0 0.0
        %1854 = vmatpush1.msra.mxu0 0.0
        %1855 = vmatprep.subr.mxu0 0.0
        %1856 = vmatpush1.msra.mxu0 0.0
        %1857 = vmatprep.subr.mxu0 0.0
        %1858 = vmatpush1.msra.mxu0 0.0
        %1859 = vmatprep.subr.mxu0 0.0
        %1860 = vmatpush1.msra.mxu0 0.0
        %1861 = vmatprep.mubr.f32.mxu0 0.0
        %1862 = vmatmul.mubr.f32.gmra.mrb[0].mxu0 %v799
        %v1863 = vpop.f32.mrb[0].mxu0
        %v1864 = vadd.f32 0.0, %v1863
        %v1865 = vpop.f32.mrb[0].mxu0
        %1866 = vdwg.mxu0
        %v1867 = vld [vmem:[%s615] sm:$0xff]
        %v1868 = vld [vmem:[%s615 + $0x8] sm:$0xff]
        %v1869 = vld [vmem:[%s615 + $0x10] sm:$0xff]
        %v1870 = vld [vmem:[%s615 + $0x18] sm:$0xff]
        %v1871 = vld [vmem:[%s615 + $0x20] sm:$0xff]
        %v1872 = vld [vmem:[%s615 + $0x28] sm:$0xff]
        %v1873 = vld [vmem:[%s615 + $0x30] sm:$0xff]
        %v1874 = vld [vmem:[%s615 + $0x38] sm:$0xff]
        %v1875 = vld [vmem:[%s615 + $0x40] sm:$0xff]
        %v1876 = vld [vmem:[%s615 + $0x48] sm:$0xff]
        %v1877 = vld [vmem:[%s615 + $0x50] sm:$0xff]
        %v1878 = vld [vmem:[%s615 + $0x58] sm:$0xff]
        %v1879 = vld [vmem:[%s615 + $0x60] sm:$0xff]
        %v1880 = vld [vmem:[%s615 + $0x68] sm:$0xff]
        %v1881 = vld [vmem:[%s615 + $0x70] sm:$0xff]
        %v1882 = vld [vmem:[%s615 + $0x78] sm:$0xff]
        %1883 = vmatprep.subr.mxu0 0.0
        %1884 = vmatpush1.msra.mxu0 %v1867
        %1885 = vmatprep.subr.mxu0 0.0
        %1886 = vmatpush1.msra.mxu0 %v1868
        %1887 = vmatprep.subr.mxu0 0.0
        %1888 = vmatpush1.msra.mxu0 %v1869
        %1889 = vmatprep.subr.mxu0 0.0
        %1890 = vmatpush1.msra.mxu0 %v1870
        %1891 = vmatprep.subr.mxu0 0.0
        %1892 = vmatpush1.msra.mxu0 0.0
        %1893 = vmatprep.subr.mxu0 0.0
        %1894 = vmatpush1.msra.mxu0 0.0
        %1895 = vmatprep.subr.mxu0 0.0
        %1896 = vmatpush1.msra.mxu0 0.0
        %1897 = vmatprep.subr.mxu0 0.0
        %1898 = vmatpush1.msra.mxu0 0.0
        %1899 = vmatprep.subr.mxu0 0.0
        %1900 = vmatpush1.msra.mxu0 0.0
        %1901 = vmatprep.subr.mxu0 0.0
        %1902 = vmatpush1.msra.mxu0 0.0
        %1903 = vmatprep.subr.mxu0 0.0
        %1904 = vmatpush1.msra.mxu0 0.0
        %1905 = vmatprep.subr.mxu0 0.0
        %1906 = vmatpush1.msra.mxu0 0.0
        %1907 = vmatprep.subr.mxu0 0.0
        %1908 = vmatpush1.msra.mxu0 0.0
        %1909 = vmatprep.subr.mxu0 0.0
        %1910 = vmatpush1.msra.mxu0 0.0
        %1911 = vmatprep.subr.mxu0 0.0
        %1912 = vmatpush1.msra.mxu0 0.0
        %1913 = vmatprep.subr.mxu0 0.0
        %1914 = vmatpush1.msra.mxu0 0.0
        %1915 = vmatprep.subr.mxu0 0.0
        %1916 = vmatpush1.msra.mxu0 0.0
        %1917 = vmatprep.subr.mxu0 0.0
        %1918 = vmatpush1.msra.mxu0 0.0
        %1919 = vmatprep.subr.mxu0 0.0
        %1920 = vmatpush1.msra.mxu0 0.0
        %1921 = vmatprep.subr.mxu0 0.0
        %1922 = vmatpush1.msra.mxu0 0.0
        %1923 = vmatprep.subr.mxu0 0.0
        %1924 = vmatpush1.msra.mxu0 0.0
        %1925 = vmatprep.subr.mxu0 0.0
        %1926 = vmatpush1.msra.mxu0 0.0
        %1927 = vmatprep.subr.mxu0 0.0
        %1928 = vmatpush1.msra.mxu0 0.0
        %1929 = vmatprep.subr.mxu0 0.0
        %1930 = vmatpush1.msra.mxu0 0.0
        %1931 = vmatprep.subr.mxu0 0.0
        %1932 = vmatpush1.msra.mxu0 0.0
        %1933 = vmatprep.subr.mxu0 0.0
        %1934 = vmatpush1.msra.mxu0 0.0
        %1935 = vmatprep.subr.mxu0 0.0
        %1936 = vmatpush1.msra.mxu0 0.0
        %1937 = vmatprep.subr.mxu0 0.0
        %1938 = vmatpush1.msra.mxu0 0.0
        %1939 = vmatprep.subr.mxu0 0.0
        %1940 = vmatpush1.msra.mxu0 0.0
        %1941 = vmatprep.subr.mxu0 0.0
        %1942 = vmatpush1.msra.mxu0 0.0
        %1943 = vmatprep.subr.mxu0 0.0
        %1944 = vmatpush1.msra.mxu0 0.0
        %1945 = vmatprep.subr.mxu0 0.0
        %1946 = vmatpush1.msra.mxu0 0.0
        %1947 = vmatprep.mubr.f32.mxu0 0.0
        %1948 = vmatmul.mubr.f32.gmra.mrb[0].mxu0 %v726
        %v1949 = vpop.f32.mrb[0].mxu0
        %v1950 = vadd.f32 0.0, %v1949
        %v1951 = vpop.f32.mrb[0].mxu0
        %1952 = vdwg.mxu0
        %1953 = vmatprep.subr.mxu0 0.0
        %1954 = vmatpush1.msra.mxu0 %v1867
        %1955 = vmatprep.subr.mxu0 0.0
        %1956 = vmatpush1.msra.mxu0 %v1868
        %1957 = vmatprep.subr.mxu0 0.0
        %1958 = vmatpush1.msra.mxu0 %v1869
        %1959 = vmatprep.subr.mxu0 0.0
        %1960 = vmatpush1.msra.mxu0 %v1870
        %1961 = vmatprep.subr.mxu0 0.0
        %1962 = vmatpush1.msra.mxu0 0.0
        %1963 = vmatprep.subr.mxu0 0.0
        %1964 = vmatpush1.msra.mxu0 0.0
        %1965 = vmatprep.subr.mxu0 0.0
        %1966 = vmatpush1.msra.mxu0 0.0
        %1967 = vmatprep.subr.mxu0 0.0
        %1968 = vmatpush1.msra.mxu0 0.0
        %1969 = vmatprep.subr.mxu0 0.0
        %1970 = vmatpush1.msra.mxu0 0.0
        %1971 = vmatprep.subr.mxu0 0.0
        %1972 = vmatpush1.msra.mxu0 0.0
        %1973 = vmatprep.subr.mxu0 0.0
        %1974 = vmatpush1.msra.mxu0 0.0
        %1975 = vmatprep.subr.mxu0 0.0
        %1976 = vmatpush1.msra.mxu0 0.0
        %1977 = vmatprep.subr.mxu0 0.0
        %1978 = vmatpush1.msra.mxu0 0.0
        %1979 = vmatprep.subr.mxu0 0.0
        %1980 = vmatpush1.msra.mxu0 0.0
        %1981 = vmatprep.subr.mxu0 0.0
        %1982 = vmatpush1.msra.mxu0 0.0
        %1983 = vmatprep.subr.mxu0 0.0
        %1984 = vmatpush1.msra.mxu0 0.0
        %1985 = vmatprep.subr.mxu0 0.0
        %1986 = vmatpush1.msra.mxu0 0.0
        %1987 = vmatprep.subr.mxu0 0.0
        %1988 = vmatpush1.msra.mxu0 0.0
        %1989 = vmatprep.subr.mxu0 0.0
        %1990 = vmatpush1.msra.mxu0 0.0
        %1991 = vmatprep.subr.mxu0 0.0
        %1992 = vmatpush1.msra.mxu0 0.0
        %1993 = vmatprep.subr.mxu0 0.0
        %1994 = vmatpush1.msra.mxu0 0.0
        %1995 = vmatprep.subr.mxu0 0.0
        %1996 = vmatpush1.msra.mxu0 0.0
        %1997 = vmatprep.subr.mxu0 0.0
        %1998 = vmatpush1.msra.mxu0 0.0
        %1999 = vmatprep.subr.mxu0 0.0
        %2000 = vmatpush1.msra.mxu0 0.0
        %2001 = vmatprep.subr.mxu0 0.0
        %2002 = vmatpush1.msra.mxu0 0.0
        %2003 = vmatprep.subr.mxu0 0.0
        %2004 = vmatpush1.msra.mxu0 0.0
        %2005 = vmatprep.subr.mxu0 0.0
        %2006 = vmatpush1.msra.mxu0 0.0
        %2007 = vmatprep.subr.mxu0 0.0
        %2008 = vmatpush1.msra.mxu0 0.0
        %2009 = vmatprep.subr.mxu0 0.0
        %2010 = vmatpush1.msra.mxu0 0.0
        %2011 = vmatprep.subr.mxu0 0.0
        %2012 = vmatpush1.msra.mxu0 0.0
        %2013 = vmatprep.subr.mxu0 0.0
        %2014 = vmatpush1.msra.mxu0 0.0
        %2015 = vmatprep.subr.mxu0 0.0
        %2016 = vmatpush1.msra.mxu0 0.0
        %2017 = vmatprep.mubr.f32.mxu0 0.0
        %2018 = vmatmul.mubr.f32.gmra.mrb[0].mxu0 %v799
        %v2019 = vpop.f32.mrb[0].mxu0
        %v2020 = vadd.f32 0.0, %v2019
        %v2021 = vpop.f32.mrb[0].mxu0
        %2022 = vdwg.mxu0
        %2023 = vmatprep.subr.mxu0 0.0
        %2024 = vmatpush1.msra.mxu0 %v1871
        %2025 = vmatprep.subr.mxu0 0.0
        %2026 = vmatpush1.msra.mxu0 %v1872
        %2027 = vmatprep.subr.mxu0 0.0
        %2028 = vmatpush1.msra.mxu0 %v1873
        %2029 = vmatprep.subr.mxu0 0.0
        %2030 = vmatpush1.msra.mxu0 %v1874
        %2031 = vmatprep.subr.mxu0 0.0
        %2032 = vmatpush1.msra.mxu0 0.0
        %2033 = vmatprep.subr.mxu0 0.0
        %2034 = vmatpush1.msra.mxu0 0.0
        %2035 = vmatprep.subr.mxu0 0.0
        %2036 = vmatpush1.msra.mxu0 0.0
        %2037 = vmatprep.subr.mxu0 0.0
        %2038 = vmatpush1.msra.mxu0 0.0
        %2039 = vmatprep.subr.mxu0 0.0
        %2040 = vmatpush1.msra.mxu0 0.0
        %2041 = vmatprep.subr.mxu0 0.0
        %2042 = vmatpush1.msra.mxu0 0.0
        %2043 = vmatprep.subr.mxu0 0.0
        %2044 = vmatpush1.msra.mxu0 0.0
        %2045 = vmatprep.subr.mxu0 0.0
        %2046 = vmatpush1.msra.mxu0 0.0
        %2047 = vmatprep.subr.mxu0 0.0
        %2048 = vmatpush1.msra.mxu0 0.0
        %2049 = vmatprep.subr.mxu0 0.0
        %2050 = vmatpush1.msra.mxu0 0.0
        %2051 = vmatprep.subr.mxu0 0.0
        %2052 = vmatpush1.msra.mxu0 0.0
        %2053 = vmatprep.subr.mxu0 0.0
        %2054 = vmatpush1.msra.mxu0 0.0
        %2055 = vmatprep.subr.mxu0 0.0
        %2056 = vmatpush1.msra.mxu0 0.0
        %2057 = vmatprep.subr.mxu0 0.0
        %2058 = vmatpush1.msra.mxu0 0.0
        %2059 = vmatprep.subr.mxu0 0.0
        %2060 = vmatpush1.msra.mxu0 0.0
        %2061 = vmatprep.subr.mxu0 0.0
        %2062 = vmatpush1.msra.mxu0 0.0
        %2063 = vmatprep.subr.mxu0 0.0
        %2064 = vmatpush1.msra.mxu0 0.0
        %2065 = vmatprep.subr.mxu0 0.0
        %2066 = vmatpush1.msra.mxu0 0.0
        %2067 = vmatprep.subr.mxu0 0.0
        %2068 = vmatpush1.msra.mxu0 0.0
        %2069 = vmatprep.subr.mxu0 0.0
        %2070 = vmatpush1.msra.mxu0 0.0
        %2071 = vmatprep.subr.mxu0 0.0
        %2072 = vmatpush1.msra.mxu0 0.0
        %2073 = vmatprep.subr.mxu0 0.0
        %2074 = vmatpush1.msra.mxu0 0.0
        %2075 = vmatprep.subr.mxu0 0.0
        %2076 = vmatpush1.msra.mxu0 0.0
        %2077 = vmatprep.subr.mxu0 0.0
        %2078 = vmatpush1.msra.mxu0 0.0
        %2079 = vmatprep.subr.mxu0 0.0
        %2080 = vmatpush1.msra.mxu0 0.0
        %2081 = vmatprep.subr.mxu0 0.0
        %2082 = vmatpush1.msra.mxu0 0.0
        %2083 = vmatprep.subr.mxu0 0.0
        %2084 = vmatpush1.msra.mxu0 0.0
        %2085 = vmatprep.subr.mxu0 0.0
        %2086 = vmatpush1.msra.mxu0 0.0
        %2087 = vmatprep.mubr.f32.mxu0 0.0
        %2088 = vmatmul.mubr.f32.gmra.mrb[0].mxu0 %v726
        %v2089 = vpop.f32.mrb[0].mxu0
        %v2090 = vadd.f32 0.0, %v2089
        %v2091 = vpop.f32.mrb[0].mxu0
        %2092 = vdwg.mxu0
        %2093 = vmatprep.subr.mxu0 0.0
        %2094 = vmatpush1.msra.mxu0 %v1871
        %2095 = vmatprep.subr.mxu0 0.0
        %2096 = vmatpush1.msra.mxu0 %v1872
        %2097 = vmatprep.subr.mxu0 0.0
        %2098 = vmatpush1.msra.mxu0 %v1873
        %2099 = vmatprep.subr.mxu0 0.0
        %2100 = vmatpush1.msra.mxu0 %v1874
        %2101 = vmatprep.subr.mxu0 0.0
        %2102 = vmatpush1.msra.mxu0 0.0
        %2103 = vmatprep.subr.mxu0 0.0
        %2104 = vmatpush1.msra.mxu0 0.0
        %2105 = vmatprep.subr.mxu0 0.0
        %2106 = vmatpush1.msra.mxu0 0.0
        %2107 = vmatprep.subr.mxu0 0.0
        %2108 = vmatpush1.msra.mxu0 0.0
        %2109 = vmatprep.subr.mxu0 0.0
        %2110 = vmatpush1.msra.mxu0 0.0
        %2111 = vmatprep.subr.mxu0 0.0
        %2112 = vmatpush1.msra.mxu0 0.0
        %2113 = vmatprep.subr.mxu0 0.0
        %2114 = vmatpush1.msra.mxu0 0.0
        %2115 = vmatprep.subr.mxu0 0.0
        %2116 = vmatpush1.msra.mxu0 0.0
        %2117 = vmatprep.subr.mxu0 0.0
        %2118 = vmatpush1.msra.mxu0 0.0
        %2119 = vmatprep.subr.mxu0 0.0
        %2120 = vmatpush1.msra.mxu0 0.0
        %2121 = vmatprep.subr.mxu0 0.0
        %2122 = vmatpush1.msra.mxu0 0.0
        %2123 = vmatprep.subr.mxu0 0.0
        %2124 = vmatpush1.msra.mxu0 0.0
        %2125 = vmatprep.subr.mxu0 0.0
        %2126 = vmatpush1.msra.mxu0 0.0
        %2127 = vmatprep.subr.mxu0 0.0
        %2128 = vmatpush1.msra.mxu0 0.0
        %2129 = vmatprep.subr.mxu0 0.0
        %2130 = vmatpush1.msra.mxu0 0.0
        %2131 = vmatprep.subr.mxu0 0.0
        %2132 = vmatpush1.msra.mxu0 0.0
        %2133 = vmatprep.subr.mxu0 0.0
        %2134 = vmatpush1.msra.mxu0 0.0
        %2135 = vmatprep.subr.mxu0 0.0
        %2136 = vmatpush1.msra.mxu0 0.0
        %2137 = vmatprep.subr.mxu0 0.0
        %2138 = vmatpush1.msra.mxu0 0.0
        %2139 = vmatprep.subr.mxu0 0.0
        %2140 = vmatpush1.msra.mxu0 0.0
        %2141 = vmatprep.subr.mxu0 0.0
        %2142 = vmatpush1.msra.mxu0 0.0
        %2143 = vmatprep.subr.mxu0 0.0
        %2144 = vmatpush1.msra.mxu0 0.0
        %2145 = vmatprep.subr.mxu0 0.0
        %2146 = vmatpush1.msra.mxu0 0.0
        %2147 = vmatprep.subr.mxu0 0.0
        %2148 = vmatpush1.msra.mxu0 0.0
        %2149 = vmatprep.subr.mxu0 0.0
        %2150 = vmatpush1.msra.mxu0 0.0
        %2151 = vmatprep.subr.mxu0 0.0
        %2152 = vmatpush1.msra.mxu0 0.0
        %2153 = vmatprep.subr.mxu0 0.0
        %2154 = vmatpush1.msra.mxu0 0.0
        %2155 = vmatprep.subr.mxu0 0.0
        %2156 = vmatpush1.msra.mxu0 0.0
        %2157 = vmatprep.mubr.f32.mxu0 0.0
        %2158 = vmatmul.mubr.f32.gmra.mrb[0].mxu0 %v799
        %v2159 = vpop.f32.mrb[0].mxu0
        %v2160 = vadd.f32 0.0, %v2159
        %v2161 = vpop.f32.mrb[0].mxu0
        %2162 = vdwg.mxu0
        %2163 = vmatprep.subr.mxu0 0.0
        %2164 = vmatpush1.msra.mxu0 %v1875
        %2165 = vmatprep.subr.mxu0 0.0
        %2166 = vmatpush1.msra.mxu0 %v1876
        %2167 = vmatprep.subr.mxu0 0.0
        %2168 = vmatpush1.msra.mxu0 %v1877
        %2169 = vmatprep.subr.mxu0 0.0
        %2170 = vmatpush1.msra.mxu0 %v1878
        %2171 = vmatprep.subr.mxu0 0.0
        %2172 = vmatpush1.msra.mxu0 0.0
        %2173 = vmatprep.subr.mxu0 0.0
        %2174 = vmatpush1.msra.mxu0 0.0
        %2175 = vmatprep.subr.mxu0 0.0
        %2176 = vmatpush1.msra.mxu0 0.0
        %2177 = vmatprep.subr.mxu0 0.0
        %2178 = vmatpush1.msra.mxu0 0.0
        %2179 = vmatprep.subr.mxu0 0.0
        %2180 = vmatpush1.msra.mxu0 0.0
        %2181 = vmatprep.subr.mxu0 0.0
        %2182 = vmatpush1.msra.mxu0 0.0
        %2183 = vmatprep.subr.mxu0 0.0
        %2184 = vmatpush1.msra.mxu0 0.0
        %2185 = vmatprep.subr.mxu0 0.0
        %2186 = vmatpush1.msra.mxu0 0.0
        %2187 = vmatprep.subr.mxu0 0.0
        %2188 = vmatpush1.msra.mxu0 0.0
        %2189 = vmatprep.subr.mxu0 0.0
        %2190 = vmatpush1.msra.mxu0 0.0
        %2191 = vmatprep.subr.mxu0 0.0
        %2192 = vmatpush1.msra.mxu0 0.0
        %2193 = vmatprep.subr.mxu0 0.0
        %2194 = vmatpush1.msra.mxu0 0.0
        %2195 = vmatprep.subr.mxu0 0.0
        %2196 = vmatpush1.msra.mxu0 0.0
        %2197 = vmatprep.subr.mxu0 0.0
        %2198 = vmatpush1.msra.mxu0 0.0
        %2199 = vmatprep.subr.mxu0 0.0
        %2200 = vmatpush1.msra.mxu0 0.0
        %2201 = vmatprep.subr.mxu0 0.0
        %2202 = vmatpush1.msra.mxu0 0.0
        %2203 = vmatprep.subr.mxu0 0.0
        %2204 = vmatpush1.msra.mxu0 0.0
        %2205 = vmatprep.subr.mxu0 0.0
        %2206 = vmatpush1.msra.mxu0 0.0
        %2207 = vmatprep.subr.mxu0 0.0
        %2208 = vmatpush1.msra.mxu0 0.0
        %2209 = vmatprep.subr.mxu0 0.0
        %2210 = vmatpush1.msra.mxu0 0.0
        %2211 = vmatprep.subr.mxu0 0.0
        %2212 = vmatpush1.msra.mxu0 0.0
        %2213 = vmatprep.subr.mxu0 0.0
        %2214 = vmatpush1.msra.mxu0 0.0
        %2215 = vmatprep.subr.mxu0 0.0
        %2216 = vmatpush1.msra.mxu0 0.0
        %2217 = vmatprep.subr.mxu0 0.0
        %2218 = vmatpush1.msra.mxu0 0.0
        %2219 = vmatprep.subr.mxu0 0.0
        %2220 = vmatpush1.msra.mxu0 0.0
        %2221 = vmatprep.subr.mxu0 0.0
        %2222 = vmatpush1.msra.mxu0 0.0
        %2223 = vmatprep.subr.mxu0 0.0
        %2224 = vmatpush1.msra.mxu0 0.0
        %2225 = vmatprep.subr.mxu0 0.0
        %2226 = vmatpush1.msra.mxu0 0.0
        %2227 = vmatprep.mubr.f32.mxu0 0.0
        %2228 = vmatmul.mubr.f32.gmra.mrb[0].mxu0 %v726
        %v2229 = vpop.f32.mrb[0].mxu0
        %v2230 = vadd.f32 0.0, %v2229
        %v2231 = vpop.f32.mrb[0].mxu0
        %2232 = vdwg.mxu0
        %2233 = vmatprep.subr.mxu0 0.0
        %2234 = vmatpush1.msra.mxu0 %v1875
        %2235 = vmatprep.subr.mxu0 0.0
        %2236 = vmatpush1.msra.mxu0 %v1876
        %2237 = vmatprep.subr.mxu0 0.0
        %2238 = vmatpush1.msra.mxu0 %v1877
        %2239 = vmatprep.subr.mxu0 0.0
        %2240 = vmatpush1.msra.mxu0 %v1878
        %2241 = vmatprep.subr.mxu0 0.0
        %2242 = vmatpush1.msra.mxu0 0.0
        %2243 = vmatprep.subr.mxu0 0.0
        %2244 = vmatpush1.msra.mxu0 0.0
        %2245 = vmatprep.subr.mxu0 0.0
        %2246 = vmatpush1.msra.mxu0 0.0
        %2247 = vmatprep.subr.mxu0 0.0
        %2248 = vmatpush1.msra.mxu0 0.0
        %2249 = vmatprep.subr.mxu0 0.0
        %2250 = vmatpush1.msra.mxu0 0.0
        %2251 = vmatprep.subr.mxu0 0.0
        %2252 = vmatpush1.msra.mxu0 0.0
        %2253 = vmatprep.subr.mxu0 0.0
        %2254 = vmatpush1.msra.mxu0 0.0
        %2255 = vmatprep.subr.mxu0 0.0
        %2256 = vmatpush1.msra.mxu0 0.0
        %2257 = vmatprep.subr.mxu0 0.0
        %2258 = vmatpush1.msra.mxu0 0.0
        %2259 = vmatprep.subr.mxu0 0.0
        %2260 = vmatpush1.msra.mxu0 0.0
        %2261 = vmatprep.subr.mxu0 0.0
        %2262 = vmatpush1.msra.mxu0 0.0
        %2263 = vmatprep.subr.mxu0 0.0
        %2264 = vmatpush1.msra.mxu0 0.0
        %2265 = vmatprep.subr.mxu0 0.0
        %2266 = vmatpush1.msra.mxu0 0.0
        %2267 = vmatprep.subr.mxu0 0.0
        %2268 = vmatpush1.msra.mxu0 0.0
        %2269 = vmatprep.subr.mxu0 0.0
        %2270 = vmatpush1.msra.mxu0 0.0
        %2271 = vmatprep.subr.mxu0 0.0
        %2272 = vmatpush1.msra.mxu0 0.0
        %2273 = vmatprep.subr.mxu0 0.0
        %2274 = vmatpush1.msra.mxu0 0.0
        %2275 = vmatprep.subr.mxu0 0.0
        %2276 = vmatpush1.msra.mxu0 0.0
        %2277 = vmatprep.subr.mxu0 0.0
        %2278 = vmatpush1.msra.mxu0 0.0
        %2279 = vmatprep.subr.mxu0 0.0
        %2280 = vmatpush1.msra.mxu0 0.0
        %2281 = vmatprep.subr.mxu0 0.0
        %2282 = vmatpush1.msra.mxu0 0.0
        %2283 = vmatprep.subr.mxu0 0.0
        %2284 = vmatpush1.msra.mxu0 0.0
        %2285 = vmatprep.subr.mxu0 0.0
        %2286 = vmatpush1.msra.mxu0 0.0
        %2287 = vmatprep.subr.mxu0 0.0
        %2288 = vmatpush1.msra.mxu0 0.0
        %2289 = vmatprep.subr.mxu0 0.0
        %2290 = vmatpush1.msra.mxu0 0.0
        %2291 = vmatprep.subr.mxu0 0.0
        %2292 = vmatpush1.msra.mxu0 0.0
        %2293 = vmatprep.subr.mxu0 0.0
        %2294 = vmatpush1.msra.mxu0 0.0
        %2295 = vmatprep.subr.mxu0 0.0
        %2296 = vmatpush1.msra.mxu0 0.0
        %2297 = vmatprep.mubr.f32.mxu0 0.0
        %2298 = vmatmul.mubr.f32.gmra.mrb[0].mxu0 %v799
        %v2299 = vpop.f32.mrb[0].mxu0
        %v2300 = vadd.f32 0.0, %v2299
        %v2301 = vpop.f32.mrb[0].mxu0
        %2302 = vdwg.mxu0
        %2303 = vmatprep.subr.mxu0 0.0
        %2304 = vmatpush1.msra.mxu0 %v1879
        %2305 = vmatprep.subr.mxu0 0.0
        %2306 = vmatpush1.msra.mxu0 %v1880
        %2307 = vmatprep.subr.mxu0 0.0
        %2308 = vmatpush1.msra.mxu0 %v1881
        %2309 = vmatprep.subr.mxu0 0.0
        %2310 = vmatpush1.msra.mxu0 %v1882
        %2311 = vmatprep.subr.mxu0 0.0
        %2312 = vmatpush1.msra.mxu0 0.0
        %2313 = vmatprep.subr.mxu0 0.0
        %2314 = vmatpush1.msra.mxu0 0.0
        %2315 = vmatprep.subr.mxu0 0.0
        %2316 = vmatpush1.msra.mxu0 0.0
        %2317 = vmatprep.subr.mxu0 0.0
        %2318 = vmatpush1.msra.mxu0 0.0
        %2319 = vmatprep.subr.mxu0 0.0
        %2320 = vmatpush1.msra.mxu0 0.0
        %2321 = vmatprep.subr.mxu0 0.0
        %2322 = vmatpush1.msra.mxu0 0.0
        %2323 = vmatprep.subr.mxu0 0.0
        %2324 = vmatpush1.msra.mxu0 0.0
        %2325 = vmatprep.subr.mxu0 0.0
        %2326 = vmatpush1.msra.mxu0 0.0
        %2327 = vmatprep.subr.mxu0 0.0
        %2328 = vmatpush1.msra.mxu0 0.0
        %2329 = vmatprep.subr.mxu0 0.0
        %2330 = vmatpush1.msra.mxu0 0.0
        %2331 = vmatprep.subr.mxu0 0.0
        %2332 = vmatpush1.msra.mxu0 0.0
        %2333 = vmatprep.subr.mxu0 0.0
        %2334 = vmatpush1.msra.mxu0 0.0
        %2335 = vmatprep.subr.mxu0 0.0
        %2336 = vmatpush1.msra.mxu0 0.0
        %2337 = vmatprep.subr.mxu0 0.0
        %2338 = vmatpush1.msra.mxu0 0.0
        %2339 = vmatprep.subr.mxu0 0.0
        %2340 = vmatpush1.msra.mxu0 0.0
        %2341 = vmatprep.subr.mxu0 0.0
        %2342 = vmatpush1.msra.mxu0 0.0
        %2343 = vmatprep.subr.mxu0 0.0
        %2344 = vmatpush1.msra.mxu0 0.0
        %2345 = vmatprep.subr.mxu0 0.0
        %2346 = vmatpush1.msra.mxu0 0.0
        %2347 = vmatprep.subr.mxu0 0.0
        %2348 = vmatpush1.msra.mxu0 0.0
        %2349 = vmatprep.subr.mxu0 0.0
        %2350 = vmatpush1.msra.mxu0 0.0
        %2351 = vmatprep.subr.mxu0 0.0
        %2352 = vmatpush1.msra.mxu0 0.0
        %2353 = vmatprep.subr.mxu0 0.0
        %2354 = vmatpush1.msra.mxu0 0.0
        %2355 = vmatprep.subr.mxu0 0.0
        %2356 = vmatpush1.msra.mxu0 0.0
        %2357 = vmatprep.subr.mxu0 0.0
        %2358 = vmatpush1.msra.mxu0 0.0
        %2359 = vmatprep.subr.mxu0 0.0
        %2360 = vmatpush1.msra.mxu0 0.0
        %2361 = vmatprep.subr.mxu0 0.0
        %2362 = vmatpush1.msra.mxu0 0.0
        %2363 = vmatprep.subr.mxu0 0.0
        %2364 = vmatpush1.msra.mxu0 0.0
        %2365 = vmatprep.subr.mxu0 0.0
        %2366 = vmatpush1.msra.mxu0 0.0
        %2367 = vmatprep.mubr.f32.mxu0 0.0
        %2368 = vmatmul.mubr.f32.gmra.mrb[0].mxu0 %v726
        %v2369 = vpop.f32.mrb[0].mxu0
        %v2370 = vadd.f32 0.0, %v2369
        %v2371 = vpop.f32.mrb[0].mxu0
        %2372 = vdwg.mxu0
        %2373 = vmatprep.subr.mxu0 0.0
        %2374 = vmatpush1.msra.mxu0 %v1879
        %2375 = vmatprep.subr.mxu0 0.0
        %2376 = vmatpush1.msra.mxu0 %v1880
        %2377 = vmatprep.subr.mxu0 0.0
        %2378 = vmatpush1.msra.mxu0 %v1881
        %2379 = vmatprep.subr.mxu0 0.0
        %2380 = vmatpush1.msra.mxu0 %v1882
        %2381 = vmatprep.subr.mxu0 0.0
        %2382 = vmatpush1.msra.mxu0 0.0
        %2383 = vmatprep.subr.mxu0 0.0
        %2384 = vmatpush1.msra.mxu0 0.0
        %2385 = vmatprep.subr.mxu0 0.0
        %2386 = vmatpush1.msra.mxu0 0.0
        %2387 = vmatprep.subr.mxu0 0.0
        %2388 = vmatpush1.msra.mxu0 0.0
        %2389 = vmatprep.subr.mxu0 0.0
        %2390 = vmatpush1.msra.mxu0 0.0
        %2391 = vmatprep.subr.mxu0 0.0
        %2392 = vmatpush1.msra.mxu0 0.0
        %2393 = vmatprep.subr.mxu0 0.0
        %2394 = vmatpush1.msra.mxu0 0.0
        %2395 = vmatprep.subr.mxu0 0.0
        %2396 = vmatpush1.msra.mxu0 0.0
        %2397 = vmatprep.subr.mxu0 0.0
        %2398 = vmatpush1.msra.mxu0 0.0
        %2399 = vmatprep.subr.mxu0 0.0
        %2400 = vmatpush1.msra.mxu0 0.0
        %2401 = vmatprep.subr.mxu0 0.0
        %2402 = vmatpush1.msra.mxu0 0.0
        %2403 = vmatprep.subr.mxu0 0.0
        %2404 = vmatpush1.msra.mxu0 0.0
        %2405 = vmatprep.subr.mxu0 0.0
        %2406 = vmatpush1.msra.mxu0 0.0
        %2407 = vmatprep.subr.mxu0 0.0
        %2408 = vmatpush1.msra.mxu0 0.0
        %2409 = vmatprep.subr.mxu0 0.0
        %2410 = vmatpush1.msra.mxu0 0.0
        %2411 = vmatprep.subr.mxu0 0.0
        %2412 = vmatpush1.msra.mxu0 0.0
        %2413 = vmatprep.subr.mxu0 0.0
        %2414 = vmatpush1.msra.mxu0 0.0
        %2415 = vmatprep.subr.mxu0 0.0
        %2416 = vmatpush1.msra.mxu0 0.0
        %2417 = vmatprep.subr.mxu0 0.0
        %2418 = vmatpush1.msra.mxu0 0.0
        %2419 = vmatprep.subr.mxu0 0.0
        %2420 = vmatpush1.msra.mxu0 0.0
        %2421 = vmatprep.subr.mxu0 0.0
        %2422 = vmatpush1.msra.mxu0 0.0
        %2423 = vmatprep.subr.mxu0 0.0
        %2424 = vmatpush1.msra.mxu0 0.0
        %2425 = vmatprep.subr.mxu0 0.0
        %2426 = vmatpush1.msra.mxu0 0.0
        %2427 = vmatprep.subr.mxu0 0.0
        %2428 = vmatpush1.msra.mxu0 0.0
        %2429 = vmatprep.subr.mxu0 0.0
        %2430 = vmatpush1.msra.mxu0 0.0
        %2431 = vmatprep.subr.mxu0 0.0
        %2432 = vmatpush1.msra.mxu0 0.0
        %2433 = vmatprep.subr.mxu0 0.0
        %2434 = vmatpush1.msra.mxu0 0.0
        %2435 = vmatprep.subr.mxu0 0.0
        %2436 = vmatpush1.msra.mxu0 0.0
        %2437 = vmatprep.mubr.f32.mxu0 0.0
        %2438 = vmatmul.mubr.f32.gmra.mrb[0].mxu0 %v799
        %v2439 = vpop.f32.mrb[0].mxu0
        %v2440 = vadd.f32 0.0, %v2439
        %v2441 = vpop.f32.mrb[0].mxu0
        %2442 = vdwg.mxu0
        %vm2443 = vcmask 64512
        %v2445 = vsel %vm2443, %v795, 0
        %v2448 = vsel %vm2443, %v1374, 0
        %2450 = vmatprep.subr.mxu0 0.0
        %2451 = vmatpush1.xpose.msra.mxu0 %v2448
        %2452 = vmatprep.subr.mxu0 0.0
        %2453 = vmatpush1.xpose.msra.mxu0 0.0
        %2454 = vmatprep.subr.mxu0 0.0
        %2455 = vmatpush1.xpose.msra.mxu0 0.0
        %2456 = vmatprep.subr.mxu0 0.0
        %2457 = vmatpush1.xpose.msra.mxu0 0.0
        %2458 = vmatprep.subr.mxu0 0.0
        %2459 = vmatpush1.xpose.msra.mxu0 0.0
        %2460 = vmatprep.subr.mxu0 0.0
        %2461 = vmatpush1.xpose.msra.mxu0 0.0
        %2462 = vmatprep.subr.mxu0 0.0
        %2463 = vmatpush1.xpose.msra.mxu0 0.0
        %2464 = vmatprep.subr.mxu0 0.0
        %2465 = vmatpush1.xpose.msra.mxu0 0.0
        %2466 = vmatprep.subr.mxu0 0.0
        %2467 = vmatpush1.xpose.msra.mxu0 0.0
        %2468 = vmatprep.subr.mxu0 0.0
        %2469 = vmatpush1.xpose.msra.mxu0 0.0
        %2470 = vmatprep.subr.mxu0 0.0
        %2471 = vmatpush1.xpose.msra.mxu0 0.0
        %2472 = vmatprep.subr.mxu0 0.0
        %2473 = vmatpush1.xpose.msra.mxu0 0.0
        %2474 = vmatprep.subr.mxu0 0.0
        %2475 = vmatpush1.xpose.msra.mxu0 0.0
        %2476 = vmatprep.subr.mxu0 0.0
        %2477 = vmatpush1.xpose.msra.mxu0 0.0
        %2478 = vmatprep.subr.mxu0 0.0
        %2479 = vmatpush1.xpose.msra.mxu0 0.0
        %2480 = vmatprep.subr.mxu0 0.0
        %2481 = vmatpush1.xpose.msra.mxu0 0.0
        %2482 = vmatprep.subr.mxu0 0.0
        %2483 = vmatpush1.xpose.msra.mxu0 0.0
        %2484 = vmatprep.subr.mxu0 0.0
        %2485 = vmatpush1.xpose.msra.mxu0 0.0
        %2486 = vmatprep.subr.mxu0 0.0
        %2487 = vmatpush1.xpose.msra.mxu0 0.0
        %2488 = vmatprep.subr.mxu0 0.0
        %2489 = vmatpush1.xpose.msra.mxu0 0.0
        %2490 = vmatprep.subr.mxu0 0.0
        %2491 = vmatpush1.xpose.msra.mxu0 0.0
        %2492 = vmatprep.subr.mxu0 0.0
        %2493 = vmatpush1.xpose.msra.mxu0 0.0
        %2494 = vmatprep.subr.mxu0 0.0
        %2495 = vmatpush1.xpose.msra.mxu0 0.0
        %2496 = vmatprep.subr.mxu0 0.0
        %2497 = vmatpush1.xpose.msra.mxu0 0.0
        %2498 = vmatprep.subr.mxu0 0.0
        %2499 = vmatpush1.xpose.msra.mxu0 0.0
        %2500 = vmatprep.subr.mxu0 0.0
        %2501 = vmatpush1.xpose.msra.mxu0 0.0
        %2502 = vmatprep.subr.mxu0 0.0
        %2503 = vmatpush1.xpose.msra.mxu0 0.0
        %2504 = vmatprep.subr.mxu0 0.0
        %2505 = vmatpush1.xpose.msra.mxu0 0.0
        %2506 = vmatprep.subr.mxu0 0.0
        %2507 = vmatpush1.xpose.msra.mxu0 0.0
        %2508 = vmatprep.subr.mxu0 0.0
        %2509 = vmatpush1.xpose.msra.mxu0 0.0
        %2510 = vmatprep.subr.mxu0 0.0
        %2511 = vmatpush1.xpose.msra.mxu0 0.0
        %2512 = vmatprep.subr.mxu0 0.0
        %2513 = vmatpush1.xpose.msra.mxu0 0.0
        %2514 = vmatprep.mubr.f32.mxu0 0.0
        %2515 = vmatmul.mubr.f32.gmra.mrb[0].mxu0 %v2445
        %v2516 = vpop.f32.mrb[0].mxu0
        %v2517 = vadd.f32 0.0, %v2516
        %v2518 = vpop.f32.mrb[0].mxu0
        %2519 = vdwg.mxu0
        %v2521 = vsel %vm2443, %v868, 0
        %v2524 = vsel %vm2443, %v1444, 0
        %2526 = vmatprep.subr.mxu0 0.0
        %2527 = vmatpush1.xpose.msra.mxu0 %v2524
        %2528 = vmatprep.subr.mxu0 0.0
        %2529 = vmatpush1.xpose.msra.mxu0 0.0
        %2530 = vmatprep.subr.mxu0 0.0
        %2531 = vmatpush1.xpose.msra.mxu0 0.0
        %2532 = vmatprep.subr.mxu0 0.0
        %2533 = vmatpush1.xpose.msra.mxu0 0.0
        %2534 = vmatprep.subr.mxu0 0.0
        %2535 = vmatpush1.xpose.msra.mxu0 0.0
        %2536 = vmatprep.subr.mxu0 0.0
        %2537 = vmatpush1.xpose.msra.mxu0 0.0
        %2538 = vmatprep.subr.mxu0 0.0
        %2539 = vmatpush1.xpose.msra.mxu0 0.0
        %2540 = vmatprep.subr.mxu0 0.0
        %2541 = vmatpush1.xpose.msra.mxu0 0.0
        %2542 = vmatprep.subr.mxu0 0.0
        %2543 = vmatpush1.xpose.msra.mxu0 0.0
        %2544 = vmatprep.subr.mxu0 0.0
        %2545 = vmatpush1.xpose.msra.mxu0 0.0
        %2546 = vmatprep.subr.mxu0 0.0
        %2547 = vmatpush1.xpose.msra.mxu0 0.0
        %2548 = vmatprep.subr.mxu0 0.0
        %2549 = vmatpush1.xpose.msra.mxu0 0.0
        %2550 = vmatprep.subr.mxu0 0.0
        %2551 = vmatpush1.xpose.msra.mxu0 0.0
        %2552 = vmatprep.subr.mxu0 0.0
        %2553 = vmatpush1.xpose.msra.mxu0 0.0
        %2554 = vmatprep.subr.mxu0 0.0
        %2555 = vmatpush1.xpose.msra.mxu0 0.0
        %2556 = vmatprep.subr.mxu0 0.0
        %2557 = vmatpush1.xpose.msra.mxu0 0.0
        %2558 = vmatprep.subr.mxu0 0.0
        %2559 = vmatpush1.xpose.msra.mxu0 0.0
        %2560 = vmatprep.subr.mxu0 0.0
        %2561 = vmatpush1.xpose.msra.mxu0 0.0
        %2562 = vmatprep.subr.mxu0 0.0
        %2563 = vmatpush1.xpose.msra.mxu0 0.0
        %2564 = vmatprep.subr.mxu0 0.0
        %2565 = vmatpush1.xpose.msra.mxu0 0.0
        %2566 = vmatprep.subr.mxu0 0.0
        %2567 = vmatpush1.xpose.msra.mxu0 0.0
        %2568 = vmatprep.subr.mxu0 0.0
        %2569 = vmatpush1.xpose.msra.mxu0 0.0
        %2570 = vmatprep.subr.mxu0 0.0
        %2571 = vmatpush1.xpose.msra.mxu0 0.0
        %2572 = vmatprep.subr.mxu0 0.0
        %2573 = vmatpush1.xpose.msra.mxu0 0.0
        %2574 = vmatprep.subr.mxu0 0.0
        %2575 = vmatpush1.xpose.msra.mxu0 0.0
        %2576 = vmatprep.subr.mxu0 0.0
        %2577 = vmatpush1.xpose.msra.mxu0 0.0
        %2578 = vmatprep.subr.mxu0 0.0
        %2579 = vmatpush1.xpose.msra.mxu0 0.0
        %2580 = vmatprep.subr.mxu0 0.0
        %2581 = vmatpush1.xpose.msra.mxu0 0.0
        %2582 = vmatprep.subr.mxu0 0.0
        %2583 = vmatpush1.xpose.msra.mxu0 0.0
        %2584 = vmatprep.subr.mxu0 0.0
        %2585 = vmatpush1.xpose.msra.mxu0 0.0
        %2586 = vmatprep.subr.mxu0 0.0
        %2587 = vmatpush1.xpose.msra.mxu0 0.0
        %2588 = vmatprep.subr.mxu0 0.0
        %2589 = vmatpush1.xpose.msra.mxu0 0.0
        %2590 = vmatprep.mubr.f32.mxu0 0.0
        %2591 = vmatmul.mubr.f32.gmra.mrb[0].mxu0 %v2521
        %v2592 = vpop.f32.mrb[0].mxu0
        %v2593 = vadd.f32 0.0, %v2592
        %v2594 = vpop.f32.mrb[0].mxu0
        %2595 = vdwg.mxu0
        %v2597 = vsel %vm2443, %v938, 0
        %v2600 = vsel %vm2443, %v1514, 0
        %2602 = vmatprep.subr.mxu0 0.0
        %2603 = vmatpush1.xpose.msra.mxu0 %v2600
        %2604 = vmatprep.subr.mxu0 0.0
        %2605 = vmatpush1.xpose.msra.mxu0 0.0
        %2606 = vmatprep.subr.mxu0 0.0
        %2607 = vmatpush1.xpose.msra.mxu0 0.0
        %2608 = vmatprep.subr.mxu0 0.0
        %2609 = vmatpush1.xpose.msra.mxu0 0.0
        %2610 = vmatprep.subr.mxu0 0.0
        %2611 = vmatpush1.xpose.msra.mxu0 0.0
        %2612 = vmatprep.subr.mxu0 0.0
        %2613 = vmatpush1.xpose.msra.mxu0 0.0
        %2614 = vmatprep.subr.mxu0 0.0
        %2615 = vmatpush1.xpose.msra.mxu0 0.0
        %2616 = vmatprep.subr.mxu0 0.0
        %2617 = vmatpush1.xpose.msra.mxu0 0.0
        %2618 = vmatprep.subr.mxu0 0.0
        %2619 = vmatpush1.xpose.msra.mxu0 0.0
        %2620 = vmatprep.subr.mxu0 0.0
        %2621 = vmatpush1.xpose.msra.mxu0 0.0
        %2622 = vmatprep.subr.mxu0 0.0
        %2623 = vmatpush1.xpose.msra.mxu0 0.0
        %2624 = vmatprep.subr.mxu0 0.0
        %2625 = vmatpush1.xpose.msra.mxu0 0.0
        %2626 = vmatprep.subr.mxu0 0.0
        %2627 = vmatpush1.xpose.msra.mxu0 0.0
        %2628 = vmatprep.subr.mxu0 0.0
        %2629 = vmatpush1.xpose.msra.mxu0 0.0
        %2630 = vmatprep.subr.mxu0 0.0
        %2631 = vmatpush1.xpose.msra.mxu0 0.0
        %2632 = vmatprep.subr.mxu0 0.0
        %2633 = vmatpush1.xpose.msra.mxu0 0.0
        %2634 = vmatprep.subr.mxu0 0.0
        %2635 = vmatpush1.xpose.msra.mxu0 0.0
        %2636 = vmatprep.subr.mxu0 0.0
        %2637 = vmatpush1.xpose.msra.mxu0 0.0
        %2638 = vmatprep.subr.mxu0 0.0
        %2639 = vmatpush1.xpose.msra.mxu0 0.0
        %2640 = vmatprep.subr.mxu0 0.0
        %2641 = vmatpush1.xpose.msra.mxu0 0.0
        %2642 = vmatprep.subr.mxu0 0.0
        %2643 = vmatpush1.xpose.msra.mxu0 0.0
        %2644 = vmatprep.subr.mxu0 0.0
        %2645 = vmatpush1.xpose.msra.mxu0 0.0
        %2646 = vmatprep.subr.mxu0 0.0
        %2647 = vmatpush1.xpose.msra.mxu0 0.0
        %2648 = vmatprep.subr.mxu0 0.0
        %2649 = vmatpush1.xpose.msra.mxu0 0.0
        %2650 = vmatprep.subr.mxu0 0.0
        %2651 = vmatpush1.xpose.msra.mxu0 0.0
        %2652 = vmatprep.subr.mxu0 0.0
        %2653 = vmatpush1.xpose.msra.mxu0 0.0
        %2654 = vmatprep.subr.mxu0 0.0
        %2655 = vmatpush1.xpose.msra.mxu0 0.0
        %2656 = vmatprep.subr.mxu0 0.0
        %2657 = vmatpush1.xpose.msra.mxu0 0.0
        %2658 = vmatprep.subr.mxu0 0.0
        %2659 = vmatpush1.xpose.msra.mxu0 0.0
        %2660 = vmatprep.subr.mxu0 0.0
        %2661 = vmatpush1.xpose.msra.mxu0 0.0
        %2662 = vmatprep.subr.mxu0 0.0
        %2663 = vmatpush1.xpose.msra.mxu0 0.0
        %2664 = vmatprep.subr.mxu0 0.0
        %2665 = vmatpush1.xpose.msra.mxu0 0.0
        %2666 = vmatprep.mubr.f32.mxu0 0.0
        %2667 = vmatmul.mubr.f32.gmra.mrb[0].mxu0 %v2597
        %v2668 = vpop.f32.mrb[0].mxu0
        %v2669 = vadd.f32 0.0, %v2668
        %v2670 = vpop.f32.mrb[0].mxu0
        %2671 = vdwg.mxu0
        %v2673 = vsel %vm2443, %v1008, 0
        %v2676 = vsel %vm2443, %v1584, 0
        %2678 = vmatprep.subr.mxu0 0.0
        %2679 = vmatpush1.xpose.msra.mxu0 %v2676
        %2680 = vmatprep.subr.mxu0 0.0
        %2681 = vmatpush1.xpose.msra.mxu0 0.0
        %2682 = vmatprep.subr.mxu0 0.0
        %2683 = vmatpush1.xpose.msra.mxu0 0.0
        %2684 = vmatprep.subr.mxu0 0.0
        %2685 = vmatpush1.xpose.msra.mxu0 0.0
        %2686 = vmatprep.subr.mxu0 0.0
        %2687 = vmatpush1.xpose.msra.mxu0 0.0
        %2688 = vmatprep.subr.mxu0 0.0
        %2689 = vmatpush1.xpose.msra.mxu0 0.0
        %2690 = vmatprep.subr.mxu0 0.0
        %2691 = vmatpush1.xpose.msra.mxu0 0.0
        %2692 = vmatprep.subr.mxu0 0.0
        %2693 = vmatpush1.xpose.msra.mxu0 0.0
        %2694 = vmatprep.subr.mxu0 0.0
        %2695 = vmatpush1.xpose.msra.mxu0 0.0
        %2696 = vmatprep.subr.mxu0 0.0
        %2697 = vmatpush1.xpose.msra.mxu0 0.0
        %2698 = vmatprep.subr.mxu0 0.0
        %2699 = vmatpush1.xpose.msra.mxu0 0.0
        %2700 = vmatprep.subr.mxu0 0.0
        %2701 = vmatpush1.xpose.msra.mxu0 0.0
        %2702 = vmatprep.subr.mxu0 0.0
        %2703 = vmatpush1.xpose.msra.mxu0 0.0
        %2704 = vmatprep.subr.mxu0 0.0
        %2705 = vmatpush1.xpose.msra.mxu0 0.0
        %2706 = vmatprep.subr.mxu0 0.0
        %2707 = vmatpush1.xpose.msra.mxu0 0.0
        %2708 = vmatprep.subr.mxu0 0.0
        %2709 = vmatpush1.xpose.msra.mxu0 0.0
        %2710 = vmatprep.subr.mxu0 0.0
        %2711 = vmatpush1.xpose.msra.mxu0 0.0
        %2712 = vmatprep.subr.mxu0 0.0
        %2713 = vmatpush1.xpose.msra.mxu0 0.0
        %2714 = vmatprep.subr.mxu0 0.0
        %2715 = vmatpush1.xpose.msra.mxu0 0.0
        %2716 = vmatprep.subr.mxu0 0.0
        %2717 = vmatpush1.xpose.msra.mxu0 0.0
        %2718 = vmatprep.subr.mxu0 0.0
        %2719 = vmatpush1.xpose.msra.mxu0 0.0
        %2720 = vmatprep.subr.mxu0 0.0
        %2721 = vmatpush1.xpose.msra.mxu0 0.0
        %2722 = vmatprep.subr.mxu0 0.0
        %2723 = vmatpush1.xpose.msra.mxu0 0.0
        %2724 = vmatprep.subr.mxu0 0.0
        %2725 = vmatpush1.xpose.msra.mxu0 0.0
        %2726 = vmatprep.subr.mxu0 0.0
        %2727 = vmatpush1.xpose.msra.mxu0 0.0
        %2728 = vmatprep.subr.mxu0 0.0
        %2729 = vmatpush1.xpose.msra.mxu0 0.0
        %2730 = vmatprep.subr.mxu0 0.0
        %2731 = vmatpush1.xpose.msra.mxu0 0.0
        %2732 = vmatprep.subr.mxu0 0.0
        %2733 = vmatpush1.xpose.msra.mxu0 0.0
        %2734 = vmatprep.subr.mxu0 0.0
        %2735 = vmatpush1.xpose.msra.mxu0 0.0
        %2736 = vmatprep.subr.mxu0 0.0
        %2737 = vmatpush1.xpose.msra.mxu0 0.0
        %2738 = vmatprep.subr.mxu0 0.0
        %2739 = vmatpush1.xpose.msra.mxu0 0.0
        %2740 = vmatprep.subr.mxu0 0.0
        %2741 = vmatpush1.xpose.msra.mxu0 0.0
        %2742 = vmatprep.mubr.f32.mxu0 0.0
        %2743 = vmatmul.mubr.f32.gmra.mrb[0].mxu0 %v2673
        %v2744 = vpop.f32.mrb[0].mxu0
        %v2745 = vadd.f32 0.0, %v2744
        %v2746 = vpop.f32.mrb[0].mxu0
        %2747 = vdwg.mxu0
        %v2749 = vsel %vm2443, %v1078, 0
        %v2752 = vsel %vm2443, %v1654, 0
        %2754 = vmatprep.subr.mxu0 0.0
        %2755 = vmatpush1.xpose.msra.mxu0 %v2752
        %2756 = vmatprep.subr.mxu0 0.0
        %2757 = vmatpush1.xpose.msra.mxu0 0.0
        %2758 = vmatprep.subr.mxu0 0.0
        %2759 = vmatpush1.xpose.msra.mxu0 0.0
        %2760 = vmatprep.subr.mxu0 0.0
        %2761 = vmatpush1.xpose.msra.mxu0 0.0
        %2762 = vmatprep.subr.mxu0 0.0
        %2763 = vmatpush1.xpose.msra.mxu0 0.0
        %2764 = vmatprep.subr.mxu0 0.0
        %2765 = vmatpush1.xpose.msra.mxu0 0.0
        %2766 = vmatprep.subr.mxu0 0.0
        %2767 = vmatpush1.xpose.msra.mxu0 0.0
        %2768 = vmatprep.subr.mxu0 0.0
        %2769 = vmatpush1.xpose.msra.mxu0 0.0
        %2770 = vmatprep.subr.mxu0 0.0
        %2771 = vmatpush1.xpose.msra.mxu0 0.0
        %2772 = vmatprep.subr.mxu0 0.0
        %2773 = vmatpush1.xpose.msra.mxu0 0.0
        %2774 = vmatprep.subr.mxu0 0.0
        %2775 = vmatpush1.xpose.msra.mxu0 0.0
        %2776 = vmatprep.subr.mxu0 0.0
        %2777 = vmatpush1.xpose.msra.mxu0 0.0
        %2778 = vmatprep.subr.mxu0 0.0
        %2779 = vmatpush1.xpose.msra.mxu0 0.0
        %2780 = vmatprep.subr.mxu0 0.0
        %2781 = vmatpush1.xpose.msra.mxu0 0.0
        %2782 = vmatprep.subr.mxu0 0.0
        %2783 = vmatpush1.xpose.msra.mxu0 0.0
        %2784 = vmatprep.subr.mxu0 0.0
        %2785 = vmatpush1.xpose.msra.mxu0 0.0
        %2786 = vmatprep.subr.mxu0 0.0
        %2787 = vmatpush1.xpose.msra.mxu0 0.0
        %2788 = vmatprep.subr.mxu0 0.0
        %2789 = vmatpush1.xpose.msra.mxu0 0.0
        %2790 = vmatprep.subr.mxu0 0.0
        %2791 = vmatpush1.xpose.msra.mxu0 0.0
        %2792 = vmatprep.subr.mxu0 0.0
        %2793 = vmatpush1.xpose.msra.mxu0 0.0
        %2794 = vmatprep.subr.mxu0 0.0
        %2795 = vmatpush1.xpose.msra.mxu0 0.0
        %2796 = vmatprep.subr.mxu0 0.0
        %2797 = vmatpush1.xpose.msra.mxu0 0.0
        %2798 = vmatprep.subr.mxu0 0.0
        %2799 = vmatpush1.xpose.msra.mxu0 0.0
        %2800 = vmatprep.subr.mxu0 0.0
        %2801 = vmatpush1.xpose.msra.mxu0 0.0
        %2802 = vmatprep.subr.mxu0 0.0
        %2803 = vmatpush1.xpose.msra.mxu0 0.0
        %2804 = vmatprep.subr.mxu0 0.0
        %2805 = vmatpush1.xpose.msra.mxu0 0.0
        %2806 = vmatprep.subr.mxu0 0.0
        %2807 = vmatpush1.xpose.msra.mxu0 0.0
        %2808 = vmatprep.subr.mxu0 0.0
        %2809 = vmatpush1.xpose.msra.mxu0 0.0
        %2810 = vmatprep.subr.mxu0 0.0
        %2811 = vmatpush1.xpose.msra.mxu0 0.0
        %2812 = vmatprep.subr.mxu0 0.0
        %2813 = vmatpush1.xpose.msra.mxu0 0.0
        %2814 = vmatprep.subr.mxu0 0.0
        %2815 = vmatpush1.xpose.msra.mxu0 0.0
        %2816 = vmatprep.subr.mxu0 0.0
        %2817 = vmatpush1.xpose.msra.mxu0 0.0
        %2818 = vmatprep.mubr.f32.mxu0 0.0
        %2819 = vmatmul.mubr.f32.gmra.mrb[0].mxu0 %v2749
        %v2820 = vpop.f32.mrb[0].mxu0
        %v2821 = vadd.f32 0.0, %v2820
        %v2822 = vpop.f32.mrb[0].mxu0
        %2823 = vdwg.mxu0
        %v2825 = vsel %vm2443, %v1148, 0
        %v2828 = vsel %vm2443, %v1724, 0
        %2830 = vmatprep.subr.mxu0 0.0
        %2831 = vmatpush1.xpose.msra.mxu0 %v2828
        %2832 = vmatprep.subr.mxu0 0.0
        %2833 = vmatpush1.xpose.msra.mxu0 0.0
        %2834 = vmatprep.subr.mxu0 0.0
        %2835 = vmatpush1.xpose.msra.mxu0 0.0
        %2836 = vmatprep.subr.mxu0 0.0
        %2837 = vmatpush1.xpose.msra.mxu0 0.0
        %2838 = vmatprep.subr.mxu0 0.0
        %2839 = vmatpush1.xpose.msra.mxu0 0.0
        %2840 = vmatprep.subr.mxu0 0.0
        %2841 = vmatpush1.xpose.msra.mxu0 0.0
        %2842 = vmatprep.subr.mxu0 0.0
        %2843 = vmatpush1.xpose.msra.mxu0 0.0
        %2844 = vmatprep.subr.mxu0 0.0
        %2845 = vmatpush1.xpose.msra.mxu0 0.0
        %2846 = vmatprep.subr.mxu0 0.0
        %2847 = vmatpush1.xpose.msra.mxu0 0.0
        %2848 = vmatprep.subr.mxu0 0.0
        %2849 = vmatpush1.xpose.msra.mxu0 0.0
        %2850 = vmatprep.subr.mxu0 0.0
        %2851 = vmatpush1.xpose.msra.mxu0 0.0
        %2852 = vmatprep.subr.mxu0 0.0
        %2853 = vmatpush1.xpose.msra.mxu0 0.0
        %2854 = vmatprep.subr.mxu0 0.0
        %2855 = vmatpush1.xpose.msra.mxu0 0.0
        %2856 = vmatprep.subr.mxu0 0.0
        %2857 = vmatpush1.xpose.msra.mxu0 0.0
        %2858 = vmatprep.subr.mxu0 0.0
        %2859 = vmatpush1.xpose.msra.mxu0 0.0
        %2860 = vmatprep.subr.mxu0 0.0
        %2861 = vmatpush1.xpose.msra.mxu0 0.0
        %2862 = vmatprep.subr.mxu0 0.0
        %2863 = vmatpush1.xpose.msra.mxu0 0.0
        %2864 = vmatprep.subr.mxu0 0.0
        %2865 = vmatpush1.xpose.msra.mxu0 0.0
        %2866 = vmatprep.subr.mxu0 0.0
        %2867 = vmatpush1.xpose.msra.mxu0 0.0
        %2868 = vmatprep.subr.mxu0 0.0
        %2869 = vmatpush1.xpose.msra.mxu0 0.0
        %2870 = vmatprep.subr.mxu0 0.0
        %2871 = vmatpush1.xpose.msra.mxu0 0.0
        %2872 = vmatprep.subr.mxu0 0.0
        %2873 = vmatpush1.xpose.msra.mxu0 0.0
        %2874 = vmatprep.subr.mxu0 0.0
        %2875 = vmatpush1.xpose.msra.mxu0 0.0
        %2876 = vmatprep.subr.mxu0 0.0
        %2877 = vmatpush1.xpose.msra.mxu0 0.0
        %2878 = vmatprep.subr.mxu0 0.0
        %2879 = vmatpush1.xpose.msra.mxu0 0.0
        %2880 = vmatprep.subr.mxu0 0.0
        %2881 = vmatpush1.xpose.msra.mxu0 0.0
        %2882 = vmatprep.subr.mxu0 0.0
        %2883 = vmatpush1.xpose.msra.mxu0 0.0
        %2884 = vmatprep.subr.mxu0 0.0
        %2885 = vmatpush1.xpose.msra.mxu0 0.0
        %2886 = vmatprep.subr.mxu0 0.0
        %2887 = vmatpush1.xpose.msra.mxu0 0.0
        %2888 = vmatprep.subr.mxu0 0.0
        %2889 = vmatpush1.xpose.msra.mxu0 0.0
        %2890 = vmatprep.subr.mxu0 0.0
        %2891 = vmatpush1.xpose.msra.mxu0 0.0
        %2892 = vmatprep.subr.mxu0 0.0
        %2893 = vmatpush1.xpose.msra.mxu0 0.0
        %2894 = vmatprep.mubr.f32.mxu0 0.0
        %2895 = vmatmul.mubr.f32.gmra.mrb[0].mxu0 %v2825
        %v2896 = vpop.f32.mrb[0].mxu0
        %v2897 = vadd.f32 0.0, %v2896
        %v2898 = vpop.f32.mrb[0].mxu0
        %2899 = vdwg.mxu0
        %v2901 = vsel %vm2443, %v1218, 0
        %v2904 = vsel %vm2443, %v1794, 0
        %2906 = vmatprep.subr.mxu0 0.0
        %2907 = vmatpush1.xpose.msra.mxu0 %v2904
        %2908 = vmatprep.subr.mxu0 0.0
        %2909 = vmatpush1.xpose.msra.mxu0 0.0
        %2910 = vmatprep.subr.mxu0 0.0
        %2911 = vmatpush1.xpose.msra.mxu0 0.0
        %2912 = vmatprep.subr.mxu0 0.0
        %2913 = vmatpush1.xpose.msra.mxu0 0.0
        %2914 = vmatprep.subr.mxu0 0.0
        %2915 = vmatpush1.xpose.msra.mxu0 0.0
        %2916 = vmatprep.subr.mxu0 0.0
        %2917 = vmatpush1.xpose.msra.mxu0 0.0
        %2918 = vmatprep.subr.mxu0 0.0
        %2919 = vmatpush1.xpose.msra.mxu0 0.0
        %2920 = vmatprep.subr.mxu0 0.0
        %2921 = vmatpush1.xpose.msra.mxu0 0.0
        %2922 = vmatprep.subr.mxu0 0.0
        %2923 = vmatpush1.xpose.msra.mxu0 0.0
        %2924 = vmatprep.subr.mxu0 0.0
        %2925 = vmatpush1.xpose.msra.mxu0 0.0
        %2926 = vmatprep.subr.mxu0 0.0
        %2927 = vmatpush1.xpose.msra.mxu0 0.0
        %2928 = vmatprep.subr.mxu0 0.0
        %2929 = vmatpush1.xpose.msra.mxu0 0.0
        %2930 = vmatprep.subr.mxu0 0.0
        %2931 = vmatpush1.xpose.msra.mxu0 0.0
        %2932 = vmatprep.subr.mxu0 0.0
        %2933 = vmatpush1.xpose.msra.mxu0 0.0
        %2934 = vmatprep.subr.mxu0 0.0
        %2935 = vmatpush1.xpose.msra.mxu0 0.0
        %2936 = vmatprep.subr.mxu0 0.0
        %2937 = vmatpush1.xpose.msra.mxu0 0.0
        %2938 = vmatprep.subr.mxu0 0.0
        %2939 = vmatpush1.xpose.msra.mxu0 0.0
        %2940 = vmatprep.subr.mxu0 0.0
        %2941 = vmatpush1.xpose.msra.mxu0 0.0
        %2942 = vmatprep.subr.mxu0 0.0
        %2943 = vmatpush1.xpose.msra.mxu0 0.0
        %2944 = vmatprep.subr.mxu0 0.0
        %2945 = vmatpush1.xpose.msra.mxu0 0.0
        %2946 = vmatprep.subr.mxu0 0.0
        %2947 = vmatpush1.xpose.msra.mxu0 0.0
        %2948 = vmatprep.subr.mxu0 0.0
        %2949 = vmatpush1.xpose.msra.mxu0 0.0
        %2950 = vmatprep.subr.mxu0 0.0
        %2951 = vmatpush1.xpose.msra.mxu0 0.0
        %2952 = vmatprep.subr.mxu0 0.0
        %2953 = vmatpush1.xpose.msra.mxu0 0.0
        %2954 = vmatprep.subr.mxu0 0.0
        %2955 = vmatpush1.xpose.msra.mxu0 0.0
        %2956 = vmatprep.subr.mxu0 0.0
        %2957 = vmatpush1.xpose.msra.mxu0 0.0
        %2958 = vmatprep.subr.mxu0 0.0
        %2959 = vmatpush1.xpose.msra.mxu0 0.0
        %2960 = vmatprep.subr.mxu0 0.0
        %2961 = vmatpush1.xpose.msra.mxu0 0.0
        %2962 = vmatprep.subr.mxu0 0.0
        %2963 = vmatpush1.xpose.msra.mxu0 0.0
        %2964 = vmatprep.subr.mxu0 0.0
        %2965 = vmatpush1.xpose.msra.mxu0 0.0
        %2966 = vmatprep.subr.mxu0 0.0
        %2967 = vmatpush1.xpose.msra.mxu0 0.0
        %2968 = vmatprep.subr.mxu0 0.0
        %2969 = vmatpush1.xpose.msra.mxu0 0.0
        %2970 = vmatprep.mubr.f32.mxu0 0.0
        %2971 = vmatmul.mubr.f32.gmra.mrb[0].mxu0 %v2901
        %v2972 = vpop.f32.mrb[0].mxu0
        %v2973 = vadd.f32 0.0, %v2972
        %v2974 = vpop.f32.mrb[0].mxu0
        %2975 = vdwg.mxu0
        %v2977 = vsel %vm2443, %v1288, 0
        %v2980 = vsel %vm2443, %v1864, 0
        %2982 = vmatprep.subr.mxu0 0.0
        %2983 = vmatpush1.xpose.msra.mxu0 %v2980
        %2984 = vmatprep.subr.mxu0 0.0
        %2985 = vmatpush1.xpose.msra.mxu0 0.0
        %2986 = vmatprep.subr.mxu0 0.0
        %2987 = vmatpush1.xpose.msra.mxu0 0.0
        %2988 = vmatprep.subr.mxu0 0.0
        %2989 = vmatpush1.xpose.msra.mxu0 0.0
        %2990 = vmatprep.subr.mxu0 0.0
        %2991 = vmatpush1.xpose.msra.mxu0 0.0
        %2992 = vmatprep.subr.mxu0 0.0
        %2993 = vmatpush1.xpose.msra.mxu0 0.0
        %2994 = vmatprep.subr.mxu0 0.0
        %2995 = vmatpush1.xpose.msra.mxu0 0.0
        %2996 = vmatprep.subr.mxu0 0.0
        %2997 = vmatpush1.xpose.msra.mxu0 0.0
        %2998 = vmatprep.subr.mxu0 0.0
        %2999 = vmatpush1.xpose.msra.mxu0 0.0
        %3000 = vmatprep.subr.mxu0 0.0
        %3001 = vmatpush1.xpose.msra.mxu0 0.0
        %3002 = vmatprep.subr.mxu0 0.0
        %3003 = vmatpush1.xpose.msra.mxu0 0.0
        %3004 = vmatprep.subr.mxu0 0.0
        %3005 = vmatpush1.xpose.msra.mxu0 0.0
        %3006 = vmatprep.subr.mxu0 0.0
        %3007 = vmatpush1.xpose.msra.mxu0 0.0
        %3008 = vmatprep.subr.mxu0 0.0
        %3009 = vmatpush1.xpose.msra.mxu0 0.0
        %3010 = vmatprep.subr.mxu0 0.0
        %3011 = vmatpush1.xpose.msra.mxu0 0.0
        %3012 = vmatprep.subr.mxu0 0.0
        %3013 = vmatpush1.xpose.msra.mxu0 0.0
        %3014 = vmatprep.subr.mxu0 0.0
        %3015 = vmatpush1.xpose.msra.mxu0 0.0
        %3016 = vmatprep.subr.mxu0 0.0
        %3017 = vmatpush1.xpose.msra.mxu0 0.0
        %3018 = vmatprep.subr.mxu0 0.0
        %3019 = vmatpush1.xpose.msra.mxu0 0.0
        %3020 = vmatprep.subr.mxu0 0.0
        %3021 = vmatpush1.xpose.msra.mxu0 0.0
        %3022 = vmatprep.subr.mxu0 0.0
        %3023 = vmatpush1.xpose.msra.mxu0 0.0
        %3024 = vmatprep.subr.mxu0 0.0
        %3025 = vmatpush1.xpose.msra.mxu0 0.0
        %3026 = vmatprep.subr.mxu0 0.0
        %3027 = vmatpush1.xpose.msra.mxu0 0.0
        %3028 = vmatprep.subr.mxu0 0.0
        %3029 = vmatpush1.xpose.msra.mxu0 0.0
        %3030 = vmatprep.subr.mxu0 0.0
        %3031 = vmatpush1.xpose.msra.mxu0 0.0
        %3032 = vmatprep.subr.mxu0 0.0
        %3033 = vmatpush1.xpose.msra.mxu0 0.0
        %3034 = vmatprep.subr.mxu0 0.0
        %3035 = vmatpush1.xpose.msra.mxu0 0.0
        %3036 = vmatprep.subr.mxu0 0.0
        %3037 = vmatpush1.xpose.msra.mxu0 0.0
        %3038 = vmatprep.subr.mxu0 0.0
        %3039 = vmatpush1.xpose.msra.mxu0 0.0
        %3040 = vmatprep.subr.mxu0 0.0
        %3041 = vmatpush1.xpose.msra.mxu0 0.0
        %3042 = vmatprep.subr.mxu0 0.0
        %3043 = vmatpush1.xpose.msra.mxu0 0.0
        %3044 = vmatprep.subr.mxu0 0.0
        %3045 = vmatpush1.xpose.msra.mxu0 0.0
        %3046 = vmatprep.mubr.f32.mxu0 0.0
        %3047 = vmatmul.mubr.f32.gmra.mrb[0].mxu0 %v2977
        %v3048 = vpop.f32.mrb[0].mxu0
        %v3049 = vadd.f32 0.0, %v3048
        %v3050 = vpop.f32.mrb[0].mxu0
        %3051 = vdwg.mxu0
        %v3052 = vsel %vm2443, %v2517, -inf
        %3053 = vmax.xlane.f32.xlu0 %v3052
        %v3054 = vpop.xlane.xlu0 %3053
        %v3055 = vsel %vm2443, %v2593, -inf
        %3056 = vmax.xlane.f32.xlu0 %v3055
        %v3057 = vpop.xlane.xlu0 %3056
        %v3058 = vsel %vm2443, %v2669, -inf
        %3059 = vmax.xlane.f32.xlu0 %v3058
        %v3060 = vpop.xlane.xlu0 %3059
        %v3061 = vsel %vm2443, %v2745, -inf
        %3062 = vmax.xlane.f32.xlu0 %v3061
        %v3063 = vpop.xlane.xlu0 %3062
        %v3064 = vsel %vm2443, %v2821, -inf
        %3065 = vmax.xlane.f32.xlu0 %v3064
        %v3066 = vpop.xlane.xlu0 %3065
        %v3067 = vsel %vm2443, %v2897, -inf
        %3068 = vmax.xlane.f32.xlu0 %v3067
        %v3069 = vpop.xlane.xlu0 %3068
        %v3070 = vsel %vm2443, %v2973, -inf
        %3071 = vmax.xlane.f32.xlu0 %v3070
        %v3072 = vpop.xlane.xlu0 %3071
        %v3073 = vsel %vm2443, %v3049, -inf
        %3074 = vmax.xlane.f32.xlu0 %v3073
        %v3075 = vpop.xlane.xlu0 %3074
        %v3076 = vsub.f32 %v2517, %v3054
        %v3077 = vsub.f32 %v2593, %v3057
        %v3078 = vsub.f32 %v2669, %v3060
        %v3079 = vsub.f32 %v2745, %v3063
        %v3080 = vsub.f32 %v2821, %v3066
        %v3081 = vsub.f32 %v2897, %v3069
        %v3082 = vsub.f32 %v2973, %v3072
        %v3083 = vsub.f32 %v3049, %v3075
        %v3084 = vmul.f32 %v3076, 1.442695
        %v3085 = vpow.pop %v3084
        %v3086 = vmul.f32 %v3077, 1.442695
        %v3087 = vpow.pop %v3086
        %v3088 = vmul.f32 %v3078, 1.442695
        %v3089 = vpow.pop %v3088
        %v3090 = vmul.f32 %v3079, 1.442695
        %v3091 = vpow.pop %v3090
        %v3092 = vmul.f32 %v3080, 1.442695
        %v3093 = vpow.pop %v3092
        %v3094 = vmul.f32 %v3081, 1.442695
        %v3095 = vpow.pop %v3094
        %v3096 = vmul.f32 %v3082, 1.442695
        %v3097 = vpow.pop %v3096
        %v3098 = vmul.f32 %v3083, 1.442695
        %v3099 = vpow.pop %v3098
        %v3100 = vsel %vm2443, %v3085, 0.0
        %3101 = vadd.xlane.f32.xlu0 %v3100
        %v3102 = vpop.xlane.xlu0 %3101
        %v3103 = vsel %vm2443, %v3087, 0.0
        %3104 = vadd.xlane.f32.xlu0 %v3103
        %v3105 = vpop.xlane.xlu0 %3104
        %v3106 = vsel %vm2443, %v3089, 0.0
        %3107 = vadd.xlane.f32.xlu0 %v3106
        %v3108 = vpop.xlane.xlu0 %3107
        %v3109 = vsel %vm2443, %v3091, 0.0
        %3110 = vadd.xlane.f32.xlu0 %v3109
        %v3111 = vpop.xlane.xlu0 %3110
        %v3112 = vsel %vm2443, %v3093, 0.0
        %3113 = vadd.xlane.f32.xlu0 %v3112
        %v3114 = vpop.xlane.xlu0 %3113
        %v3115 = vsel %vm2443, %v3095, 0.0
        %3116 = vadd.xlane.f32.xlu0 %v3115
        %v3117 = vpop.xlane.xlu0 %3116
        %v3118 = vsel %vm2443, %v3097, 0.0
        %3119 = vadd.xlane.f32.xlu0 %v3118
        %v3120 = vpop.xlane.xlu0 %3119
        %v3121 = vsel %vm2443, %v3099, 0.0
        %3122 = vadd.xlane.f32.xlu0 %v3121
        %v3123 = vpop.xlane.xlu0 %3122
        %v3124 = vrcp.pop %v3102
        %v3125 = vrcp.pop %v3105
        %v3126 = vrcp.pop %v3108
        %v3127 = vrcp.pop %v3111
        %v3128 = vrcp.pop %v3114
        %v3129 = vrcp.pop %v3117
        %v3130 = vrcp.pop %v3120
        %v3131 = vrcp.pop %v3123
        %v3132 = vmul.f32 %v3085, %v3124
        %v3133 = vmul.f32 %v3087, %v3125
        %v3134 = vmul.f32 %v3089, %v3126
        %v3135 = vmul.f32 %v3091, %v3127
        %v3136 = vmul.f32 %v3093, %v3128
        %v3137 = vmul.f32 %v3095, %v3129
        %v3138 = vmul.f32 %v3097, %v3130
        %v3139 = vmul.f32 %v3099, %v3131
        %v3141 = vsel %vm2443, %v3132, 0
        %3143 = vmatprep.subr.mxu0 0.0
        %3144 = vmatpush1.msra.mxu0 %v1950
        %3145 = vmatprep.subr.mxu0 0.0
        %3146 = vmatpush1.msra.mxu0 0.0
        %3147 = vmatprep.subr.mxu0 0.0
        %3148 = vmatpush1.msra.mxu0 0.0
        %3149 = vmatprep.subr.mxu0 0.0
        %3150 = vmatpush1.msra.mxu0 0.0
        %3151 = vmatprep.subr.mxu0 0.0
        %3152 = vmatpush1.msra.mxu0 0.0
        %3153 = vmatprep.subr.mxu0 0.0
        %3154 = vmatpush1.msra.mxu0 0.0
        %3155 = vmatprep.subr.mxu0 0.0
        %3156 = vmatpush1.msra.mxu0 0.0
        %3157 = vmatprep.subr.mxu0 0.0
        %3158 = vmatpush1.msra.mxu0 0.0
        %3159 = vmatprep.subr.mxu0 0.0
        %3160 = vmatpush1.msra.mxu0 0.0
        %3161 = vmatprep.subr.mxu0 0.0
        %3162 = vmatpush1.msra.mxu0 0.0
        %3163 = vmatprep.subr.mxu0 0.0
        %3164 = vmatpush1.msra.mxu0 0.0
        %3165 = vmatprep.subr.mxu0 0.0
        %3166 = vmatpush1.msra.mxu0 0.0
        %3167 = vmatprep.subr.mxu0 0.0
        %3168 = vmatpush1.msra.mxu0 0.0
        %3169 = vmatprep.subr.mxu0 0.0
        %3170 = vmatpush1.msra.mxu0 0.0
        %3171 = vmatprep.subr.mxu0 0.0
        %3172 = vmatpush1.msra.mxu0 0.0
        %3173 = vmatprep.subr.mxu0 0.0
        %3174 = vmatpush1.msra.mxu0 0.0
        %3175 = vmatprep.subr.mxu0 0.0
        %3176 = vmatpush1.msra.mxu0 0.0
        %3177 = vmatprep.subr.mxu0 0.0
        %3178 = vmatpush1.msra.mxu0 0.0
        %3179 = vmatprep.subr.mxu0 0.0
        %3180 = vmatpush1.msra.mxu0 0.0
        %3181 = vmatprep.subr.mxu0 0.0
        %3182 = vmatpush1.msra.mxu0 0.0
        %3183 = vmatprep.subr.mxu0 0.0
        %3184 = vmatpush1.msra.mxu0 0.0
        %3185 = vmatprep.subr.mxu0 0.0
        %3186 = vmatpush1.msra.mxu0 0.0
        %3187 = vmatprep.subr.mxu0 0.0
        %3188 = vmatpush1.msra.mxu0 0.0
        %3189 = vmatprep.subr.mxu0 0.0
        %3190 = vmatpush1.msra.mxu0 0.0
        %3191 = vmatprep.subr.mxu0 0.0
        %3192 = vmatpush1.msra.mxu0 0.0
        %3193 = vmatprep.subr.mxu0 0.0
        %3194 = vmatpush1.msra.mxu0 0.0
        %3195 = vmatprep.subr.mxu0 0.0
        %3196 = vmatpush1.msra.mxu0 0.0
        %3197 = vmatprep.subr.mxu0 0.0
        %3198 = vmatpush1.msra.mxu0 0.0
        %3199 = vmatprep.subr.mxu0 0.0
        %3200 = vmatpush1.msra.mxu0 0.0
        %3201 = vmatprep.subr.mxu0 0.0
        %3202 = vmatpush1.msra.mxu0 0.0
        %3203 = vmatprep.subr.mxu0 0.0
        %3204 = vmatpush1.msra.mxu0 0.0
        %3205 = vmatprep.subr.mxu0 0.0
        %3206 = vmatpush1.msra.mxu0 0.0
        %3207 = vmatprep.mubr.f32.mxu0 0.0
        %3208 = vmatmul.mubr.f32.gmra.mrb[0].mxu0 %v3141
        %v3209 = vpop.f32.mrb[0].mxu0
        %v3210 = vadd.f32 0.0, %v3209
        %v3211 = vpop.f32.mrb[0].mxu0
        %3212 = vdwg.mxu0
        %v3214 = vsel %vm2443, %v3133, 0
        %3216 = vmatprep.subr.mxu0 0.0
        %3217 = vmatpush1.msra.mxu0 %v2020
        %3218 = vmatprep.subr.mxu0 0.0
        %3219 = vmatpush1.msra.mxu0 0.0
        %3220 = vmatprep.subr.mxu0 0.0
        %3221 = vmatpush1.msra.mxu0 0.0
        %3222 = vmatprep.subr.mxu0 0.0
        %3223 = vmatpush1.msra.mxu0 0.0
        %3224 = vmatprep.subr.mxu0 0.0
        %3225 = vmatpush1.msra.mxu0 0.0
        %3226 = vmatprep.subr.mxu0 0.0
        %3227 = vmatpush1.msra.mxu0 0.0
        %3228 = vmatprep.subr.mxu0 0.0
        %3229 = vmatpush1.msra.mxu0 0.0
        %3230 = vmatprep.subr.mxu0 0.0
        %3231 = vmatpush1.msra.mxu0 0.0
        %3232 = vmatprep.subr.mxu0 0.0
        %3233 = vmatpush1.msra.mxu0 0.0
        %3234 = vmatprep.subr.mxu0 0.0
        %3235 = vmatpush1.msra.mxu0 0.0
        %3236 = vmatprep.subr.mxu0 0.0
        %3237 = vmatpush1.msra.mxu0 0.0
        %3238 = vmatprep.subr.mxu0 0.0
        %3239 = vmatpush1.msra.mxu0 0.0
        %3240 = vmatprep.subr.mxu0 0.0
        %3241 = vmatpush1.msra.mxu0 0.0
        %3242 = vmatprep.subr.mxu0 0.0
        %3243 = vmatpush1.msra.mxu0 0.0
        %3244 = vmatprep.subr.mxu0 0.0
        %3245 = vmatpush1.msra.mxu0 0.0
        %3246 = vmatprep.subr.mxu0 0.0
        %3247 = vmatpush1.msra.mxu0 0.0
        %3248 = vmatprep.subr.mxu0 0.0
        %3249 = vmatpush1.msra.mxu0 0.0
        %3250 = vmatprep.subr.mxu0 0.0
        %3251 = vmatpush1.msra.mxu0 0.0
        %3252 = vmatprep.subr.mxu0 0.0
        %3253 = vmatpush1.msra.mxu0 0.0
        %3254 = vmatprep.subr.mxu0 0.0
        %3255 = vmatpush1.msra.mxu0 0.0
        %3256 = vmatprep.subr.mxu0 0.0
        %3257 = vmatpush1.msra.mxu0 0.0
        %3258 = vmatprep.subr.mxu0 0.0
        %3259 = vmatpush1.msra.mxu0 0.0
        %3260 = vmatprep.subr.mxu0 0.0
        %3261 = vmatpush1.msra.mxu0 0.0
        %3262 = vmatprep.subr.mxu0 0.0
        %3263 = vmatpush1.msra.mxu0 0.0
        %3264 = vmatprep.subr.mxu0 0.0
        %3265 = vmatpush1.msra.mxu0 0.0
        %3266 = vmatprep.subr.mxu0 0.0
        %3267 = vmatpush1.msra.mxu0 0.0
        %3268 = vmatprep.subr.mxu0 0.0
        %3269 = vmatpush1.msra.mxu0 0.0
        %3270 = vmatprep.subr.mxu0 0.0
        %3271 = vmatpush1.msra.mxu0 0.0
        %3272 = vmatprep.subr.mxu0 0.0
        %3273 = vmatpush1.msra.mxu0 0.0
        %3274 = vmatprep.subr.mxu0 0.0
        %3275 = vmatpush1.msra.mxu0 0.0
        %3276 = vmatprep.subr.mxu0 0.0
        %3277 = vmatpush1.msra.mxu0 0.0
        %3278 = vmatprep.subr.mxu0 0.0
        %3279 = vmatpush1.msra.mxu0 0.0
        %3280 = vmatprep.mubr.f32.mxu0 0.0
        %3281 = vmatmul.mubr.f32.gmra.mrb[0].mxu0 %v3214
        %v3282 = vpop.f32.mrb[0].mxu0
        %v3283 = vadd.f32 0.0, %v3282
        %v3284 = vpop.f32.mrb[0].mxu0
        %3285 = vdwg.mxu0
        %v3287 = vsel %vm2443, %v3134, 0
        %3289 = vmatprep.subr.mxu0 0.0
        %3290 = vmatpush1.msra.mxu0 %v2090
        %3291 = vmatprep.subr.mxu0 0.0
        %3292 = vmatpush1.msra.mxu0 0.0
        %3293 = vmatprep.subr.mxu0 0.0
        %3294 = vmatpush1.msra.mxu0 0.0
        %3295 = vmatprep.subr.mxu0 0.0
        %3296 = vmatpush1.msra.mxu0 0.0
        %3297 = vmatprep.subr.mxu0 0.0
        %3298 = vmatpush1.msra.mxu0 0.0
        %3299 = vmatprep.subr.mxu0 0.0
        %3300 = vmatpush1.msra.mxu0 0.0
        %3301 = vmatprep.subr.mxu0 0.0
        %3302 = vmatpush1.msra.mxu0 0.0
        %3303 = vmatprep.subr.mxu0 0.0
        %3304 = vmatpush1.msra.mxu0 0.0
        %3305 = vmatprep.subr.mxu0 0.0
        %3306 = vmatpush1.msra.mxu0 0.0
        %3307 = vmatprep.subr.mxu0 0.0
        %3308 = vmatpush1.msra.mxu0 0.0
        %3309 = vmatprep.subr.mxu0 0.0
        %3310 = vmatpush1.msra.mxu0 0.0
        %3311 = vmatprep.subr.mxu0 0.0
        %3312 = vmatpush1.msra.mxu0 0.0
        %3313 = vmatprep.subr.mxu0 0.0
        %3314 = vmatpush1.msra.mxu0 0.0
        %3315 = vmatprep.subr.mxu0 0.0
        %3316 = vmatpush1.msra.mxu0 0.0
        %3317 = vmatprep.subr.mxu0 0.0
        %3318 = vmatpush1.msra.mxu0 0.0
        %3319 = vmatprep.subr.mxu0 0.0
        %3320 = vmatpush1.msra.mxu0 0.0
        %3321 = vmatprep.subr.mxu0 0.0
        %3322 = vmatpush1.msra.mxu0 0.0
        %3323 = vmatprep.subr.mxu0 0.0
        %3324 = vmatpush1.msra.mxu0 0.0
        %3325 = vmatprep.subr.mxu0 0.0
        %3326 = vmatpush1.msra.mxu0 0.0
        %3327 = vmatprep.subr.mxu0 0.0
        %3328 = vmatpush1.msra.mxu0 0.0
        %3329 = vmatprep.subr.mxu0 0.0
        %3330 = vmatpush1.msra.mxu0 0.0
        %3331 = vmatprep.subr.mxu0 0.0
        %3332 = vmatpush1.msra.mxu0 0.0
        %3333 = vmatprep.subr.mxu0 0.0
        %3334 = vmatpush1.msra.mxu0 0.0
        %3335 = vmatprep.subr.mxu0 0.0
        %3336 = vmatpush1.msra.mxu0 0.0
        %3337 = vmatprep.subr.mxu0 0.0
        %3338 = vmatpush1.msra.mxu0 0.0
        %3339 = vmatprep.subr.mxu0 0.0
        %3340 = vmatpush1.msra.mxu0 0.0
        %3341 = vmatprep.subr.mxu0 0.0
        %3342 = vmatpush1.msra.mxu0 0.0
        %3343 = vmatprep.subr.mxu0 0.0
        %3344 = vmatpush1.msra.mxu0 0.0
        %3345 = vmatprep.subr.mxu0 0.0
        %3346 = vmatpush1.msra.mxu0 0.0
        %3347 = vmatprep.subr.mxu0 0.0
        %3348 = vmatpush1.msra.mxu0 0.0
        %3349 = vmatprep.subr.mxu0 0.0
        %3350 = vmatpush1.msra.mxu0 0.0
        %3351 = vmatprep.subr.mxu0 0.0
        %3352 = vmatpush1.msra.mxu0 0.0
        %3353 = vmatprep.mubr.f32.mxu0 0.0
        %3354 = vmatmul.mubr.f32.gmra.mrb[0].mxu0 %v3287
        %v3355 = vpop.f32.mrb[0].mxu0
        %v3356 = vadd.f32 0.0, %v3355
        %v3357 = vpop.f32.mrb[0].mxu0
        %3358 = vdwg.mxu0
        %v3360 = vsel %vm2443, %v3135, 0
        %3362 = vmatprep.subr.mxu0 0.0
        %3363 = vmatpush1.msra.mxu0 %v2160
        %3364 = vmatprep.subr.mxu0 0.0
        %3365 = vmatpush1.msra.mxu0 0.0
        %3366 = vmatprep.subr.mxu0 0.0
        %3367 = vmatpush1.msra.mxu0 0.0
        %3368 = vmatprep.subr.mxu0 0.0
        %3369 = vmatpush1.msra.mxu0 0.0
        %3370 = vmatprep.subr.mxu0 0.0
        %3371 = vmatpush1.msra.mxu0 0.0
        %3372 = vmatprep.subr.mxu0 0.0
        %3373 = vmatpush1.msra.mxu0 0.0
        %3374 = vmatprep.subr.mxu0 0.0
        %3375 = vmatpush1.msra.mxu0 0.0
        %3376 = vmatprep.subr.mxu0 0.0
        %3377 = vmatpush1.msra.mxu0 0.0
        %3378 = vmatprep.subr.mxu0 0.0
        %3379 = vmatpush1.msra.mxu0 0.0
        %3380 = vmatprep.subr.mxu0 0.0
        %3381 = vmatpush1.msra.mxu0 0.0
        %3382 = vmatprep.subr.mxu0 0.0
        %3383 = vmatpush1.msra.mxu0 0.0
        %3384 = vmatprep.subr.mxu0 0.0
        %3385 = vmatpush1.msra.mxu0 0.0
        %3386 = vmatprep.subr.mxu0 0.0
        %3387 = vmatpush1.msra.mxu0 0.0
        %3388 = vmatprep.subr.mxu0 0.0
        %3389 = vmatpush1.msra.mxu0 0.0
        %3390 = vmatprep.subr.mxu0 0.0
        %3391 = vmatpush1.msra.mxu0 0.0
        %3392 = vmatprep.subr.mxu0 0.0
        %3393 = vmatpush1.msra.mxu0 0.0
        %3394 = vmatprep.subr.mxu0 0.0
        %3395 = vmatpush1.msra.mxu0 0.0
        %3396 = vmatprep.subr.mxu0 0.0
        %3397 = vmatpush1.msra.mxu0 0.0
        %3398 = vmatprep.subr.mxu0 0.0
        %3399 = vmatpush1.msra.mxu0 0.0
        %3400 = vmatprep.subr.mxu0 0.0
        %3401 = vmatpush1.msra.mxu0 0.0
        %3402 = vmatprep.subr.mxu0 0.0
        %3403 = vmatpush1.msra.mxu0 0.0
        %3404 = vmatprep.subr.mxu0 0.0
        %3405 = vmatpush1.msra.mxu0 0.0
        %3406 = vmatprep.subr.mxu0 0.0
        %3407 = vmatpush1.msra.mxu0 0.0
        %3408 = vmatprep.subr.mxu0 0.0
        %3409 = vmatpush1.msra.mxu0 0.0
        %3410 = vmatprep.subr.mxu0 0.0
        %3411 = vmatpush1.msra.mxu0 0.0
        %3412 = vmatprep.subr.mxu0 0.0
        %3413 = vmatpush1.msra.mxu0 0.0
        %3414 = vmatprep.subr.mxu0 0.0
        %3415 = vmatpush1.msra.mxu0 0.0
        %3416 = vmatprep.subr.mxu0 0.0
        %3417 = vmatpush1.msra.mxu0 0.0
        %3418 = vmatprep.subr.mxu0 0.0
        %3419 = vmatpush1.msra.mxu0 0.0
        %3420 = vmatprep.subr.mxu0 0.0
        %3421 = vmatpush1.msra.mxu0 0.0
        %3422 = vmatprep.subr.mxu0 0.0
        %3423 = vmatpush1.msra.mxu0 0.0
        %3424 = vmatprep.subr.mxu0 0.0
        %3425 = vmatpush1.msra.mxu0 0.0
        %3426 = vmatprep.mubr.f32.mxu0 0.0
        %3427 = vmatmul.mubr.f32.gmra.mrb[0].mxu0 %v3360
        %v3428 = vpop.f32.mrb[0].mxu0
        %v3429 = vadd.f32 0.0, %v3428
        %v3430 = vpop.f32.mrb[0].mxu0
        %3431 = vdwg.mxu0
        %v3433 = vsel %vm2443, %v3136, 0
        %3435 = vmatprep.subr.mxu0 0.0
        %3436 = vmatpush1.msra.mxu0 %v2230
        %3437 = vmatprep.subr.mxu0 0.0
        %3438 = vmatpush1.msra.mxu0 0.0
        %3439 = vmatprep.subr.mxu0 0.0
        %3440 = vmatpush1.msra.mxu0 0.0
        %3441 = vmatprep.subr.mxu0 0.0
        %3442 = vmatpush1.msra.mxu0 0.0
        %3443 = vmatprep.subr.mxu0 0.0
        %3444 = vmatpush1.msra.mxu0 0.0
        %3445 = vmatprep.subr.mxu0 0.0
        %3446 = vmatpush1.msra.mxu0 0.0
        %3447 = vmatprep.subr.mxu0 0.0
        %3448 = vmatpush1.msra.mxu0 0.0
        %3449 = vmatprep.subr.mxu0 0.0
        %3450 = vmatpush1.msra.mxu0 0.0
        %3451 = vmatprep.subr.mxu0 0.0
        %3452 = vmatpush1.msra.mxu0 0.0
        %3453 = vmatprep.subr.mxu0 0.0
        %3454 = vmatpush1.msra.mxu0 0.0
        %3455 = vmatprep.subr.mxu0 0.0
        %3456 = vmatpush1.msra.mxu0 0.0
        %3457 = vmatprep.subr.mxu0 0.0
        %3458 = vmatpush1.msra.mxu0 0.0
        %3459 = vmatprep.subr.mxu0 0.0
        %3460 = vmatpush1.msra.mxu0 0.0
        %3461 = vmatprep.subr.mxu0 0.0
        %3462 = vmatpush1.msra.mxu0 0.0
        %3463 = vmatprep.subr.mxu0 0.0
        %3464 = vmatpush1.msra.mxu0 0.0
        %3465 = vmatprep.subr.mxu0 0.0
        %3466 = vmatpush1.msra.mxu0 0.0
        %3467 = vmatprep.subr.mxu0 0.0
        %3468 = vmatpush1.msra.mxu0 0.0
        %3469 = vmatprep.subr.mxu0 0.0
        %3470 = vmatpush1.msra.mxu0 0.0
        %3471 = vmatprep.subr.mxu0 0.0
        %3472 = vmatpush1.msra.mxu0 0.0
        %3473 = vmatprep.subr.mxu0 0.0
        %3474 = vmatpush1.msra.mxu0 0.0
        %3475 = vmatprep.subr.mxu0 0.0
        %3476 = vmatpush1.msra.mxu0 0.0
        %3477 = vmatprep.subr.mxu0 0.0
        %3478 = vmatpush1.msra.mxu0 0.0
        %3479 = vmatprep.subr.mxu0 0.0
        %3480 = vmatpush1.msra.mxu0 0.0
        %3481 = vmatprep.subr.mxu0 0.0
        %3482 = vmatpush1.msra.mxu0 0.0
        %3483 = vmatprep.subr.mxu0 0.0
        %3484 = vmatpush1.msra.mxu0 0.0
        %3485 = vmatprep.subr.mxu0 0.0
        %3486 = vmatpush1.msra.mxu0 0.0
        %3487 = vmatprep.subr.mxu0 0.0
        %3488 = vmatpush1.msra.mxu0 0.0
        %3489 = vmatprep.subr.mxu0 0.0
        %3490 = vmatpush1.msra.mxu0 0.0
        %3491 = vmatprep.subr.mxu0 0.0
        %3492 = vmatpush1.msra.mxu0 0.0
        %3493 = vmatprep.subr.mxu0 0.0
        %3494 = vmatpush1.msra.mxu0 0.0
        %3495 = vmatprep.subr.mxu0 0.0
        %3496 = vmatpush1.msra.mxu0 0.0
        %3497 = vmatprep.subr.mxu0 0.0
        %3498 = vmatpush1.msra.mxu0 0.0
        %3499 = vmatprep.mubr.f32.mxu0 0.0
        %3500 = vmatmul.mubr.f32.gmra.mrb[0].mxu0 %v3433
        %v3501 = vpop.f32.mrb[0].mxu0
        %v3502 = vadd.f32 0.0, %v3501
        %v3503 = vpop.f32.mrb[0].mxu0
        %3504 = vdwg.mxu0
        %v3506 = vsel %vm2443, %v3137, 0
        %3508 = vmatprep.subr.mxu0 0.0
        %3509 = vmatpush1.msra.mxu0 %v2300
        %3510 = vmatprep.subr.mxu0 0.0
        %3511 = vmatpush1.msra.mxu0 0.0
        %3512 = vmatprep.subr.mxu0 0.0
        %3513 = vmatpush1.msra.mxu0 0.0
        %3514 = vmatprep.subr.mxu0 0.0
        %3515 = vmatpush1.msra.mxu0 0.0
        %3516 = vmatprep.subr.mxu0 0.0
        %3517 = vmatpush1.msra.mxu0 0.0
        %3518 = vmatprep.subr.mxu0 0.0
        %3519 = vmatpush1.msra.mxu0 0.0
        %3520 = vmatprep.subr.mxu0 0.0
        %3521 = vmatpush1.msra.mxu0 0.0
        %3522 = vmatprep.subr.mxu0 0.0
        %3523 = vmatpush1.msra.mxu0 0.0
        %3524 = vmatprep.subr.mxu0 0.0
        %3525 = vmatpush1.msra.mxu0 0.0
        %3526 = vmatprep.subr.mxu0 0.0
        %3527 = vmatpush1.msra.mxu0 0.0
        %3528 = vmatprep.subr.mxu0 0.0
        %3529 = vmatpush1.msra.mxu0 0.0
        %3530 = vmatprep.subr.mxu0 0.0
        %3531 = vmatpush1.msra.mxu0 0.0
        %3532 = vmatprep.subr.mxu0 0.0
        %3533 = vmatpush1.msra.mxu0 0.0
        %3534 = vmatprep.subr.mxu0 0.0
        %3535 = vmatpush1.msra.mxu0 0.0
        %3536 = vmatprep.subr.mxu0 0.0
        %3537 = vmatpush1.msra.mxu0 0.0
        %3538 = vmatprep.subr.mxu0 0.0
        %3539 = vmatpush1.msra.mxu0 0.0
        %3540 = vmatprep.subr.mxu0 0.0
        %3541 = vmatpush1.msra.mxu0 0.0
        %3542 = vmatprep.subr.mxu0 0.0
        %3543 = vmatpush1.msra.mxu0 0.0
        %3544 = vmatprep.subr.mxu0 0.0
        %3545 = vmatpush1.msra.mxu0 0.0
        %3546 = vmatprep.subr.mxu0 0.0
        %3547 = vmatpush1.msra.mxu0 0.0
        %3548 = vmatprep.subr.mxu0 0.0
        %3549 = vmatpush1.msra.mxu0 0.0
        %3550 = vmatprep.subr.mxu0 0.0
        %3551 = vmatpush1.msra.mxu0 0.0
        %3552 = vmatprep.subr.mxu0 0.0
        %3553 = vmatpush1.msra.mxu0 0.0
        %3554 = vmatprep.subr.mxu0 0.0
        %3555 = vmatpush1.msra.mxu0 0.0
        %3556 = vmatprep.subr.mxu0 0.0
        %3557 = vmatpush1.msra.mxu0 0.0
        %3558 = vmatprep.subr.mxu0 0.0
        %3559 = vmatpush1.msra.mxu0 0.0
        %3560 = vmatprep.subr.mxu0 0.0
        %3561 = vmatpush1.msra.mxu0 0.0
        %3562 = vmatprep.subr.mxu0 0.0
        %3563 = vmatpush1.msra.mxu0 0.0
        %3564 = vmatprep.subr.mxu0 0.0
        %3565 = vmatpush1.msra.mxu0 0.0
        %3566 = vmatprep.subr.mxu0 0.0
        %3567 = vmatpush1.msra.mxu0 0.0
        %3568 = vmatprep.subr.mxu0 0.0
        %3569 = vmatpush1.msra.mxu0 0.0
        %3570 = vmatprep.subr.mxu0 0.0
        %3571 = vmatpush1.msra.mxu0 0.0
        %3572 = vmatprep.mubr.f32.mxu0 0.0
        %3573 = vmatmul.mubr.f32.gmra.mrb[0].mxu0 %v3506
        %v3574 = vpop.f32.mrb[0].mxu0
        %v3575 = vadd.f32 0.0, %v3574
        %v3576 = vpop.f32.mrb[0].mxu0
        %3577 = vdwg.mxu0
        %v3579 = vsel %vm2443, %v3138, 0
        %3581 = vmatprep.subr.mxu0 0.0
        %3582 = vmatpush1.msra.mxu0 %v2370
        %3583 = vmatprep.subr.mxu0 0.0
        %3584 = vmatpush1.msra.mxu0 0.0
        %3585 = vmatprep.subr.mxu0 0.0
        %3586 = vmatpush1.msra.mxu0 0.0
        %3587 = vmatprep.subr.mxu0 0.0
        %3588 = vmatpush1.msra.mxu0 0.0
        %3589 = vmatprep.subr.mxu0 0.0
        %3590 = vmatpush1.msra.mxu0 0.0
        %3591 = vmatprep.subr.mxu0 0.0
        %3592 = vmatpush1.msra.mxu0 0.0
        %3593 = vmatprep.subr.mxu0 0.0
        %3594 = vmatpush1.msra.mxu0 0.0
        %3595 = vmatprep.subr.mxu0 0.0
        %3596 = vmatpush1.msra.mxu0 0.0
        %3597 = vmatprep.subr.mxu0 0.0
        %3598 = vmatpush1.msra.mxu0 0.0
        %3599 = vmatprep.subr.mxu0 0.0
        %3600 = vmatpush1.msra.mxu0 0.0
        %3601 = vmatprep.subr.mxu0 0.0
        %3602 = vmatpush1.msra.mxu0 0.0
        %3603 = vmatprep.subr.mxu0 0.0
        %3604 = vmatpush1.msra.mxu0 0.0
        %3605 = vmatprep.subr.mxu0 0.0
        %3606 = vmatpush1.msra.mxu0 0.0
        %3607 = vmatprep.subr.mxu0 0.0
        %3608 = vmatpush1.msra.mxu0 0.0
        %3609 = vmatprep.subr.mxu0 0.0
        %3610 = vmatpush1.msra.mxu0 0.0
        %3611 = vmatprep.subr.mxu0 0.0
        %3612 = vmatpush1.msra.mxu0 0.0
        %3613 = vmatprep.subr.mxu0 0.0
        %3614 = vmatpush1.msra.mxu0 0.0
        %3615 = vmatprep.subr.mxu0 0.0
        %3616 = vmatpush1.msra.mxu0 0.0
        %3617 = vmatprep.subr.mxu0 0.0
        %3618 = vmatpush1.msra.mxu0 0.0
        %3619 = vmatprep.subr.mxu0 0.0
        %3620 = vmatpush1.msra.mxu0 0.0
        %3621 = vmatprep.subr.mxu0 0.0
        %3622 = vmatpush1.msra.mxu0 0.0
        %3623 = vmatprep.subr.mxu0 0.0
        %3624 = vmatpush1.msra.mxu0 0.0
        %3625 = vmatprep.subr.mxu0 0.0
        %3626 = vmatpush1.msra.mxu0 0.0
        %3627 = vmatprep.subr.mxu0 0.0
        %3628 = vmatpush1.msra.mxu0 0.0
        %3629 = vmatprep.subr.mxu0 0.0
        %3630 = vmatpush1.msra.mxu0 0.0
        %3631 = vmatprep.subr.mxu0 0.0
        %3632 = vmatpush1.msra.mxu0 0.0
        %3633 = vmatprep.subr.mxu0 0.0
        %3634 = vmatpush1.msra.mxu0 0.0
        %3635 = vmatprep.subr.mxu0 0.0
        %3636 = vmatpush1.msra.mxu0 0.0
        %3637 = vmatprep.subr.mxu0 0.0
        %3638 = vmatpush1.msra.mxu0 0.0
        %3639 = vmatprep.subr.mxu0 0.0
        %3640 = vmatpush1.msra.mxu0 0.0
        %3641 = vmatprep.subr.mxu0 0.0
        %3642 = vmatpush1.msra.mxu0 0.0
        %3643 = vmatprep.subr.mxu0 0.0
        %3644 = vmatpush1.msra.mxu0 0.0
        %3645 = vmatprep.mubr.f32.mxu0 0.0
        %3646 = vmatmul.mubr.f32.gmra.mrb[0].mxu0 %v3579
        %v3647 = vpop.f32.mrb[0].mxu0
        %v3648 = vadd.f32 0.0, %v3647
        %v3649 = vpop.f32.mrb[0].mxu0
        %3650 = vdwg.mxu0
        %v3652 = vsel %vm2443, %v3139, 0
        %3654 = vmatprep.subr.mxu0 0.0
        %3655 = vmatpush1.msra.mxu0 %v2440
        %3656 = vmatprep.subr.mxu0 0.0
        %3657 = vmatpush1.msra.mxu0 0.0
        %3658 = vmatprep.subr.mxu0 0.0
        %3659 = vmatpush1.msra.mxu0 0.0
        %3660 = vmatprep.subr.mxu0 0.0
        %3661 = vmatpush1.msra.mxu0 0.0
        %3662 = vmatprep.subr.mxu0 0.0
        %3663 = vmatpush1.msra.mxu0 0.0
        %3664 = vmatprep.subr.mxu0 0.0
        %3665 = vmatpush1.msra.mxu0 0.0
        %3666 = vmatprep.subr.mxu0 0.0
        %3667 = vmatpush1.msra.mxu0 0.0
        %3668 = vmatprep.subr.mxu0 0.0
        %3669 = vmatpush1.msra.mxu0 0.0
        %3670 = vmatprep.subr.mxu0 0.0
        %3671 = vmatpush1.msra.mxu0 0.0
        %3672 = vmatprep.subr.mxu0 0.0
        %3673 = vmatpush1.msra.mxu0 0.0
        %3674 = vmatprep.subr.mxu0 0.0
        %3675 = vmatpush1.msra.mxu0 0.0
        %3676 = vmatprep.subr.mxu0 0.0
        %3677 = vmatpush1.msra.mxu0 0.0
        %3678 = vmatprep.subr.mxu0 0.0
        %3679 = vmatpush1.msra.mxu0 0.0
        %3680 = vmatprep.subr.mxu0 0.0
        %3681 = vmatpush1.msra.mxu0 0.0
        %3682 = vmatprep.subr.mxu0 0.0
        %3683 = vmatpush1.msra.mxu0 0.0
        %3684 = vmatprep.subr.mxu0 0.0
        %3685 = vmatpush1.msra.mxu0 0.0
        %3686 = vmatprep.subr.mxu0 0.0
        %3687 = vmatpush1.msra.mxu0 0.0
        %3688 = vmatprep.subr.mxu0 0.0
        %3689 = vmatpush1.msra.mxu0 0.0
        %3690 = vmatprep.subr.mxu0 0.0
        %3691 = vmatpush1.msra.mxu0 0.0
        %3692 = vmatprep.subr.mxu0 0.0
        %3693 = vmatpush1.msra.mxu0 0.0
        %3694 = vmatprep.subr.mxu0 0.0
        %3695 = vmatpush1.msra.mxu0 0.0
        %3696 = vmatprep.subr.mxu0 0.0
        %3697 = vmatpush1.msra.mxu0 0.0
        %3698 = vmatprep.subr.mxu0 0.0
        %3699 = vmatpush1.msra.mxu0 0.0
        %3700 = vmatprep.subr.mxu0 0.0
        %3701 = vmatpush1.msra.mxu0 0.0
        %3702 = vmatprep.subr.mxu0 0.0
        %3703 = vmatpush1.msra.mxu0 0.0
        %3704 = vmatprep.subr.mxu0 0.0
        %3705 = vmatpush1.msra.mxu0 0.0
        %3706 = vmatprep.subr.mxu0 0.0
        %3707 = vmatpush1.msra.mxu0 0.0
        %3708 = vmatprep.subr.mxu0 0.0
        %3709 = vmatpush1.msra.mxu0 0.0
        %3710 = vmatprep.subr.mxu0 0.0
        %3711 = vmatpush1.msra.mxu0 0.0
        %3712 = vmatprep.subr.mxu0 0.0
        %3713 = vmatpush1.msra.mxu0 0.0
        %3714 = vmatprep.subr.mxu0 0.0
        %3715 = vmatpush1.msra.mxu0 0.0
        %3716 = vmatprep.subr.mxu0 0.0
        %3717 = vmatpush1.msra.mxu0 0.0
        %3718 = vmatprep.mubr.f32.mxu0 0.0
        %3719 = vmatmul.mubr.f32.gmra.mrb[0].mxu0 %v3652
        %v3720 = vpop.f32.mrb[0].mxu0
        %v3721 = vadd.f32 0.0, %v3720
        %v3722 = vpop.f32.mrb[0].mxu0
        %3723 = vdwg.mxu0
        %v3724 = vld [vmem:[%s620] sm:$0xff]
        %v3725 = vld [vmem:[%s620 + $0x8] sm:$0xff]
        %v3726 = vld [vmem:[%s620 + $0x10] sm:$0xff]
        %v3727 = vld [vmem:[%s620 + $0x18] sm:$0xff]
        %v3729 = vsel %vm2443, %v3210, 0
        %3731 = vmatprep.subr.mxu0 0.0
        %3732 = vmatpush1.msra.mxu0 %v3724
        %3733 = vmatprep.subr.mxu0 0.0
        %3734 = vmatpush1.msra.mxu0 0.0
        %3735 = vmatprep.subr.mxu0 0.0
        %3736 = vmatpush1.msra.mxu0 0.0
        %3737 = vmatprep.subr.mxu0 0.0
        %3738 = vmatpush1.msra.mxu0 0.0
        %3739 = vmatprep.subr.mxu0 0.0
        %3740 = vmatpush1.msra.mxu0 0.0
        %3741 = vmatprep.subr.mxu0 0.0
        %3742 = vmatpush1.msra.mxu0 0.0
        %3743 = vmatprep.subr.mxu0 0.0
        %3744 = vmatpush1.msra.mxu0 0.0
        %3745 = vmatprep.subr.mxu0 0.0
        %3746 = vmatpush1.msra.mxu0 0.0
        %3747 = vmatprep.subr.mxu0 0.0
        %3748 = vmatpush1.msra.mxu0 0.0
        %3749 = vmatprep.subr.mxu0 0.0
        %3750 = vmatpush1.msra.mxu0 0.0
        %3751 = vmatprep.subr.mxu0 0.0
        %3752 = vmatpush1.msra.mxu0 0.0
        %3753 = vmatprep.subr.mxu0 0.0
        %3754 = vmatpush1.msra.mxu0 0.0
        %3755 = vmatprep.subr.mxu0 0.0
        %3756 = vmatpush1.msra.mxu0 0.0
        %3757 = vmatprep.subr.mxu0 0.0
        %3758 = vmatpush1.msra.mxu0 0.0
        %3759 = vmatprep.subr.mxu0 0.0
        %3760 = vmatpush1.msra.mxu0 0.0
        %3761 = vmatprep.subr.mxu0 0.0
        %3762 = vmatpush1.msra.mxu0 0.0
        %3763 = vmatprep.subr.mxu0 0.0
        %3764 = vmatpush1.msra.mxu0 0.0
        %3765 = vmatprep.subr.mxu0 0.0
        %3766 = vmatpush1.msra.mxu0 0.0
        %3767 = vmatprep.subr.mxu0 0.0
        %3768 = vmatpush1.msra.mxu0 0.0
        %3769 = vmatprep.subr.mxu0 0.0
        %3770 = vmatpush1.msra.mxu0 0.0
        %3771 = vmatprep.subr.mxu0 0.0
        %3772 = vmatpush1.msra.mxu0 0.0
        %3773 = vmatprep.subr.mxu0 0.0
        %3774 = vmatpush1.msra.mxu0 0.0
        %3775 = vmatprep.subr.mxu0 0.0
        %3776 = vmatpush1.msra.mxu0 0.0
        %3777 = vmatprep.subr.mxu0 0.0
        %3778 = vmatpush1.msra.mxu0 0.0
        %3779 = vmatprep.subr.mxu0 0.0
        %3780 = vmatpush1.msra.mxu0 0.0
        %3781 = vmatprep.subr.mxu0 0.0
        %3782 = vmatpush1.msra.mxu0 0.0
        %3783 = vmatprep.subr.mxu0 0.0
        %3784 = vmatpush1.msra.mxu0 0.0
        %3785 = vmatprep.subr.mxu0 0.0
        %3786 = vmatpush1.msra.mxu0 0.0
        %3787 = vmatprep.subr.mxu0 0.0
        %3788 = vmatpush1.msra.mxu0 0.0
        %3789 = vmatprep.subr.mxu0 0.0
        %3790 = vmatpush1.msra.mxu0 0.0
        %3791 = vmatprep.subr.mxu0 0.0
        %3792 = vmatpush1.msra.mxu0 0.0
        %3793 = vmatprep.subr.mxu0 0.0
        %3794 = vmatpush1.msra.mxu0 0.0
        %3795 = vmatprep.mubr.f32.mxu0 0.0
        %3796 = vmatmul.mubr.f32.gmra.mrb[0].mxu0 %v3729
        %v3797 = vpop.f32.mrb[0].mxu0
        %v3798 = vadd.f32 0.0, %v3797
        %v3799 = vpop.f32.mrb[0].mxu0
        %3800 = vdwg.mxu0
        %v3802 = vsel %vm2443, %v3283, 0
        %3804 = vmatprep.subr.mxu0 0.0
        %3805 = vmatpush1.msra.mxu0 %v3724
        %3806 = vmatprep.subr.mxu0 0.0
        %3807 = vmatpush1.msra.mxu0 0.0
        %3808 = vmatprep.subr.mxu0 0.0
        %3809 = vmatpush1.msra.mxu0 0.0
        %3810 = vmatprep.subr.mxu0 0.0
        %3811 = vmatpush1.msra.mxu0 0.0
        %3812 = vmatprep.subr.mxu0 0.0
        %3813 = vmatpush1.msra.mxu0 0.0
        %3814 = vmatprep.subr.mxu0 0.0
        %3815 = vmatpush1.msra.mxu0 0.0
        %3816 = vmatprep.subr.mxu0 0.0
        %3817 = vmatpush1.msra.mxu0 0.0
        %3818 = vmatprep.subr.mxu0 0.0
        %3819 = vmatpush1.msra.mxu0 0.0
        %3820 = vmatprep.subr.mxu0 0.0
        %3821 = vmatpush1.msra.mxu0 0.0
        %3822 = vmatprep.subr.mxu0 0.0
        %3823 = vmatpush1.msra.mxu0 0.0
        %3824 = vmatprep.subr.mxu0 0.0
        %3825 = vmatpush1.msra.mxu0 0.0
        %3826 = vmatprep.subr.mxu0 0.0
        %3827 = vmatpush1.msra.mxu0 0.0
        %3828 = vmatprep.subr.mxu0 0.0
        %3829 = vmatpush1.msra.mxu0 0.0
        %3830 = vmatprep.subr.mxu0 0.0
        %3831 = vmatpush1.msra.mxu0 0.0
        %3832 = vmatprep.subr.mxu0 0.0
        %3833 = vmatpush1.msra.mxu0 0.0
        %3834 = vmatprep.subr.mxu0 0.0
        %3835 = vmatpush1.msra.mxu0 0.0
        %3836 = vmatprep.subr.mxu0 0.0
        %3837 = vmatpush1.msra.mxu0 0.0
        %3838 = vmatprep.subr.mxu0 0.0
        %3839 = vmatpush1.msra.mxu0 0.0
        %3840 = vmatprep.subr.mxu0 0.0
        %3841 = vmatpush1.msra.mxu0 0.0
        %3842 = vmatprep.subr.mxu0 0.0
        %3843 = vmatpush1.msra.mxu0 0.0
        %3844 = vmatprep.subr.mxu0 0.0
        %3845 = vmatpush1.msra.mxu0 0.0
        %3846 = vmatprep.subr.mxu0 0.0
        %3847 = vmatpush1.msra.mxu0 0.0
        %3848 = vmatprep.subr.mxu0 0.0
        %3849 = vmatpush1.msra.mxu0 0.0
        %3850 = vmatprep.subr.mxu0 0.0
        %3851 = vmatpush1.msra.mxu0 0.0
        %3852 = vmatprep.subr.mxu0 0.0
        %3853 = vmatpush1.msra.mxu0 0.0
        %3854 = vmatprep.subr.mxu0 0.0
        %3855 = vmatpush1.msra.mxu0 0.0
        %3856 = vmatprep.subr.mxu0 0.0
        %3857 = vmatpush1.msra.mxu0 0.0
        %3858 = vmatprep.subr.mxu0 0.0
        %3859 = vmatpush1.msra.mxu0 0.0
        %3860 = vmatprep.subr.mxu0 0.0
        %3861 = vmatpush1.msra.mxu0 0.0
        %3862 = vmatprep.subr.mxu0 0.0
        %3863 = vmatpush1.msra.mxu0 0.0
        %3864 = vmatprep.subr.mxu0 0.0
        %3865 = vmatpush1.msra.mxu0 0.0
        %3866 = vmatprep.subr.mxu0 0.0
        %3867 = vmatpush1.msra.mxu0 0.0
        %3868 = vmatprep.mubr.f32.mxu0 0.0
        %3869 = vmatmul.mubr.f32.gmra.mrb[0].mxu0 %v3802
        %v3870 = vpop.f32.mrb[0].mxu0
        %v3871 = vadd.f32 0.0, %v3870
        %v3872 = vpop.f32.mrb[0].mxu0
        %3873 = vdwg.mxu0
        %v3875 = vsel %vm2443, %v3356, 0
        %3877 = vmatprep.subr.mxu0 0.0
        %3878 = vmatpush1.msra.mxu0 %v3725
        %3879 = vmatprep.subr.mxu0 0.0
        %3880 = vmatpush1.msra.mxu0 0.0
        %3881 = vmatprep.subr.mxu0 0.0
        %3882 = vmatpush1.msra.mxu0 0.0
        %3883 = vmatprep.subr.mxu0 0.0
        %3884 = vmatpush1.msra.mxu0 0.0
        %3885 = vmatprep.subr.mxu0 0.0
        %3886 = vmatpush1.msra.mxu0 0.0
        %3887 = vmatprep.subr.mxu0 0.0
        %3888 = vmatpush1.msra.mxu0 0.0
        %3889 = vmatprep.subr.mxu0 0.0
        %3890 = vmatpush1.msra.mxu0 0.0
        %3891 = vmatprep.subr.mxu0 0.0
        %3892 = vmatpush1.msra.mxu0 0.0
        %3893 = vmatprep.subr.mxu0 0.0
        %3894 = vmatpush1.msra.mxu0 0.0
        %3895 = vmatprep.subr.mxu0 0.0
        %3896 = vmatpush1.msra.mxu0 0.0
        %3897 = vmatprep.subr.mxu0 0.0
        %3898 = vmatpush1.msra.mxu0 0.0
        %3899 = vmatprep.subr.mxu0 0.0
        %3900 = vmatpush1.msra.mxu0 0.0
        %3901 = vmatprep.subr.mxu0 0.0
        %3902 = vmatpush1.msra.mxu0 0.0
        %3903 = vmatprep.subr.mxu0 0.0
        %3904 = vmatpush1.msra.mxu0 0.0
        %3905 = vmatprep.subr.mxu0 0.0
        %3906 = vmatpush1.msra.mxu0 0.0
        %3907 = vmatprep.subr.mxu0 0.0
        %3908 = vmatpush1.msra.mxu0 0.0
        %3909 = vmatprep.subr.mxu0 0.0
        %3910 = vmatpush1.msra.mxu0 0.0
        %3911 = vmatprep.subr.mxu0 0.0
        %3912 = vmatpush1.msra.mxu0 0.0
        %3913 = vmatprep.subr.mxu0 0.0
        %3914 = vmatpush1.msra.mxu0 0.0
        %3915 = vmatprep.subr.mxu0 0.0
        %3916 = vmatpush1.msra.mxu0 0.0
        %3917 = vmatprep.subr.mxu0 0.0
        %3918 = vmatpush1.msra.mxu0 0.0
        %3919 = vmatprep.subr.mxu0 0.0
        %3920 = vmatpush1.msra.mxu0 0.0
        %3921 = vmatprep.subr.mxu0 0.0
        %3922 = vmatpush1.msra.mxu0 0.0
        %3923 = vmatprep.subr.mxu0 0.0
        %3924 = vmatpush1.msra.mxu0 0.0
        %3925 = vmatprep.subr.mxu0 0.0
        %3926 = vmatpush1.msra.mxu0 0.0
        %3927 = vmatprep.subr.mxu0 0.0
        %3928 = vmatpush1.msra.mxu0 0.0
        %3929 = vmatprep.subr.mxu0 0.0
        %3930 = vmatpush1.msra.mxu0 0.0
        %3931 = vmatprep.subr.mxu0 0.0
        %3932 = vmatpush1.msra.mxu0 0.0
        %3933 = vmatprep.subr.mxu0 0.0
        %3934 = vmatpush1.msra.mxu0 0.0
        %3935 = vmatprep.subr.mxu0 0.0
        %3936 = vmatpush1.msra.mxu0 0.0
        %3937 = vmatprep.subr.mxu0 0.0
        %3938 = vmatpush1.msra.mxu0 0.0
        %3939 = vmatprep.subr.mxu0 0.0
        %3940 = vmatpush1.msra.mxu0 0.0
        %3941 = vmatprep.mubr.f32.mxu0 0.0
        %3942 = vmatmul.mubr.f32.gmra.mrb[0].mxu0 %v3875
        %v3943 = vpop.f32.mrb[0].mxu0
        %v3944 = vadd.f32 0.0, %v3943
        %v3945 = vpop.f32.mrb[0].mxu0
        %3946 = vdwg.mxu0
        %v3948 = vsel %vm2443, %v3429, 0
        %3950 = vmatprep.subr.mxu0 0.0
        %3951 = vmatpush1.msra.mxu0 %v3725
        %3952 = vmatprep.subr.mxu0 0.0
        %3953 = vmatpush1.msra.mxu0 0.0
        %3954 = vmatprep.subr.mxu0 0.0
        %3955 = vmatpush1.msra.mxu0 0.0
        %3956 = vmatprep.subr.mxu0 0.0
        %3957 = vmatpush1.msra.mxu0 0.0
        %3958 = vmatprep.subr.mxu0 0.0
        %3959 = vmatpush1.msra.mxu0 0.0
        %3960 = vmatprep.subr.mxu0 0.0
        %3961 = vmatpush1.msra.mxu0 0.0
        %3962 = vmatprep.subr.mxu0 0.0
        %3963 = vmatpush1.msra.mxu0 0.0
        %3964 = vmatprep.subr.mxu0 0.0
        %3965 = vmatpush1.msra.mxu0 0.0
        %3966 = vmatprep.subr.mxu0 0.0
        %3967 = vmatpush1.msra.mxu0 0.0
        %3968 = vmatprep.subr.mxu0 0.0
        %3969 = vmatpush1.msra.mxu0 0.0
        %3970 = vmatprep.subr.mxu0 0.0
        %3971 = vmatpush1.msra.mxu0 0.0
        %3972 = vmatprep.subr.mxu0 0.0
        %3973 = vmatpush1.msra.mxu0 0.0
        %3974 = vmatprep.subr.mxu0 0.0
        %3975 = vmatpush1.msra.mxu0 0.0
        %3976 = vmatprep.subr.mxu0 0.0
        %3977 = vmatpush1.msra.mxu0 0.0
        %3978 = vmatprep.subr.mxu0 0.0
        %3979 = vmatpush1.msra.mxu0 0.0
        %3980 = vmatprep.subr.mxu0 0.0
        %3981 = vmatpush1.msra.mxu0 0.0
        %3982 = vmatprep.subr.mxu0 0.0
        %3983 = vmatpush1.msra.mxu0 0.0
        %3984 = vmatprep.subr.mxu0 0.0
        %3985 = vmatpush1.msra.mxu0 0.0
        %3986 = vmatprep.subr.mxu0 0.0
        %3987 = vmatpush1.msra.mxu0 0.0
        %3988 = vmatprep.subr.mxu0 0.0
        %3989 = vmatpush1.msra.mxu0 0.0
        %3990 = vmatprep.subr.mxu0 0.0
        %3991 = vmatpush1.msra.mxu0 0.0
        %3992 = vmatprep.subr.mxu0 0.0
        %3993 = vmatpush1.msra.mxu0 0.0
        %3994 = vmatprep.subr.mxu0 0.0
        %3995 = vmatpush1.msra.mxu0 0.0
        %3996 = vmatprep.subr.mxu0 0.0
        %3997 = vmatpush1.msra.mxu0 0.0
        %3998 = vmatprep.subr.mxu0 0.0
        %3999 = vmatpush1.msra.mxu0 0.0
        %4000 = vmatprep.subr.mxu0 0.0
        %4001 = vmatpush1.msra.mxu0 0.0
        %4002 = vmatprep.subr.mxu0 0.0
        %4003 = vmatpush1.msra.mxu0 0.0
        %4004 = vmatprep.subr.mxu0 0.0
        %4005 = vmatpush1.msra.mxu0 0.0
        %4006 = vmatprep.subr.mxu0 0.0
        %4007 = vmatpush1.msra.mxu0 0.0
        %4008 = vmatprep.subr.mxu0 0.0
        %4009 = vmatpush1.msra.mxu0 0.0
        %4010 = vmatprep.subr.mxu0 0.0
        %4011 = vmatpush1.msra.mxu0 0.0
        %4012 = vmatprep.subr.mxu0 0.0
        %4013 = vmatpush1.msra.mxu0 0.0
        %4014 = vmatprep.mubr.f32.mxu0 0.0
        %4015 = vmatmul.mubr.f32.gmra.mrb[0].mxu0 %v3948
        %v4016 = vpop.f32.mrb[0].mxu0
        %v4017 = vadd.f32 0.0, %v4016
        %v4018 = vpop.f32.mrb[0].mxu0
        %4019 = vdwg.mxu0
        %v4021 = vsel %vm2443, %v3502, 0
        %4023 = vmatprep.subr.mxu0 0.0
        %4024 = vmatpush1.msra.mxu0 %v3726
        %4025 = vmatprep.subr.mxu0 0.0
        %4026 = vmatpush1.msra.mxu0 0.0
        %4027 = vmatprep.subr.mxu0 0.0
        %4028 = vmatpush1.msra.mxu0 0.0
        %4029 = vmatprep.subr.mxu0 0.0
        %4030 = vmatpush1.msra.mxu0 0.0
        %4031 = vmatprep.subr.mxu0 0.0
        %4032 = vmatpush1.msra.mxu0 0.0
        %4033 = vmatprep.subr.mxu0 0.0
        %4034 = vmatpush1.msra.mxu0 0.0
        %4035 = vmatprep.subr.mxu0 0.0
        %4036 = vmatpush1.msra.mxu0 0.0
        %4037 = vmatprep.subr.mxu0 0.0
        %4038 = vmatpush1.msra.mxu0 0.0
        %4039 = vmatprep.subr.mxu0 0.0
        %4040 = vmatpush1.msra.mxu0 0.0
        %4041 = vmatprep.subr.mxu0 0.0
        %4042 = vmatpush1.msra.mxu0 0.0
        %4043 = vmatprep.subr.mxu0 0.0
        %4044 = vmatpush1.msra.mxu0 0.0
        %4045 = vmatprep.subr.mxu0 0.0
        %4046 = vmatpush1.msra.mxu0 0.0
        %4047 = vmatprep.subr.mxu0 0.0
        %4048 = vmatpush1.msra.mxu0 0.0
        %4049 = vmatprep.subr.mxu0 0.0
        %4050 = vmatpush1.msra.mxu0 0.0
        %4051 = vmatprep.subr.mxu0 0.0
        %4052 = vmatpush1.msra.mxu0 0.0
        %4053 = vmatprep.subr.mxu0 0.0
        %4054 = vmatpush1.msra.mxu0 0.0
        %4055 = vmatprep.subr.mxu0 0.0
        %4056 = vmatpush1.msra.mxu0 0.0
        %4057 = vmatprep.subr.mxu0 0.0
        %4058 = vmatpush1.msra.mxu0 0.0
        %4059 = vmatprep.subr.mxu0 0.0
        %4060 = vmatpush1.msra.mxu0 0.0
        %4061 = vmatprep.subr.mxu0 0.0
        %4062 = vmatpush1.msra.mxu0 0.0
        %4063 = vmatprep.subr.mxu0 0.0
        %4064 = vmatpush1.msra.mxu0 0.0
        %4065 = vmatprep.subr.mxu0 0.0
        %4066 = vmatpush1.msra.mxu0 0.0
        %4067 = vmatprep.subr.mxu0 0.0
        %4068 = vmatpush1.msra.mxu0 0.0
        %4069 = vmatprep.subr.mxu0 0.0
        %4070 = vmatpush1.msra.mxu0 0.0
        %4071 = vmatprep.subr.mxu0 0.0
        %4072 = vmatpush1.msra.mxu0 0.0
        %4073 = vmatprep.subr.mxu0 0.0
        %4074 = vmatpush1.msra.mxu0 0.0
        %4075 = vmatprep.subr.mxu0 0.0
        %4076 = vmatpush1.msra.mxu0 0.0
        %4077 = vmatprep.subr.mxu0 0.0
        %4078 = vmatpush1.msra.mxu0 0.0
        %4079 = vmatprep.subr.mxu0 0.0
        %4080 = vmatpush1.msra.mxu0 0.0
        %4081 = vmatprep.subr.mxu0 0.0
        %4082 = vmatpush1.msra.mxu0 0.0
        %4083 = vmatprep.subr.mxu0 0.0
        %4084 = vmatpush1.msra.mxu0 0.0
        %4085 = vmatprep.subr.mxu0 0.0
        %4086 = vmatpush1.msra.mxu0 0.0
        %4087 = vmatprep.mubr.f32.mxu0 0.0
        %4088 = vmatmul.mubr.f32.gmra.mrb[0].mxu0 %v4021
        %v4089 = vpop.f32.mrb[0].mxu0
        %v4090 = vadd.f32 0.0, %v4089
        %v4091 = vpop.f32.mrb[0].mxu0
        %4092 = vdwg.mxu0
        %v4094 = vsel %vm2443, %v3575, 0
        %4096 = vmatprep.subr.mxu0 0.0
        %4097 = vmatpush1.msra.mxu0 %v3726
        %4098 = vmatprep.subr.mxu0 0.0
        %4099 = vmatpush1.msra.mxu0 0.0
        %4100 = vmatprep.subr.mxu0 0.0
        %4101 = vmatpush1.msra.mxu0 0.0
        %4102 = vmatprep.subr.mxu0 0.0
        %4103 = vmatpush1.msra.mxu0 0.0
        %4104 = vmatprep.subr.mxu0 0.0
        %4105 = vmatpush1.msra.mxu0 0.0
        %4106 = vmatprep.subr.mxu0 0.0
        %4107 = vmatpush1.msra.mxu0 0.0
        %4108 = vmatprep.subr.mxu0 0.0
        %4109 = vmatpush1.msra.mxu0 0.0
        %4110 = vmatprep.subr.mxu0 0.0
        %4111 = vmatpush1.msra.mxu0 0.0
        %4112 = vmatprep.subr.mxu0 0.0
        %4113 = vmatpush1.msra.mxu0 0.0
        %4114 = vmatprep.subr.mxu0 0.0
        %4115 = vmatpush1.msra.mxu0 0.0
        %4116 = vmatprep.subr.mxu0 0.0
        %4117 = vmatpush1.msra.mxu0 0.0
        %4118 = vmatprep.subr.mxu0 0.0
        %4119 = vmatpush1.msra.mxu0 0.0
        %4120 = vmatprep.subr.mxu0 0.0
        %4121 = vmatpush1.msra.mxu0 0.0
        %4122 = vmatprep.subr.mxu0 0.0
        %4123 = vmatpush1.msra.mxu0 0.0
        %4124 = vmatprep.subr.mxu0 0.0
        %4125 = vmatpush1.msra.mxu0 0.0
        %4126 = vmatprep.subr.mxu0 0.0
        %4127 = vmatpush1.msra.mxu0 0.0
        %4128 = vmatprep.subr.mxu0 0.0
        %4129 = vmatpush1.msra.mxu0 0.0
        %4130 = vmatprep.subr.mxu0 0.0
        %4131 = vmatpush1.msra.mxu0 0.0
        %4132 = vmatprep.subr.mxu0 0.0
        %4133 = vmatpush1.msra.mxu0 0.0
        %4134 = vmatprep.subr.mxu0 0.0
        %4135 = vmatpush1.msra.mxu0 0.0
        %4136 = vmatprep.subr.mxu0 0.0
        %4137 = vmatpush1.msra.mxu0 0.0
        %4138 = vmatprep.subr.mxu0 0.0
        %4139 = vmatpush1.msra.mxu0 0.0
        %4140 = vmatprep.subr.mxu0 0.0
        %4141 = vmatpush1.msra.mxu0 0.0
        %4142 = vmatprep.subr.mxu0 0.0
        %4143 = vmatpush1.msra.mxu0 0.0
        %4144 = vmatprep.subr.mxu0 0.0
        %4145 = vmatpush1.msra.mxu0 0.0
        %4146 = vmatprep.subr.mxu0 0.0
        %4147 = vmatpush1.msra.mxu0 0.0
        %4148 = vmatprep.subr.mxu0 0.0
        %4149 = vmatpush1.msra.mxu0 0.0
        %4150 = vmatprep.subr.mxu0 0.0
        %4151 = vmatpush1.msra.mxu0 0.0
        %4152 = vmatprep.subr.mxu0 0.0
        %4153 = vmatpush1.msra.mxu0 0.0
        %4154 = vmatprep.subr.mxu0 0.0
        %4155 = vmatpush1.msra.mxu0 0.0
        %4156 = vmatprep.subr.mxu0 0.0
        %4157 = vmatpush1.msra.mxu0 0.0
        %4158 = vmatprep.subr.mxu0 0.0
        %4159 = vmatpush1.msra.mxu0 0.0
        %4160 = vmatprep.mubr.f32.mxu0 0.0
        %4161 = vmatmul.mubr.f32.gmra.mrb[0].mxu0 %v4094
        %v4162 = vpop.f32.mrb[0].mxu0
        %v4163 = vadd.f32 0.0, %v4162
        %v4164 = vpop.f32.mrb[0].mxu0
        %4165 = vdwg.mxu0
        %v4167 = vsel %vm2443, %v3648, 0
        %4169 = vmatprep.subr.mxu0 0.0
        %4170 = vmatpush1.msra.mxu0 %v3727
        %4171 = vmatprep.subr.mxu0 0.0
        %4172 = vmatpush1.msra.mxu0 0.0
        %4173 = vmatprep.subr.mxu0 0.0
        %4174 = vmatpush1.msra.mxu0 0.0
        %4175 = vmatprep.subr.mxu0 0.0
        %4176 = vmatpush1.msra.mxu0 0.0
        %4177 = vmatprep.subr.mxu0 0.0
        %4178 = vmatpush1.msra.mxu0 0.0
        %4179 = vmatprep.subr.mxu0 0.0
        %4180 = vmatpush1.msra.mxu0 0.0
        %4181 = vmatprep.subr.mxu0 0.0
        %4182 = vmatpush1.msra.mxu0 0.0
        %4183 = vmatprep.subr.mxu0 0.0
        %4184 = vmatpush1.msra.mxu0 0.0
        %4185 = vmatprep.subr.mxu0 0.0
        %4186 = vmatpush1.msra.mxu0 0.0
        %4187 = vmatprep.subr.mxu0 0.0
        %4188 = vmatpush1.msra.mxu0 0.0
        %4189 = vmatprep.subr.mxu0 0.0
        %4190 = vmatpush1.msra.mxu0 0.0
        %4191 = vmatprep.subr.mxu0 0.0
        %4192 = vmatpush1.msra.mxu0 0.0
        %4193 = vmatprep.subr.mxu0 0.0
        %4194 = vmatpush1.msra.mxu0 0.0
        %4195 = vmatprep.subr.mxu0 0.0
        %4196 = vmatpush1.msra.mxu0 0.0
        %4197 = vmatprep.subr.mxu0 0.0
        %4198 = vmatpush1.msra.mxu0 0.0
        %4199 = vmatprep.subr.mxu0 0.0
        %4200 = vmatpush1.msra.mxu0 0.0
        %4201 = vmatprep.subr.mxu0 0.0
        %4202 = vmatpush1.msra.mxu0 0.0
        %4203 = vmatprep.subr.mxu0 0.0
        %4204 = vmatpush1.msra.mxu0 0.0
        %4205 = vmatprep.subr.mxu0 0.0
        %4206 = vmatpush1.msra.mxu0 0.0
        %4207 = vmatprep.subr.mxu0 0.0
        %4208 = vmatpush1.msra.mxu0 0.0
        %4209 = vmatprep.subr.mxu0 0.0
        %4210 = vmatpush1.msra.mxu0 0.0
        %4211 = vmatprep.subr.mxu0 0.0
        %4212 = vmatpush1.msra.mxu0 0.0
        %4213 = vmatprep.subr.mxu0 0.0
        %4214 = vmatpush1.msra.mxu0 0.0
        %4215 = vmatprep.subr.mxu0 0.0
        %4216 = vmatpush1.msra.mxu0 0.0
        %4217 = vmatprep.subr.mxu0 0.0
        %4218 = vmatpush1.msra.mxu0 0.0
        %4219 = vmatprep.subr.mxu0 0.0
        %4220 = vmatpush1.msra.mxu0 0.0
        %4221 = vmatprep.subr.mxu0 0.0
        %4222 = vmatpush1.msra.mxu0 0.0
        %4223 = vmatprep.subr.mxu0 0.0
        %4224 = vmatpush1.msra.mxu0 0.0
        %4225 = vmatprep.subr.mxu0 0.0
        %4226 = vmatpush1.msra.mxu0 0.0
        %4227 = vmatprep.subr.mxu0 0.0
        %4228 = vmatpush1.msra.mxu0 0.0
        %4229 = vmatprep.subr.mxu0 0.0
        %4230 = vmatpush1.msra.mxu0 0.0
        %4231 = vmatprep.subr.mxu0 0.0
        %4232 = vmatpush1.msra.mxu0 0.0
        %4233 = vmatprep.mubr.f32.mxu0 0.0
        %4234 = vmatmul.mubr.f32.gmra.mrb[0].mxu0 %v4167
        %v4235 = vpop.f32.mrb[0].mxu0
        %v4236 = vadd.f32 0.0, %v4235
        %v4237 = vpop.f32.mrb[0].mxu0
        %4238 = vdwg.mxu0
        %v4240 = vsel %vm2443, %v3721, 0
        %4242 = vmatprep.subr.mxu0 0.0
        %4243 = vmatpush1.msra.mxu0 %v3727
        %4244 = vmatprep.subr.mxu0 0.0
        %4245 = vmatpush1.msra.mxu0 0.0
        %4246 = vmatprep.subr.mxu0 0.0
        %4247 = vmatpush1.msra.mxu0 0.0
        %4248 = vmatprep.subr.mxu0 0.0
        %4249 = vmatpush1.msra.mxu0 0.0
        %4250 = vmatprep.subr.mxu0 0.0
        %4251 = vmatpush1.msra.mxu0 0.0
        %4252 = vmatprep.subr.mxu0 0.0
        %4253 = vmatpush1.msra.mxu0 0.0
        %4254 = vmatprep.subr.mxu0 0.0
        %4255 = vmatpush1.msra.mxu0 0.0
        %4256 = vmatprep.subr.mxu0 0.0
        %4257 = vmatpush1.msra.mxu0 0.0
        %4258 = vmatprep.subr.mxu0 0.0
        %4259 = vmatpush1.msra.mxu0 0.0
        %4260 = vmatprep.subr.mxu0 0.0
        %4261 = vmatpush1.msra.mxu0 0.0
        %4262 = vmatprep.subr.mxu0 0.0
        %4263 = vmatpush1.msra.mxu0 0.0
        %4264 = vmatprep.subr.mxu0 0.0
        %4265 = vmatpush1.msra.mxu0 0.0
        %4266 = vmatprep.subr.mxu0 0.0
        %4267 = vmatpush1.msra.mxu0 0.0
        %4268 = vmatprep.subr.mxu0 0.0
        %4269 = vmatpush1.msra.mxu0 0.0
        %4270 = vmatprep.subr.mxu0 0.0
        %4271 = vmatpush1.msra.mxu0 0.0
        %4272 = vmatprep.subr.mxu0 0.0
        %4273 = vmatpush1.msra.mxu0 0.0
        %4274 = vmatprep.subr.mxu0 0.0
        %4275 = vmatpush1.msra.mxu0 0.0
        %4276 = vmatprep.subr.mxu0 0.0
        %4277 = vmatpush1.msra.mxu0 0.0
        %4278 = vmatprep.subr.mxu0 0.0
        %4279 = vmatpush1.msra.mxu0 0.0
        %4280 = vmatprep.subr.mxu0 0.0
        %4281 = vmatpush1.msra.mxu0 0.0
        %4282 = vmatprep.subr.mxu0 0.0
        %4283 = vmatpush1.msra.mxu0 0.0
        %4284 = vmatprep.subr.mxu0 0.0
        %4285 = vmatpush1.msra.mxu0 0.0
        %4286 = vmatprep.subr.mxu0 0.0
        %4287 = vmatpush1.msra.mxu0 0.0
        %4288 = vmatprep.subr.mxu0 0.0
        %4289 = vmatpush1.msra.mxu0 0.0
        %4290 = vmatprep.subr.mxu0 0.0
        %4291 = vmatpush1.msra.mxu0 0.0
        %4292 = vmatprep.subr.mxu0 0.0
        %4293 = vmatpush1.msra.mxu0 0.0
        %4294 = vmatprep.subr.mxu0 0.0
        %4295 = vmatpush1.msra.mxu0 0.0
        %4296 = vmatprep.subr.mxu0 0.0
        %4297 = vmatpush1.msra.mxu0 0.0
        %4298 = vmatprep.subr.mxu0 0.0
        %4299 = vmatpush1.msra.mxu0 0.0
        %4300 = vmatprep.subr.mxu0 0.0
        %4301 = vmatpush1.msra.mxu0 0.0
        %4302 = vmatprep.subr.mxu0 0.0
        %4303 = vmatpush1.msra.mxu0 0.0
        %4304 = vmatprep.subr.mxu0 0.0
        %4305 = vmatpush1.msra.mxu0 0.0
        %4306 = vmatprep.mubr.f32.mxu0 0.0
        %4307 = vmatmul.mubr.f32.gmra.mrb[0].mxu0 %v4240
        %v4308 = vpop.f32.mrb[0].mxu0
        %v4309 = vadd.f32 0.0, %v4308
        %v4310 = vpop.f32.mrb[0].mxu0
        %4311 = vdwg.mxu0
        %v4312 = vsel %vm665, %v3798, 0.0
        %v4313 = vsel %vm665, %v3944, 0.0
        %v4314 = vadd.f32 %v4312, %v4313
        %v4315 = vsel %vm665, %v4090, 0.0
        %v4316 = vadd.f32 %v4314, %v4315
        %v4317 = vsel %vm665, %v4236, 0.0
        %v4318 = vadd.f32 %v4316, %v4317
        %v4319 = vsel %vm665, %v3871, 0.0
        %v4320 = vsel %vm665, %v4017, 0.0
        %v4321 = vadd.f32 %v4319, %v4320
        %v4322 = vsel %vm665, %v4163, 0.0
        %v4323 = vadd.f32 %v4321, %v4322
        %v4324 = vsel %vm665, %v4309, 0.0
        %v4325 = vadd.f32 %v4323, %v4324
        %v4326 = vld [vmem:[%s623] sm:$0x1]
        %v4328 = vlaneseq
        %v4329 = vshrl.u32 %v4328, 7
        %v4330 = vsub.s32 0, %v4329
        %v4331 = vrot.slane %v4326, %v4330
        %v4333 = vadd.f32 %v4318, %v4331
        %v4334 = vadd.f32 %v4325, %v4331
        %v4335 = vadd.f32 %v661, %v4333
        %v4336 = vadd.f32 %v662, %v4334
        %v4337 = vld [vmem:[%s648] sm:$0x1]
        %v4338 = vld [vmem:[%s651] sm:$0x1]
        %v4339 = vsel %vm665, %v4335, 0.0
        %4340 = vadd.xlane.f32.xlu0 %v4339
        %v4341 = vpop.xlane.xlu0 %4340
        %v4342 = vsel %vm665, %v4336, 0.0
        %4343 = vadd.xlane.f32.xlu0 %v4342
        %v4344 = vpop.xlane.xlu0 %4343
        %v4345 = vmul.f32 %v4341, %v672
        %v4346 = vmul.f32 %v4344, %v672
        %v4347 = vsub.f32 %v4335, %v4345
        %v4348 = vsub.f32 %v4336, %v4346
        %v4349 = vmul.f32 %v4347, %v4347
        %v4350 = vmul.f32 %v4348, %v4348
        %v4351 = vsel %vm665, %v4349, 0.0
        %4352 = vadd.xlane.f32.xlu0 %v4351
        %v4353 = vpop.xlane.xlu0 %4352
        %v4354 = vsel %vm665, %v4350, 0.0
        %4355 = vadd.xlane.f32.xlu0 %v4354
        %v4356 = vpop.xlane.xlu0 %4355
        %v4357 = vmul.f32 %v4353, %v672
        %v4358 = vmul.f32 %v4356, %v672
        %v4359 = vadd.f32 %v4357, 1e-05
        %v4360 = vadd.f32 %v4358, 1e-05
        %v4361 = vrsqrt.pop %v4359
        %v4362 = vrsqrt.pop %v4360
        %v4363 = vmul.f32 %v4347, %v4361
        %v4364 = vmul.f32 %v4348, %v4362
        %v4366 = vlaneseq
        %v4367 = vshrl.u32 %v4366, 7
        %v4368 = vsub.s32 0, %v4367
        %v4369 = vrot.slane %v4337, %v4368
        %v4371 = vmul.f32 %v4363, %v4369
        %v4372 = vmul.f32 %v4364, %v4369
        %v4374 = vlaneseq
        %v4375 = vshrl.u32 %v4374, 7
        %v4376 = vsub.s32 0, %v4375
        %v4377 = vrot.slane %v4338, %v4376
        %v4379 = vadd.f32 %v4371, %v4377
        %v4380 = vadd.f32 %v4372, %v4377
        %v4381 = vld [vmem:[%s634] sm:$0xff]
        %v4382 = vld [vmem:[%s634 + $0x8] sm:$0xff]
        %v4383 = vld [vmem:[%s634 + $0x10] sm:$0xff]
        %v4384 = vld [vmem:[%s634 + $0x18] sm:$0xff]
        %v4385 = vld [vmem:[%s637] sm:$0x1]
        %v4387 = vlaneseq
        %v4388 = vshrl.u32 %v4387, 7
        %v4389 = vsub.s32 0, %v4388
        %v4390 = vrot.slane %v4385, %v4389
        %v4393 = vsel %vm665, %v4379, 0
        %4395 = vmatprep.subr.mxu0 0.0
        %4396 = vmatpush1.msra.mxu0 %v4381
        %4397 = vmatprep.subr.mxu0 0.0
        %4398 = vmatpush1.msra.mxu0 %v4382
        %4399 = vmatprep.subr.mxu0 0.0
        %4400 = vmatpush1.msra.mxu0 %v4383
        %4401 = vmatprep.subr.mxu0 0.0
        %4402 = vmatpush1.msra.mxu0 %v4384
        %4403 = vmatprep.subr.mxu0 0.0
        %4404 = vmatpush1.msra.mxu0 0.0
        %4405 = vmatprep.subr.mxu0 0.0
        %4406 = vmatpush1.msra.mxu0 0.0
        %4407 = vmatprep.subr.mxu0 0.0
        %4408 = vmatpush1.msra.mxu0 0.0
        %4409 = vmatprep.subr.mxu0 0.0
        %4410 = vmatpush1.msra.mxu0 0.0
        %4411 = vmatprep.subr.mxu0 0.0
        %4412 = vmatpush1.msra.mxu0 0.0
        %4413 = vmatprep.subr.mxu0 0.0
        %4414 = vmatpush1.msra.mxu0 0.0
        %4415 = vmatprep.subr.mxu0 0.0
        %4416 = vmatpush1.msra.mxu0 0.0
        %4417 = vmatprep.subr.mxu0 0.0
        %4418 = vmatpush1.msra.mxu0 0.0
        %4419 = vmatprep.subr.mxu0 0.0
        %4420 = vmatpush1.msra.mxu0 0.0
        %4421 = vmatprep.subr.mxu0 0.0
        %4422 = vmatpush1.msra.mxu0 0.0
        %4423 = vmatprep.subr.mxu0 0.0
        %4424 = vmatpush1.msra.mxu0 0.0
        %4425 = vmatprep.subr.mxu0 0.0
        %4426 = vmatpush1.msra.mxu0 0.0
        %4427 = vmatprep.subr.mxu0 0.0
        %4428 = vmatpush1.msra.mxu0 0.0
        %4429 = vmatprep.subr.mxu0 0.0
        %4430 = vmatpush1.msra.mxu0 0.0
        %4431 = vmatprep.subr.mxu0 0.0
        %4432 = vmatpush1.msra.mxu0 0.0
        %4433 = vmatprep.subr.mxu0 0.0
        %4434 = vmatpush1.msra.mxu0 0.0
        %4435 = vmatprep.subr.mxu0 0.0
        %4436 = vmatpush1.msra.mxu0 0.0
        %4437 = vmatprep.subr.mxu0 0.0
        %4438 = vmatpush1.msra.mxu0 0.0
        %4439 = vmatprep.subr.mxu0 0.0
        %4440 = vmatpush1.msra.mxu0 0.0
        %4441 = vmatprep.subr.mxu0 0.0
        %4442 = vmatpush1.msra.mxu0 0.0
        %4443 = vmatprep.subr.mxu0 0.0
        %4444 = vmatpush1.msra.mxu0 0.0
        %4445 = vmatprep.subr.mxu0 0.0
        %4446 = vmatpush1.msra.mxu0 0.0
        %4447 = vmatprep.subr.mxu0 0.0
        %4448 = vmatpush1.msra.mxu0 0.0
        %4449 = vmatprep.subr.mxu0 0.0
        %4450 = vmatpush1.msra.mxu0 0.0
        %4451 = vmatprep.subr.mxu0 0.0
        %4452 = vmatpush1.msra.mxu0 0.0
        %4453 = vmatprep.subr.mxu0 0.0
        %4454 = vmatpush1.msra.mxu0 0.0
        %4455 = vmatprep.subr.mxu0 0.0
        %4456 = vmatpush1.msra.mxu0 0.0
        %4457 = vmatprep.subr.mxu0 0.0
        %4458 = vmatpush1.msra.mxu0 0.0
        %4459 = vmatprep.mubr.f32.mxu0 0.0
        %4460 = vmatmul.mubr.f32.gmra.mrb[0].mxu0 %v4393
        %v4461 = vpop.f32.mrb[0].mxu0
        %v4462 = vadd.f32 %v4390, %v4461
        %v4463 = vpop.f32.mrb[0].mxu0
        %4464 = vdwg.mxu0
        %v4466 = vsel %vm665, %v4380, 0
        %4468 = vmatprep.subr.mxu0 0.0
        %4469 = vmatpush1.msra.mxu0 %v4381
        %4470 = vmatprep.subr.mxu0 0.0
        %4471 = vmatpush1.msra.mxu0 %v4382
        %4472 = vmatprep.subr.mxu0 0.0
        %4473 = vmatpush1.msra.mxu0 %v4383
        %4474 = vmatprep.subr.mxu0 0.0
        %4475 = vmatpush1.msra.mxu0 %v4384
        %4476 = vmatprep.subr.mxu0 0.0
        %4477 = vmatpush1.msra.mxu0 0.0
        %4478 = vmatprep.subr.mxu0 0.0
        %4479 = vmatpush1.msra.mxu0 0.0
        %4480 = vmatprep.subr.mxu0 0.0
        %4481 = vmatpush1.msra.mxu0 0.0
        %4482 = vmatprep.subr.mxu0 0.0
        %4483 = vmatpush1.msra.mxu0 0.0
        %4484 = vmatprep.subr.mxu0 0.0
        %4485 = vmatpush1.msra.mxu0 0.0
        %4486 = vmatprep.subr.mxu0 0.0
        %4487 = vmatpush1.msra.mxu0 0.0
        %4488 = vmatprep.subr.mxu0 0.0
        %4489 = vmatpush1.msra.mxu0 0.0
        %4490 = vmatprep.subr.mxu0 0.0
        %4491 = vmatpush1.msra.mxu0 0.0
        %4492 = vmatprep.subr.mxu0 0.0
        %4493 = vmatpush1.msra.mxu0 0.0
        %4494 = vmatprep.subr.mxu0 0.0
        %4495 = vmatpush1.msra.mxu0 0.0
        %4496 = vmatprep.subr.mxu0 0.0
        %4497 = vmatpush1.msra.mxu0 0.0
        %4498 = vmatprep.subr.mxu0 0.0
        %4499 = vmatpush1.msra.mxu0 0.0
        %4500 = vmatprep.subr.mxu0 0.0
        %4501 = vmatpush1.msra.mxu0 0.0
        %4502 = vmatprep.subr.mxu0 0.0
        %4503 = vmatpush1.msra.mxu0 0.0
        %4504 = vmatprep.subr.mxu0 0.0
        %4505 = vmatpush1.msra.mxu0 0.0
        %4506 = vmatprep.subr.mxu0 0.0
        %4507 = vmatpush1.msra.mxu0 0.0
        %4508 = vmatprep.subr.mxu0 0.0
        %4509 = vmatpush1.msra.mxu0 0.0
        %4510 = vmatprep.subr.mxu0 0.0
        %4511 = vmatpush1.msra.mxu0 0.0
        %4512 = vmatprep.subr.mxu0 0.0
        %4513 = vmatpush1.msra.mxu0 0.0
        %4514 = vmatprep.subr.mxu0 0.0
        %4515 = vmatpush1.msra.mxu0 0.0
        %4516 = vmatprep.subr.mxu0 0.0
        %4517 = vmatpush1.msra.mxu0 0.0
        %4518 = vmatprep.subr.mxu0 0.0
        %4519 = vmatpush1.msra.mxu0 0.0
        %4520 = vmatprep.subr.mxu0 0.0
        %4521 = vmatpush1.msra.mxu0 0.0
        %4522 = vmatprep.subr.mxu0 0.0
        %4523 = vmatpush1.msra.mxu0 0.0
        %4524 = vmatprep.subr.mxu0 0.0
        %4525 = vmatpush1.msra.mxu0 0.0
        %4526 = vmatprep.subr.mxu0 0.0
        %4527 = vmatpush1.msra.mxu0 0.0
        %4528 = vmatprep.subr.mxu0 0.0
        %4529 = vmatpush1.msra.mxu0 0.0
        %4530 = vmatprep.subr.mxu0 0.0
        %4531 = vmatpush1.msra.mxu0 0.0
        %4532 = vmatprep.mubr.f32.mxu0 0.0
        %4533 = vmatmul.mubr.f32.gmra.mrb[0].mxu0 %v4466
        %v4534 = vpop.f32.mrb[0].mxu0
        %v4535 = vadd.f32 %v4390, %v4534
        %v4536 = vpop.f32.mrb[0].mxu0
        %4537 = vdwg.mxu0
        %v4538 = vmul.f32 %v4462, 0.5
        %v4539 = vmul.f32 %v4535, 0.5
        %v4540 = vmul.f32 %v4462, 0.044715
        %v4541 = vmul.f32 %v4535, 0.044715
        %v4542 = vmul.f32 %v4540, %v4462
        %v4543 = vmul.f32 %v4541, %v4535
        %v4544 = vmul.f32 %v4542, %v4462
        %v4545 = vmul.f32 %v4543, %v4535
        %v4546 = vadd.f32 %v4462, %v4544
        %v4547 = vadd.f32 %v4535, %v4545
        %v4548 = vmul.f32 %v4546, 0.7978846
        %v4549 = vmul.f32 %v4547, 0.7978846
        %v4550 = vtanh.pop %v4548
        %v4551 = vtanh.pop %v4549
        %v4552 = vadd.f32 %v4550, 1.0
        %v4553 = vadd.f32 %v4551, 1.0
        %v4554 = vmul.f32 %v4538, %v4552
        %v4555 = vmul.f32 %v4539, %v4553
        %v4556 = vld [vmem:[%s642] sm:$0xff]
        %v4557 = vld [vmem:[%s642 + $0x8] sm:$0xff]
        %v4558 = vld [vmem:[%s642 + $0x10] sm:$0xff]
        %v4559 = vld [vmem:[%s642 + $0x18] sm:$0xff]
        %v4560 = vld [vmem:[%s642 + $0x20] sm:$0xff]
        %v4561 = vld [vmem:[%s642 + $0x28] sm:$0xff]
        %v4562 = vld [vmem:[%s642 + $0x30] sm:$0xff]
        %v4563 = vld [vmem:[%s642 + $0x38] sm:$0xff]
        %v4564 = vld [vmem:[%s645] sm:$0x1]
        %v4566 = vlaneseq
        %v4567 = vshrl.u32 %v4566, 7
        %v4568 = vsub.s32 0, %v4567
        %v4569 = vrot.slane %v4564, %v4568
        %vm4571 = vcmask 523264
        %v4573 = vsel %vm4571, %v4554, 0
        %4575 = vmatprep.subr.mxu0 0.0
        %4576 = vmatpush1.msra.mxu0 %v4556
        %4577 = vmatprep.subr.mxu0 0.0
        %4578 = vmatpush1.msra.mxu0 %v4557
        %4579 = vmatprep.subr.mxu0 0.0
        %4580 = vmatpush1.msra.mxu0 %v4558
        %4581 = vmatprep.subr.mxu0 0.0
        %4582 = vmatpush1.msra.mxu0 %v4559
        %4583 = vmatprep.subr.mxu0 0.0
        %4584 = vmatpush1.msra.mxu0 %v4560
        %4585 = vmatprep.subr.mxu0 0.0
        %4586 = vmatpush1.msra.mxu0 %v4561
        %4587 = vmatprep.subr.mxu0 0.0
        %4588 = vmatpush1.msra.mxu0 %v4562
        %4589 = vmatprep.subr.mxu0 0.0
        %4590 = vmatpush1.msra.mxu0 %v4563
        %4591 = vmatprep.subr.mxu0 0.0
        %4592 = vmatpush1.msra.mxu0 0.0
        %4593 = vmatprep.subr.mxu0 0.0
        %4594 = vmatpush1.msra.mxu0 0.0
        %4595 = vmatprep.subr.mxu0 0.0
        %4596 = vmatpush1.msra.mxu0 0.0
        %4597 = vmatprep.subr.mxu0 0.0
        %4598 = vmatpush1.msra.mxu0 0.0
        %4599 = vmatprep.subr.mxu0 0.0
        %4600 = vmatpush1.msra.mxu0 0.0
        %4601 = vmatprep.subr.mxu0 0.0
        %4602 = vmatpush1.msra.mxu0 0.0
        %4603 = vmatprep.subr.mxu0 0.0
        %4604 = vmatpush1.msra.mxu0 0.0
        %4605 = vmatprep.subr.mxu0 0.0
        %4606 = vmatpush1.msra.mxu0 0.0
        %4607 = vmatprep.subr.mxu0 0.0
        %4608 = vmatpush1.msra.mxu0 0.0
        %4609 = vmatprep.subr.mxu0 0.0
        %4610 = vmatpush1.msra.mxu0 0.0
        %4611 = vmatprep.subr.mxu0 0.0
        %4612 = vmatpush1.msra.mxu0 0.0
        %4613 = vmatprep.subr.mxu0 0.0
        %4614 = vmatpush1.msra.mxu0 0.0
        %4615 = vmatprep.subr.mxu0 0.0
        %4616 = vmatpush1.msra.mxu0 0.0
        %4617 = vmatprep.subr.mxu0 0.0
        %4618 = vmatpush1.msra.mxu0 0.0
        %4619 = vmatprep.subr.mxu0 0.0
        %4620 = vmatpush1.msra.mxu0 0.0
        %4621 = vmatprep.subr.mxu0 0.0
        %4622 = vmatpush1.msra.mxu0 0.0
        %4623 = vmatprep.subr.mxu0 0.0
        %4624 = vmatpush1.msra.mxu0 0.0
        %4625 = vmatprep.subr.mxu0 0.0
        %4626 = vmatpush1.msra.mxu0 0.0
        %4627 = vmatprep.subr.mxu0 0.0
        %4628 = vmatpush1.msra.mxu0 0.0
        %4629 = vmatprep.subr.mxu0 0.0
        %4630 = vmatpush1.msra.mxu0 0.0
        %4631 = vmatprep.subr.mxu0 0.0
        %4632 = vmatpush1.msra.mxu0 0.0
        %4633 = vmatprep.subr.mxu0 0.0
        %4634 = vmatpush1.msra.mxu0 0.0
        %4635 = vmatprep.subr.mxu0 0.0
        %4636 = vmatpush1.msra.mxu0 0.0
        %4637 = vmatprep.subr.mxu0 0.0
        %4638 = vmatpush1.msra.mxu0 0.0
        %4639 = vmatprep.mubr.f32.mxu0 0.0
        %4640 = vmatmul.mubr.f32.gmra.mrb[0].mxu0 %v4573
        %v4641 = vpop.f32.mrb[0].mxu0
        %v4642 = vadd.f32 %v4569, %v4641
        %v4643 = vpop.f32.mrb[0].mxu0
        %4644 = vdwg.mxu0
        %v4646 = vsel %vm4571, %v4555, 0
        %4648 = vmatprep.subr.mxu0 0.0
        %4649 = vmatpush1.msra.mxu0 %v4556
        %4650 = vmatprep.subr.mxu0 0.0
        %4651 = vmatpush1.msra.mxu0 %v4557
        %4652 = vmatprep.subr.mxu0 0.0
        %4653 = vmatpush1.msra.mxu0 %v4558
        %4654 = vmatprep.subr.mxu0 0.0
        %4655 = vmatpush1.msra.mxu0 %v4559
        %4656 = vmatprep.subr.mxu0 0.0
        %4657 = vmatpush1.msra.mxu0 %v4560
        %4658 = vmatprep.subr.mxu0 0.0
        %4659 = vmatpush1.msra.mxu0 %v4561
        %4660 = vmatprep.subr.mxu0 0.0
        %4661 = vmatpush1.msra.mxu0 %v4562
        %4662 = vmatprep.subr.mxu0 0.0
        %4663 = vmatpush1.msra.mxu0 %v4563
        %4664 = vmatprep.subr.mxu0 0.0
        %4665 = vmatpush1.msra.mxu0 0.0
        %4666 = vmatprep.subr.mxu0 0.0
        %4667 = vmatpush1.msra.mxu0 0.0
        %4668 = vmatprep.subr.mxu0 0.0
        %4669 = vmatpush1.msra.mxu0 0.0
        %4670 = vmatprep.subr.mxu0 0.0
        %4671 = vmatpush1.msra.mxu0 0.0
        %4672 = vmatprep.subr.mxu0 0.0
        %4673 = vmatpush1.msra.mxu0 0.0
        %4674 = vmatprep.subr.mxu0 0.0
        %4675 = vmatpush1.msra.mxu0 0.0
        %4676 = vmatprep.subr.mxu0 0.0
        %4677 = vmatpush1.msra.mxu0 0.0
        %4678 = vmatprep.subr.mxu0 0.0
        %4679 = vmatpush1.msra.mxu0 0.0
        %4680 = vmatprep.subr.mxu0 0.0
        %4681 = vmatpush1.msra.mxu0 0.0
        %4682 = vmatprep.subr.mxu0 0.0
        %4683 = vmatpush1.msra.mxu0 0.0
        %4684 = vmatprep.subr.mxu0 0.0
        %4685 = vmatpush1.msra.mxu0 0.0
        %4686 = vmatprep.subr.mxu0 0.0
        %4687 = vmatpush1.msra.mxu0 0.0
        %4688 = vmatprep.subr.mxu0 0.0
        %4689 = vmatpush1.msra.mxu0 0.0
        %4690 = vmatprep.subr.mxu0 0.0
        %4691 = vmatpush1.msra.mxu0 0.0
        %4692 = vmatprep.subr.mxu0 0.0
        %4693 = vmatpush1.msra.mxu0 0.0
        %4694 = vmatprep.subr.mxu0 0.0
        %4695 = vmatpush1.msra.mxu0 0.0
        %4696 = vmatprep.subr.mxu0 0.0
        %4697 = vmatpush1.msra.mxu0 0.0
        %4698 = vmatprep.subr.mxu0 0.0
        %4699 = vmatpush1.msra.mxu0 0.0
        %4700 = vmatprep.subr.mxu0 0.0
        %4701 = vmatpush1.msra.mxu0 0.0
        %4702 = vmatprep.subr.mxu0 0.0
        %4703 = vmatpush1.msra.mxu0 0.0
        %4704 = vmatprep.subr.mxu0 0.0
        %4705 = vmatpush1.msra.mxu0 0.0
        %4706 = vmatprep.subr.mxu0 0.0
        %4707 = vmatpush1.msra.mxu0 0.0
        %4708 = vmatprep.subr.mxu0 0.0
        %4709 = vmatpush1.msra.mxu0 0.0
        %4710 = vmatprep.subr.mxu0 0.0
        %4711 = vmatpush1.msra.mxu0 0.0
        %4712 = vmatprep.mubr.f32.mxu0 0.0
        %4713 = vmatmul.mubr.f32.gmra.mrb[0].mxu0 %v4646
        %v4714 = vpop.f32.mrb[0].mxu0
        %v4715 = vadd.f32 %v4569, %v4714
        %v4716 = vpop.f32.mrb[0].mxu0
        %4717 = vdwg.mxu0
        %v4718 = vadd.f32 %v4335, %v4642
        %v4719 = vadd.f32 %v4336, %v4715
        %4720 = vst.msk [vmem:[#allocation2] sm:$0xff] %vm665, %v4718
        %4721 = vst.msk [vmem:[#allocation2 + $0x8] sm:$0xff] %vm665, %v4719
        %4722 = vst.msk [vmem:[#allocation3] sm:$0xff] %vm665, %v4718
        %4723 = vst.msk [vmem:[#allocation3 + $0x8] sm:$0xff] %vm665, %v4719
        // Predicated region
        $region81: #{tpu_custom_call.1} parent=75 // pred_check
          %p4724 = pneg %p398
        $region82: #{tpu_custom_call.1} parent=75 // pred_check_branch
          %4726 = sbr.rel (%p4724) target = $region84
        $region83: #{tpu_custom_call.1} parent=75 // pred_region
          %s4728 = ssub.s32 256, 256
          %4729 = vsyncadd [#allocation4], %s4728
          %s4730 = sshll.u32 [#allocation3], 4
          %s4731 = int_to_ptr.vmem [resolvable:$true] %s4730
          %4736 = dma.vmem_to_hbm [thread:$0]  %s4731, 256, %s14, [#allocation4], 128, 128, 8
        $region84: #{tpu_custom_call.1} parent=75 // pred_fallthru
          _
        // Predicated region
        $region85: #{tpu_custom_call.1} parent=75 // pred_check
          %p4737 = pneg %p398
        $region86: #{tpu_custom_call.1} parent=75 // pred_check_branch
          %4739 = sbr.rel (%p4737) target = $region88
        $region87: #{tpu_custom_call.1} parent=75 // pred_region
          %4740 = dma.done [#allocation4], 256
        $region88: #{tpu_custom_call.1} parent=75 // pred_fallthru
          _
      $region76: #{tpu_custom_call.1} parent=5 // pred_fallthru
        _
      %p4741 = scmp.le.s32.totalorder 2, %s21
      // Predicated region
      $region89: #{tpu_custom_call.1} parent=5 // pred_check
        %p4742 = pneg %p4741
      $region90: #{tpu_custom_call.1} parent=5 // pred_check_branch
        %4744 = sbr.rel (%p4742) target = $region92
      $region91: #{tpu_custom_call.1} parent=5 // pred_region
        %s4745 = ssub.s32 %s21, 2
      $region92: #{tpu_custom_call.1} parent=5 // pred_fallthru
        _
    $region6: #{tpu_custom_call.1} parent=1 // loop_footer
      %s25 = sadd.s32 1, %s21
    $region7: #{tpu_custom_call.1} parent=1 // loop_footer_branch
      %20 = sbr.rel target = $region3
    $region8: #{tpu_custom_call.1} parent=1 // loop_exit
      _
    %4746 = vsyncpa [#allocation4], 1
    %s4747 = scalar_lea.sflag [#allocation4], 1
    %4748 = vsyncpa %s4747, 1

</llo_original>
